<compile_context>
chip_gen: v6e
topology: v6e:2x2x1
jax: 0.10.0
libtpu: 0.0.40
codegen_flags: <defaults>
</compile_context>

<pallas_src>
import functools

import jax
import jax.numpy as jnp
from jax import lax
from jax.experimental import pallas as pl
from jax.experimental.pallas import tpu as pltpu


# ----------------------------- small helpers -----------------------------

def _hardswish(x):
    return x * jnp.clip(x + 3.0, 0.0, 6.0) * (1.0 / 6.0)


def _hsigmoid(x):
    return jnp.clip(x + 3.0, 0.0, 6.0) * (1.0 / 6.0)


def _fold_bn(gamma, beta, mean, var, eps=1e-5):
    scale = gamma / jnp.sqrt(var + eps)
    bias = beta - mean * scale
    return (scale.reshape(1, -1).astype(jnp.float32),
            bias.reshape(1, -1).astype(jnp.float32))


def _fold_weights(params):
    """Fold BN scales into conv weights (shared by kernel wrapper and reference)."""
    s1, b1 = _fold_bn(params["bn1_gamma"], params["bn1_beta"],
                      params["bn1_mean"], params["bn1_var"])
    s2, b2 = _fold_bn(params["bn2_gamma"], params["bn2_beta"],
                      params["bn2_mean"], params["bn2_var"])
    s3, b3 = _fold_bn(params["bn3_gamma"], params["bn3_beta"],
                      params["bn3_mean"], params["bn3_var"])
    w_exp = (params["w_exp"] * s1).astype(jnp.bfloat16)          # (Cin, C)
    w_dw = (params["w_dw"] * s2.reshape(1, 1, -1)).astype(jnp.float32)  # (K, K, C)
    w_prj = (params["w_proj"] * s3).astype(jnp.bfloat16)         # (C, Cout)
    return w_exp, b1, w_dw, b2, w_prj, b3


def _se_gate(pooled, params):
    """Tiny SE MLP, shared by wrapper and reference (plain JAX, f32)."""
    h = jnp.maximum(
        jnp.dot(pooled, params["w_se1"], precision=lax.Precision.HIGHEST)
        + params["b_se1"], 0.0)
    s = jnp.dot(h, params["w_se2"], precision=lax.Precision.HIGHEST) + params["b_se2"]
    return _hsigmoid(s)                                          # (N, C)


# --------------------------- Pallas kernel bodies ---------------------------

def _expand_dw_kernel(x_ref, wexp_ref, b1_ref, wdw_ref, b2_ref,
                      y_ref, pooled_ref, epad_ref, *, H, W, K):
    """Fused: 1x1 expansion (+BN+h-swish) -> depthwise KxK (+BN+h-swish) -> SE pool.

    Works on one batch element in a flattened (pixels=H*W, channels) layout.
    """
    p = K // 2
    S = H * W
    top = (epad_ref.shape[0] - S) // 2          # zero-padding rows above/below

    # (1) expansion 1x1 conv (BN scale already folded into weights), bf16 MXU.
    xa = x_ref[0].astype(jnp.bfloat16)                         # (S, Cin)
    e = jnp.dot(xa, wexp_ref[...], preferred_element_type=jnp.float32)
    e = _hardswish(e + b1_ref[...])                            # (S, C) f32

    # (2) stage into a zero-padded VMEM scratch (padding only along flattened
    #     rows; the left/right column wrap is handled with a per-pixel mask).
    epad_ref[...] = jnp.zeros_like(epad_ref)
    epad_ref[top:top + S, :] = e                               # aligned interior write

    # (3) depthwise KxK, stride 1 — f32 VPU multiply-accumulate on shifted slices.
    wd = wdw_ref[...]                                          # (K, K, C), BN folded
    w_idx = lax.broadcasted_iota(jnp.int32, (S, 1), 0) % W     # column index per pixel
    acc = jnp.zeros_like(e)
    for dy in range(K):
        for dx in range(K):
            off = top + (dy - p) * W + (dx - p)                # static offset
            tap = epad_ref[off:off + S, :]                     # (S, C)
            ox = dx - p
            if ox == 0:
                acc = acc + tap * wd[dy, dx]
            else:
                valid = ((w_idx + ox >= 0) & (w_idx + ox < W)).astype(jnp.float32)
                acc = acc + tap * (wd[dy, dx] * valid)
    d = _hardswish(acc + b2_ref[...])                          # (S, C) f32

    # (4) outputs: bf16 activation for the projection pass + SE global avg pool.
    y_ref[0] = d.astype(jnp.bfloat16)
    pooled_ref[0] = jnp.sum(d, axis=0, keepdims=True) * (1.0 / S)


def _proj_res_kernel(y_ref, g_ref, w_ref, b_ref, r_ref, o_ref):
    """SE gate * activation -> 1x1 projection (+BN bias) -> +residual."""
    z = (y_ref[0].astype(jnp.float32) * g_ref[0]).astype(jnp.bfloat16)   # (ts, C)
    out = jnp.dot(z, w_ref[...], preferred_element_type=jnp.float32)
    o_ref[0] = out + b_ref[...] + r_ref[0]


def _proj_kernel(y_ref, g_ref, w_ref, b_ref, o_ref):
    z = (y_ref[0].astype(jnp.float32) * g_ref[0]).astype(jnp.bfloat16)
    out = jnp.dot(z, w_ref[...], preferred_element_type=jnp.float32)
    o_ref[0] = out + b_ref[...]


# ------------------------------ pallas_call wrappers ------------------------------

def _pass1_call(x3, w_exp, b1, w_dw, b2, *, H, W, K):
    """x3: (N, S, Cin) f32 -> y: (N, S, C) bf16, pooled: (N, 1, C) f32."""
    N, S, Cin = x3.shape
    C = w_exp.shape[1]
    p = K // 2
    top = ((p * W + p + 7) // 8) * 8            # 8-aligned zero padding rows
    pad_rows = S + 2 * top

    kernel = functools.partial(_expand_dw_kernel, H=H, W=W, K=K)
    flops = int(N * (2 * S * Cin * C + 2 * S * K * K * C + 12 * S * C))
    bytes_accessed = int(N * S * Cin * 4 + N * S * C * 2 + N * C * 4
                         + Cin * C * 2 + K * K * C * 4 + 4 * C * 4)

    return pl.pallas_call(
        kernel,
        out_shape=(jax.ShapeDtypeStruct((N, S, C), jnp.bfloat16),
                   jax.ShapeDtypeStruct((N, 1, C), jnp.float32)),
        grid_spec=pltpu.PrefetchScalarGridSpec(
            num_scalar_prefetch=0,
            grid=(N,),
            in_specs=[
                pl.BlockSpec((1, S, Cin), lambda n: (n, 0, 0)),
                pl.BlockSpec((Cin, C), lambda n: (0, 0)),
                pl.BlockSpec((1, C), lambda n: (0, 0)),
                pl.BlockSpec((K, K, C), lambda n: (0, 0, 0)),
                pl.BlockSpec((1, C), lambda n: (0, 0)),
            ],
            out_specs=[
                pl.BlockSpec((1, S, C), lambda n: (n, 0, 0)),
                pl.BlockSpec((1, 1, C), lambda n: (n, 0, 0)),
            ],
            scratch_shapes=[pltpu.VMEM((pad_rows, C), jnp.float32)],
        ),
        compiler_params=pltpu.CompilerParams(dimension_semantics=("parallel",)),
        cost_estimate=pl.CostEstimate(flops=flops, transcendentals=0,
                                      bytes_accessed=bytes_accessed),
    )(x3, w_exp, b1, w_dw, b2)


def _pass2_call(y2, gate3, w_proj, b3, res=None):
    """y2: (N, S, C) bf16, gate3: (N, 1, C) f32 -> out: (N, S, Cout) f32."""
    N, S, C = y2.shape
    Cout = w_proj.shape[1]
    if S >= 8:
        ts = (min(S, 1024) // 8) * 8
    else:
        ts = S
    grid = (N, pl.cdiv(S, ts))

    in_specs = [
        pl.BlockSpec((1, ts, C), lambda n, s: (n, s, 0)),
        pl.BlockSpec((1, 1, C), lambda n, s: (n, 0, 0)),
        pl.BlockSpec((C, Cout), lambda n, s: (0, 0)),
        pl.BlockSpec((1, Cout), lambda n, s: (0, 0)),
    ]
    args = [y2, gate3, w_proj, b3]
    kernel = _proj_kernel
    res_bytes = 0
    if res is not None:
        in_specs.append(pl.BlockSpec((1, ts, Cout), lambda n, s: (n, s, 0)))
        args.append(res)
        kernel = _proj_res_kernel
        res_bytes = res.size * 4

    flops = int(N * (2 * S * C * Cout + 4 * S * C))
    bytes_accessed = int(N * S * C * 2 + N * S * Cout * 4 + res_bytes
                         + C * Cout * 2 + N * C * 4 + Cout * 4)

    return pl.pallas_call(
        kernel,
        out_shape=jax.ShapeDtypeStruct((N, S, Cout), jnp.float32),
        grid_spec=pltpu.PrefetchScalarGridSpec(
            num_scalar_prefetch=0,
            grid=grid,
            in_specs=in_specs,
            out_specs=pl.BlockSpec((1, ts, Cout), lambda n, s: (n, s, 0)),
        ),
        compiler_params=pltpu.CompilerParams(
            dimension_semantics=("parallel", "parallel")),
        cost_estimate=pl.CostEstimate(flops=flops, transcendentals=0,
                                      bytes_accessed=bytes_accessed),
    )(*args)


# ------------------------------ module forward ------------------------------

def init_params(key, in_c, inner_c, out_c, kernel_size=3, reduction=4):
    ks = jax.random.split(key, 20)
    red_c = inner_c // reduction
    p = {
        # expansion 1x1 conv: PyTorch (inner, in, 1, 1) -> matmul (in, inner)
        "w_exp": 0.1 * jax.random.normal(ks[0], (in_c, inner_c), jnp.float32),
        "bn1_gamma": 1.0 + 0.1 * jax.random.normal(ks[1], (inner_c,), jnp.float32),
        "bn1_beta": 0.05 * jax.random.normal(ks[2], (inner_c,), jnp.float32),
        "bn1_mean": 0.01 * jax.random.normal(ks[3], (inner_c,), jnp.float32),
        "bn1_var": 1.0 + 0.1 * jax.random.uniform(ks[4], (inner_c,), jnp.float32),
        # depthwise conv: PyTorch (inner, 1, k, k) -> (k, k, inner)
        "w_dw": 0.1 * jax.random.normal(ks[5], (kernel_size, kernel_size, inner_c),
                                        jnp.float32),
        "bn2_gamma": 1.0 + 0.1 * jax.random.normal(ks[6], (inner_c,), jnp.float32),
        "bn2_beta": 0.05 * jax.random.normal(ks[7], (inner_c,), jnp.float32),
        "bn2_mean": 0.01 * jax.random.normal(ks[8], (inner_c,), jnp.float32),
        "bn2_var": 1.0 + 0.1 * jax.random.uniform(ks[9], (inner_c,), jnp.float32),
        # SE block 1x1 convs (with bias)
        "w_se1": 0.1 * jax.random.normal(ks[10], (inner_c, red_c), jnp.float32),
        "b_se1": 0.05 * jax.random.normal(ks[11], (1, red_c), jnp.float32),
        "w_se2": 0.1 * jax.random.normal(ks[12], (red_c, inner_c), jnp.float32),
        "b_se2": 0.05 * jax.random.normal(ks[13], (1, inner_c), jnp.float32),
        # projection 1x1 conv: PyTorch (out, inner, 1, 1) -> (inner, out)
        "w_proj": 0.1 * jax.random.normal(ks[14], (inner_c, out_c), jnp.float32),
        "bn3_gamma": 1.0 + 0.1 * jax.random.normal(ks[15], (out_c,), jnp.float32),
        "bn3_beta": 0.05 * jax.random.normal(ks[16], (out_c,), jnp.float32),
        "bn3_mean": 0.01 * jax.random.normal(ks[17], (out_c,), jnp.float32),
        "bn3_var": 1.0 + 0.1 * jax.random.uniform(ks[18], (out_c,), jnp.float32),
    }
    return p


def mobilenetv3_unit_forward(x_nchw, params, *, kernel_size=3, stride=1,
                             with_attention=True):
    # TODO(synk): stride > 1 not implemented (module default / test uses stride=1).
    assert stride == 1, "only stride=1 supported in this kernel"
    N, Cin, H, W = x_nchw.shape
    S = H * W
    inner_c = params["w_exp"].shape[1]
    out_c = params["w_proj"].shape[1]
    apply_residual = (Cin == out_c) and (stride == 1)

    x_nhwc = jnp.transpose(x_nchw, (0, 2, 3, 1)).astype(jnp.float32)   # NHWC
    x3 = x_nhwc.reshape(N, S, Cin)                                     # free bitcast

    w_exp, b1, w_dw, b2, w_prj, b3 = _fold_weights(params)

    # Pass 1: expansion + depthwise + SE pool (single fused kernel over N).
    y2, pooled3 = _pass1_call(x3, w_exp, b1, w_dw, b2, H=H, W=W, K=kernel_size)

    # Tiny SE MLP in plain JAX (KB-sized; not worth per-image MXU passes).
    if with_attention:
        gate = _se_gate(pooled3.reshape(N, inner_c), params)           # (N, C) f32
    else:
        gate = jnp.ones((N, inner_c), jnp.float32)

    # Pass 2: SE gate * activation -> projection (+BN bias) -> +residual.
    out2 = _pass2_call(y2, gate.reshape(N, 1, inner_c), w_prj, b3,
                       res=x3 if apply_residual else None)             # (N, S, Cout)

    out = out2.reshape(N, H, W, out_c)
    return jnp.transpose(out, (0, 3, 1, 2))                            # back to NCHW


# ------------------------------ pure-JAX reference ------------------------------
# Mirrors the kernel's precision policy (bf16 MXU inputs / inter-stage
# activation, f32 accumulation and VPU epilogues) so the comparison isolates
# kernel-structure correctness.

def _reference_forward(x_nchw, p, *, kernel_size=3, with_attention=True):
    K = kernel_size
    x = jnp.transpose(x_nchw, (0, 2, 3, 1)).astype(jnp.float32)        # NHWC
    N, H, W, Cin = x.shape
    C = p["w_exp"].shape[1]
    Cout = p["w_proj"].shape[1]
    w_exp, b1, w_dw, b2, w_prj, b3 = _fold_weights(p)

    e = jnp.dot(x.reshape(-1, Cin).astype(jnp.bfloat16), w_exp,
                preferred_element_type=jnp.float32)
    e = _hardswish(e + b1).reshape(N, H, W, C)

    dn = ("NHWC", "HWIO", "NHWC")
    d = lax.conv_general_dilated(e, w_dw.reshape(K, K, 1, C), (1, 1), "SAME",
                                 dimension_numbers=dn, feature_group_count=C,
                                 precision=lax.Precision.HIGHEST)
    d = _hardswish(d + b2.reshape(1, 1, 1, -1))

    if with_attention:
        pooled = jnp.mean(d, axis=(1, 2))                              # (N, C)
        gate = _se_gate(pooled, p)
    else:
        gate = jnp.ones((N, C), jnp.float32)

    y = d.astype(jnp.bfloat16)                                         # inter-stage bf16
    z = (y.astype(jnp.float32) * gate[:, None, None, :]).astype(jnp.bfloat16)
    out = jnp.dot(z.reshape(-1, C), w_prj, preferred_element_type=jnp.float32) + b3
    out = out.reshape(N, H, W, Cout)
    if Cin == Cout:
        out = out + x
    return jnp.transpose(out, (0, 3, 1, 2))


# ------------------------------ main ------------------------------

if __name__ == "__main__":
    N, Cin, H, W = 2, 8, 16, 16
    inner_c, out_c = 16, 8            # Cin == Cout and stride 1 -> residual applies
    kernel_size, reduction = 3, 4

    key = jax.random.PRNGKey(0)
    kx, kp = jax.random.split(key)
    x = jax.random.normal(kx, (N, Cin, H, W), dtype=jnp.float32)
    params = init_params(kp, Cin, inner_c, out_c, kernel_size, reduction)

    fwd = jax.jit(functools.partial(mobilenetv3_unit_forward,
                                    kernel_size=kernel_size, stride=1,
                                    with_attention=True))
    out = fwd(x, params)
    out = jax.block_until_ready(out)

    ref = _reference_forward(x, params, kernel_size=kernel_size,
                             with_attention=True)
    ref = jax.block_until_ready(ref)

    assert out.shape == (N, out_c, H, W)
    max_diff = jnp.max(jnp.abs(out - ref))
    assert jnp.allclose(out, ref, atol=5e-3, rtol=5e-3), \
        f"max abs diff {max_diff}"

    print("KERNEL_OK")
</pallas_src>

<mosaic_0001>
module attributes {stable_mosaic.version = 11 : i64} {
  func.func @_proj_res_kernel(%arg0: i32, %arg1: i32, %arg2: memref<1x256x16xbf16, #tpu.memory_space<vmem>>, %arg3: memref<1x1x16xf32, #tpu.memory_space<vmem>>, %arg4: memref<16x8xbf16, #tpu.memory_space<vmem>>, %arg5: memref<1x8xf32, #tpu.memory_space<vmem>>, %arg6: memref<1x256x8xf32, #tpu.memory_space<vmem>>, %arg7: memref<1x256x8xf32, #tpu.memory_space<vmem>>) attributes {dimension_semantics = [#tpu.dimension_semantics<parallel>, #tpu.dimension_semantics<parallel>], iteration_bounds = array<i64: 2, 1>, scalar_prefetch = 0 : i64, scratch_operands = 0 : i64, tpu.core_type = #tpu.core_type<tc>, window_params = [{transform_indices = @transform_0, window_bounds = array<i64: 1, 256, 16>}, {transform_indices = @transform_1, window_bounds = array<i64: 1, 1, 16>}, {pipeline_mode = #tpu.pipeline_mode<synchronous>, transform_indices = @transform_2, window_bounds = array<i64: 16, 8>}, {pipeline_mode = #tpu.pipeline_mode<synchronous>, transform_indices = @transform_3, window_bounds = array<i64: 1, 8>}, {transform_indices = @transform_4, window_bounds = array<i64: 1, 256, 8>}, {transform_indices = @transform_5, window_bounds = array<i64: 1, 256, 8>}]} {
    %c0 = arith.constant 0 : index
    %c0_0 = arith.constant 0 : index
    %c0_1 = arith.constant 0 : index
    %0 = vector.load %arg2[%c0, %c0_0, %c0_1] : memref<1x256x16xbf16, #tpu.memory_space<vmem>>, vector<1x256x16xbf16>
    %1 = vector.shape_cast %0 : vector<1x256x16xbf16> to vector<256x16xbf16>
    %2 = arith.extf %1 : vector<256x16xbf16> to vector<256x16xf32>
    %c0_2 = arith.constant 0 : index
    %c0_3 = arith.constant 0 : index
    %c0_4 = arith.constant 0 : index
    %3 = vector.load %arg3[%c0_2, %c0_3, %c0_4] : memref<1x1x16xf32, #tpu.memory_space<vmem>>, vector<1x1x16xf32>
    %4 = vector.shape_cast %3 : vector<1x1x16xf32> to vector<1x16xf32>
    %5 = vector.broadcast %4 : vector<1x16xf32> to vector<256x16xf32>
    %6 = arith.mulf %2, %5 : vector<256x16xf32>
    %7 = arith.truncf %6 : vector<256x16xf32> to vector<256x16xbf16>
    %c0_5 = arith.constant 0 : index
    %c0_6 = arith.constant 0 : index
    %8 = vector.load %arg4[%c0_5, %c0_6] : memref<16x8xbf16, #tpu.memory_space<vmem>>, vector<16x8xbf16>
    %cst = arith.constant dense<0.000000e+00> : vector<256x8xf32>
    %9 = tpu.matmul %7, %8, %cst {dimension_numbers = #tpu.dot_dimension_numbers<[1], [0], [0], [1], [0, 0, 1, 1], [], []>} : vector<256x16xbf16>, vector<16x8xbf16>, vector<256x8xf32> -> vector<256x8xf32>
    %c0_7 = arith.constant 0 : index
    %c0_8 = arith.constant 0 : index
    %10 = vector.load %arg5[%c0_7, %c0_8] : memref<1x8xf32, #tpu.memory_space<vmem>>, vector<1x8xf32>
    %11 = vector.broadcast %10 : vector<1x8xf32> to vector<256x8xf32>
    %12 = arith.addf %9, %11 : vector<256x8xf32>
    %c0_9 = arith.constant 0 : index
    %c0_10 = arith.constant 0 : index
    %c0_11 = arith.constant 0 : index
    %13 = vector.load %arg6[%c0_9, %c0_10, %c0_11] : memref<1x256x8xf32, #tpu.memory_space<vmem>>, vector<1x256x8xf32>
    %14 = vector.shape_cast %13 : vector<1x256x8xf32> to vector<256x8xf32>
    %15 = arith.addf %12, %14 : vector<256x8xf32>
    %c0_12 = arith.constant 0 : index
    %c0_13 = arith.constant 0 : index
    %c0_14 = arith.constant 0 : index
    %16 = vector.load %arg7[%c0_12, %c0_13, %c0_14] : memref<1x256x8xf32, #tpu.memory_space<vmem>>, vector<1x256x8xf32>
    %17 = vector.shape_cast %16 : vector<1x256x8xf32> to vector<256x8xf32>
    %18 = vector.shape_cast %15 : vector<256x8xf32> to vector<1x256x8xf32>
    tpu.vector_store %arg7[%c0_12, %c0_13, %c0_14], %18 {strides = array<i32>} : memref<1x256x8xf32, #tpu.memory_space<vmem>>, vector<1x256x8xf32>,
    return
  }
  func.func @transform_0(%arg0: i32, %arg1: i32) -> (i32, i32, i32) {
    %c0_i32 = arith.constant 0 : i32
    %c0_i32_0 = arith.constant 0 : i32
    return %arg0, %arg1, %c0_i32 : i32, i32, i32
  }
  func.func @transform_1(%arg0: i32, %arg1: i32) -> (i32, i32, i32) {
    %c0_i32 = arith.constant 0 : i32
    %c0_i32_0 = arith.constant 0 : i32
    %c0_i32_1 = arith.constant 0 : i32
    return %arg0, %c0_i32, %c0_i32_0 : i32, i32, i32
  }
  func.func @transform_2(%arg0: i32, %arg1: i32) -> (i32, i32) {
    %c0_i32 = arith.constant 0 : i32
    %c0_i32_0 = arith.constant 0 : i32
    %c0_i32_1 = arith.constant 0 : i32
    return %c0_i32, %c0_i32_0 : i32, i32
  }
  func.func @transform_3(%arg0: i32, %arg1: i32) -> (i32, i32) {
    %c0_i32 = arith.constant 0 : i32
    %c0_i32_0 = arith.constant 0 : i32
    %c0_i32_1 = arith.constant 0 : i32
    return %c0_i32, %c0_i32_0 : i32, i32
  }
  func.func @transform_4(%arg0: i32, %arg1: i32) -> (i32, i32, i32) {
    %c0_i32 = arith.constant 0 : i32
    %c0_i32_0 = arith.constant 0 : i32
    return %arg0, %arg1, %c0_i32 : i32, i32, i32
  }
  func.func @transform_5(%arg0: i32, %arg1: i32) -> (i32, i32, i32) {
    %c0_i32 = arith.constant 0 : i32
    %c0_i32_0 = arith.constant 0 : i32
    return %arg0, %arg1, %c0_i32 : i32, i32, i32
  }
}

module attributes {stable_mosaic.version = 11 : i64} {
  func.func @_expand_dw_kernel(%arg0: i32, %arg1: memref<1x256x8xf32, #tpu.memory_space<vmem>>, %arg2: memref<8x16xbf16, #tpu.memory_space<vmem>>, %arg3: memref<1x16xf32, #tpu.memory_space<vmem>>, %arg4: memref<3x3x16xf32, #tpu.memory_space<vmem>>, %arg5: memref<1x16xf32, #tpu.memory_space<vmem>>, %arg6: memref<1x256x16xbf16, #tpu.memory_space<vmem>>, %arg7: memref<1x1x16xf32, #tpu.memory_space<vmem>>, %arg8: memref<304x16xf32, #tpu.memory_space<vmem>>) attributes {dimension_semantics = [#tpu.dimension_semantics<parallel>], iteration_bounds = array<i64: 2>, scalar_prefetch = 0 : i64, scratch_operands = 1 : i64, tpu.core_type = #tpu.core_type<tc>, window_params = [{transform_indices = @transform_0, window_bounds = array<i64: 1, 256, 8>}, {pipeline_mode = #tpu.pipeline_mode<synchronous>, transform_indices = @transform_1, window_bounds = array<i64: 8, 16>}, {pipeline_mode = #tpu.pipeline_mode<synchronous>, transform_indices = @transform_2, window_bounds = array<i64: 1, 16>}, {pipeline_mode = #tpu.pipeline_mode<synchronous>, transform_indices = @transform_3, window_bounds = array<i64: 3, 3, 16>}, {pipeline_mode = #tpu.pipeline_mode<synchronous>, transform_indices = @transform_4, window_bounds = array<i64: 1, 16>}, {transform_indices = @transform_5, window_bounds = array<i64: 1, 256, 16>}, {transform_indices = @transform_6, window_bounds = array<i64: 1, 1, 16>}]} {
    %c0 = arith.constant 0 : index
    %c0_0 = arith.constant 0 : index
    %c0_1 = arith.constant 0 : index
    %0 = vector.load %arg1[%c0, %c0_0, %c0_1] : memref<1x256x8xf32, #tpu.memory_space<vmem>>, vector<1x256x8xf32>
    %1 = vector.shape_cast %0 : vector<1x256x8xf32> to vector<256x8xf32>
    %2 = arith.truncf %1 : vector<256x8xf32> to vector<256x8xbf16>
    %c0_2 = arith.constant 0 : index
    %c0_3 = arith.constant 0 : index
    %3 = vector.load %arg2[%c0_2, %c0_3] : memref<8x16xbf16, #tpu.memory_space<vmem>>, vector<8x16xbf16>
    %cst = arith.constant dense<0.000000e+00> : vector<256x16xf32>
    %4 = tpu.matmul %2, %3, %cst {dimension_numbers = #tpu.dot_dimension_numbers<[1], [0], [0], [1], [0, 0, 1, 1], [], []>} : vector<256x8xbf16>, vector<8x16xbf16>, vector<256x16xf32> -> vector<256x16xf32>
    %c0_4 = arith.constant 0 : index
    %c0_5 = arith.constant 0 : index
    %5 = vector.load %arg3[%c0_4, %c0_5] : memref<1x16xf32, #tpu.memory_space<vmem>>, vector<1x16xf32>
    %6 = vector.broadcast %5 : vector<1x16xf32> to vector<256x16xf32>
    %7 = arith.addf %4, %6 : vector<256x16xf32>
    %cst_6 = arith.constant 3.000000e+00 : f32
    %8 = vector.broadcast %cst_6 : f32 to vector<256x16xf32>
    %9 = arith.addf %7, %8 : vector<256x16xf32>
    %cst_7 = arith.constant 0.000000e+00 : f32
    %cst_8 = arith.constant 6.000000e+00 : f32
    %10 = vector.broadcast %cst_7 : f32 to vector<256x16xf32>
    %11 = arith.maximumf %10, %9 : vector<256x16xf32>
    %12 = vector.broadcast %cst_8 : f32 to vector<256x16xf32>
    %13 = arith.minimumf %12, %11 : vector<256x16xf32>
    %14 = arith.mulf %7, %13 : vector<256x16xf32>
    %cst_9 = arith.constant 0.166666672 : f32
    %15 = vector.broadcast %cst_9 : f32 to vector<256x16xf32>
    %16 = arith.mulf %14, %15 : vector<256x16xf32>
    %cst_10 = arith.constant 0.000000e+00 : f32
    %17 = vector.broadcast %cst_10 : f32 to vector<304x16xf32>
    %c0_11 = arith.constant 0 : index
    %c0_12 = arith.constant 0 : index
    %18 = vector.load %arg8[%c0_11, %c0_12] : memref<304x16xf32, #tpu.memory_space<vmem>>, vector<304x16xf32>
    tpu.vector_store %arg8[%c0_11, %c0_12], %17 {strides = array<i32>} : memref<304x16xf32, #tpu.memory_space<vmem>>, vector<304x16xf32>,
    %c24 = arith.constant 24 : index
    %c0_13 = arith.constant 0 : index
    %19 = vector.load %arg8[%c24, %c0_13] : memref<304x16xf32, #tpu.memory_space<vmem>>, vector<256x16xf32>
    tpu.vector_store %arg8[%c24, %c0_13], %16 {strides = array<i32>} : memref<304x16xf32, #tpu.memory_space<vmem>>, vector<256x16xf32>,
    %c0_14 = arith.constant 0 : index
    %c0_15 = arith.constant 0 : index
    %c0_16 = arith.constant 0 : index
    %20 = vector.load %arg4[%c0_14, %c0_15, %c0_16] : memref<3x3x16xf32, #tpu.memory_space<vmem>>, vector<3x3x16xf32>
    %21 = tpu.iota {dimensions = array<i32: 0>} : vector<256x1xi32>
    %c16_i32 = arith.constant 16 : i32
    %c0_i32 = arith.constant 0 : i32
    %22 = arith.cmpi eq, %c16_i32, %c0_i32 : i32
    %c1_i32 = arith.constant 1 : i32
    %23 = arith.select %22, %c1_i32, %c16_i32 : i32
    %24 = vector.broadcast %23 : i32 to vector<256x1xi32>
    %25 = arith.remsi %21, %24 : vector<256x1xi32>
    %c0_i32_17 = arith.constant 0 : i32
    %26 = vector.broadcast %c0_i32_17 : i32 to vector<256x1xi32>
    %27 = arith.cmpi ne, %25, %26 : vector<256x1xi32>
    %c0_i32_18 = arith.constant 0 : i32
    %28 = vector.broadcast %c0_i32_18 : i32 to vector<256x1xi32>
    %29 = arith.cmpi slt, %25, %28 : vector<256x1xi32>
    %c0_i32_19 = arith.constant 0 : i32
    %30 = arith.cmpi slt, %23, %c0_i32_19 : i32
    %31 = vector.broadcast %30 : i1 to vector<256x1xi1>
    %32 = vector.broadcast %31 : vector<256x1xi1> to vector<256x1xi1>
    %33 = arith.xori %29, %32 : vector<256x1xi1>
    %34 = arith.andi %33, %27 : vector<256x1xi1>
    %35 = vector.broadcast %23 : i32 to vector<256x1xi32>
    %36 = arith.addi %25, %35 : vector<256x1xi32>
    %37 = arith.select %34, %36, %25 : vector<256x1xi1>, vector<256x1xi32>
    %cst_20 = arith.constant 0.000000e+00 : f32
    %38 = vector.broadcast %cst_20 : f32 to vector<256x16xf32>
    %c7 = arith.constant 7 : index
    %c0_21 = arith.constant 0 : index
    %39 = vector.load %arg8[%c7, %c0_21] : memref<304x16xf32, #tpu.memory_space<vmem>>, vector<256x16xf32>
    %c-1_i32 = arith.constant -1 : i32
    %40 = vector.broadcast %c-1_i32 : i32 to vector<256x1xi32>
    %41 = arith.addi %37, %40 : vector<256x1xi32>
    %c0_i32_22 = arith.constant 0 : i32
    %42 = vector.broadcast %c0_i32_22 : i32 to vector<256x1xi32>
    %43 = arith.cmpi sge, %41, %42 : vector<256x1xi32>
    %c-1_i32_23 = arith.constant -1 : i32
    %44 = vector.broadcast %c-1_i32_23 : i32 to vector<256x1xi32>
    %45 = arith.addi %37, %44 : vector<256x1xi32>
    %c16_i32_24 = arith.constant 16 : i32
    %46 = vector.broadcast %c16_i32_24 : i32 to vector<256x1xi32>
    %47 = arith.cmpi slt, %45, %46 : vector<256x1xi32>
    %48 = arith.andi %43, %47 : vector<256x1xi1>
    %49 = arith.extui %48 : vector<256x1xi1> to vector<256x1xi32>
    %50 = arith.sitofp %49 : vector<256x1xi32> to vector<256x1xf32>
    %51 = vector.extract_strided_slice %20 {offsets = [0, 0, 0], sizes = [1, 1, 16], strides = [1, 1, 1]} : vector<3x3x16xf32> to vector<1x1x16xf32>
    %52 = vector.shape_cast %51 : vector<1x1x16xf32> to vector<16xf32>
    %53 = vector.shape_cast %52 : vector<16xf32> to vector<1x16xf32>
    %54 = vector.broadcast %53 : vector<1x16xf32> to vector<256x16xf32>
    %55 = vector.broadcast %50 : vector<256x1xf32> to vector<256x16xf32>
    %56 = arith.mulf %54, %55 : vector<256x16xf32>
    %57 = arith.mulf %39, %56 : vector<256x16xf32>
    %58 = arith.addf %38, %57 : vector<256x16xf32>
    %c8 = arith.constant 8 : index
    %c0_25 = arith.constant 0 : index
    %59 = vector.load %arg8[%c8, %c0_25] : memref<304x16xf32, #tpu.memory_space<vmem>>, vector<256x16xf32>
    %60 = vector.extract_strided_slice %20 {offsets = [0, 1, 0], sizes = [1, 1, 16], strides = [1, 1, 1]} : vector<3x3x16xf32> to vector<1x1x16xf32>
    %61 = vector.shape_cast %60 : vector<1x1x16xf32> to vector<16xf32>
    %62 = vector.shape_cast %61 : vector<16xf32> to vector<1x16xf32>
    %63 = vector.broadcast %62 : vector<1x16xf32> to vector<256x16xf32>
    %64 = arith.mulf %59, %63 : vector<256x16xf32>
    %65 = arith.addf %58, %64 : vector<256x16xf32>
    %c9 = arith.constant 9 : index
    %c0_26 = arith.constant 0 : index
    %66 = vector.load %arg8[%c9, %c0_26] : memref<304x16xf32, #tpu.memory_space<vmem>>, vector<256x16xf32>
    %c1_i32_27 = arith.constant 1 : i32
    %67 = vector.broadcast %c1_i32_27 : i32 to vector<256x1xi32>
    %68 = arith.addi %37, %67 : vector<256x1xi32>
    %c0_i32_28 = arith.constant 0 : i32
    %69 = vector.broadcast %c0_i32_28 : i32 to vector<256x1xi32>
    %70 = arith.cmpi sge, %68, %69 : vector<256x1xi32>
    %c1_i32_29 = arith.constant 1 : i32
    %71 = vector.broadcast %c1_i32_29 : i32 to vector<256x1xi32>
    %72 = arith.addi %37, %71 : vector<256x1xi32>
    %c16_i32_30 = arith.constant 16 : i32
    %73 = vector.broadcast %c16_i32_30 : i32 to vector<256x1xi32>
    %74 = arith.cmpi slt, %72, %73 : vector<256x1xi32>
    %75 = arith.andi %70, %74 : vector<256x1xi1>
    %76 = arith.extui %75 : vector<256x1xi1> to vector<256x1xi32>
    %77 = arith.sitofp %76 : vector<256x1xi32> to vector<256x1xf32>
    %78 = vector.extract_strided_slice %20 {offsets = [0, 2, 0], sizes = [1, 1, 16], strides = [1, 1, 1]} : vector<3x3x16xf32> to vector<1x1x16xf32>
    %79 = vector.shape_cast %78 : vector<1x1x16xf32> to vector<16xf32>
    %80 = vector.shape_cast %79 : vector<16xf32> to vector<1x16xf32>
    %81 = vector.broadcast %80 : vector<1x16xf32> to vector<256x16xf32>
    %82 = vector.broadcast %77 : vector<256x1xf32> to vector<256x16xf32>
    %83 = arith.mulf %81, %82 : vector<256x16xf32>
    %84 = arith.mulf %66, %83 : vector<256x16xf32>
    %85 = arith.addf %65, %84 : vector<256x16xf32>
    %c23 = arith.constant 23 : index
    %c0_31 = arith.constant 0 : index
    %86 = vector.load %arg8[%c23, %c0_31] : memref<304x16xf32, #tpu.memory_space<vmem>>, vector<256x16xf32>
    %c-1_i32_32 = arith.constant -1 : i32
    %87 = vector.broadcast %c-1_i32_32 : i32 to vector<256x1xi32>
    %88 = arith.addi %37, %87 : vector<256x1xi32>
    %c0_i32_33 = arith.constant 0 : i32
    %89 = vector.broadcast %c0_i32_33 : i32 to vector<256x1xi32>
    %90 = arith.cmpi sge, %88, %89 : vector<256x1xi32>
    %c-1_i32_34 = arith.constant -1 : i32
    %91 = vector.broadcast %c-1_i32_34 : i32 to vector<256x1xi32>
    %92 = arith.addi %37, %91 : vector<256x1xi32>
    %c16_i32_35 = arith.constant 16 : i32
    %93 = vector.broadcast %c16_i32_35 : i32 to vector<256x1xi32>
    %94 = arith.cmpi slt, %92, %93 : vector<256x1xi32>
    %95 = arith.andi %90, %94 : vector<256x1xi1>
    %96 = arith.extui %95 : vector<256x1xi1> to vector<256x1xi32>
    %97 = arith.sitofp %96 : vector<256x1xi32> to vector<256x1xf32>
    %98 = vector.extract_strided_slice %20 {offsets = [1, 0, 0], sizes = [1, 1, 16], strides = [1, 1, 1]} : vector<3x3x16xf32> to vector<1x1x16xf32>
    %99 = vector.shape_cast %98 : vector<1x1x16xf32> to vector<16xf32>
    %100 = vector.shape_cast %99 : vector<16xf32> to vector<1x16xf32>
    %101 = vector.broadcast %100 : vector<1x16xf32> to vector<256x16xf32>
    %102 = vector.broadcast %97 : vector<256x1xf32> to vector<256x16xf32>
    %103 = arith.mulf %101, %102 : vector<256x16xf32>
    %104 = arith.mulf %86, %103 : vector<256x16xf32>
    %105 = arith.addf %85, %104 : vector<256x16xf32>
    %c24_36 = arith.constant 24 : index
    %c0_37 = arith.constant 0 : index
    %106 = vector.load %arg8[%c24_36, %c0_37] : memref<304x16xf32, #tpu.memory_space<vmem>>, vector<256x16xf32>
    %107 = vector.extract_strided_slice %20 {offsets = [1, 1, 0], sizes = [1, 1, 16], strides = [1, 1, 1]} : vector<3x3x16xf32> to vector<1x1x16xf32>
    %108 = vector.shape_cast %107 : vector<1x1x16xf32> to vector<16xf32>
    %109 = vector.shape_cast %108 : vector<16xf32> to vector<1x16xf32>
    %110 = vector.broadcast %109 : vector<1x16xf32> to vector<256x16xf32>
    %111 = arith.mulf %106, %110 : vector<256x16xf32>
    %112 = arith.addf %105, %111 : vector<256x16xf32>
    %c25 = arith.constant 25 : index
    %c0_38 = arith.constant 0 : index
    %113 = vector.load %arg8[%c25, %c0_38] : memref<304x16xf32, #tpu.memory_space<vmem>>, vector<256x16xf32>
    %c1_i32_39 = arith.constant 1 : i32
    %114 = vector.broadcast %c1_i32_39 : i32 to vector<256x1xi32>
    %115 = arith.addi %37, %114 : vector<256x1xi32>
    %c0_i32_40 = arith.constant 0 : i32
    %116 = vector.broadcast %c0_i32_40 : i32 to vector<256x1xi32>
    %117 = arith.cmpi sge, %115, %116 : vector<256x1xi32>
    %c1_i32_41 = arith.constant 1 : i32
    %118 = vector.broadcast %c1_i32_41 : i32 to vector<256x1xi32>
    %119 = arith.addi %37, %118 : vector<256x1xi32>
    %c16_i32_42 = arith.constant 16 : i32
    %120 = vector.broadcast %c16_i32_42 : i32 to vector<256x1xi32>
    %121 = arith.cmpi slt, %119, %120 : vector<256x1xi32>
    %122 = arith.andi %117, %121 : vector<256x1xi1>
    %123 = arith.extui %122 : vector<256x1xi1> to vector<256x1xi32>
    %124 = arith.sitofp %123 : vector<256x1xi32> to vector<256x1xf32>
    %125 = vector.extract_strided_slice %20 {offsets = [1, 2, 0], sizes = [1, 1, 16], strides = [1, 1, 1]} : vector<3x3x16xf32> to vector<1x1x16xf32>
    %126 = vector.shape_cast %125 : vector<1x1x16xf32> to vector<16xf32>
    %127 = vector.shape_cast %126 : vector<16xf32> to vector<1x16xf32>
    %128 = vector.broadcast %127 : vector<1x16xf32> to vector<256x16xf32>
    %129 = vector.broadcast %124 : vector<256x1xf32> to vector<256x16xf32>
    %130 = arith.mulf %128, %129 : vector<256x16xf32>
    %131 = arith.mulf %113, %130 : vector<256x16xf32>
    %132 = arith.addf %112, %131 : vector<256x16xf32>
    %c39 = arith.constant 39 : index
    %c0_43 = arith.constant 0 : index
    %133 = vector.load %arg8[%c39, %c0_43] : memref<304x16xf32, #tpu.memory_space<vmem>>, vector<256x16xf32>
    %c-1_i32_44 = arith.constant -1 : i32
    %134 = vector.broadcast %c-1_i32_44 : i32 to vector<256x1xi32>
    %135 = arith.addi %37, %134 : vector<256x1xi32>
    %c0_i32_45 = arith.constant 0 : i32
    %136 = vector.broadcast %c0_i32_45 : i32 to vector<256x1xi32>
    %137 = arith.cmpi sge, %135, %136 : vector<256x1xi32>
    %c-1_i32_46 = arith.constant -1 : i32
    %138 = vector.broadcast %c-1_i32_46 : i32 to vector<256x1xi32>
    %139 = arith.addi %37, %138 : vector<256x1xi32>
    %c16_i32_47 = arith.constant 16 : i32
    %140 = vector.broadcast %c16_i32_47 : i32 to vector<256x1xi32>
    %141 = arith.cmpi slt, %139, %140 : vector<256x1xi32>
    %142 = arith.andi %137, %141 : vector<256x1xi1>
    %143 = arith.extui %142 : vector<256x1xi1> to vector<256x1xi32>
    %144 = arith.sitofp %143 : vector<256x1xi32> to vector<256x1xf32>
    %145 = vector.extract_strided_slice %20 {offsets = [2, 0, 0], sizes = [1, 1, 16], strides = [1, 1, 1]} : vector<3x3x16xf32> to vector<1x1x16xf32>
    %146 = vector.shape_cast %145 : vector<1x1x16xf32> to vector<16xf32>
    %147 = vector.shape_cast %146 : vector<16xf32> to vector<1x16xf32>
    %148 = vector.broadcast %147 : vector<1x16xf32> to vector<256x16xf32>
    %149 = vector.broadcast %144 : vector<256x1xf32> to vector<256x16xf32>
    %150 = arith.mulf %148, %149 : vector<256x16xf32>
    %151 = arith.mulf %133, %150 : vector<256x16xf32>
    %152 = arith.addf %132, %151 : vector<256x16xf32>
    %c40 = arith.constant 40 : index
    %c0_48 = arith.constant 0 : index
    %153 = vector.load %arg8[%c40, %c0_48] : memref<304x16xf32, #tpu.memory_space<vmem>>, vector<256x16xf32>
    %154 = vector.extract_strided_slice %20 {offsets = [2, 1, 0], sizes = [1, 1, 16], strides = [1, 1, 1]} : vector<3x3x16xf32> to vector<1x1x16xf32>
    %155 = vector.shape_cast %154 : vector<1x1x16xf32> to vector<16xf32>
    %156 = vector.shape_cast %155 : vector<16xf32> to vector<1x16xf32>
    %157 = vector.broadcast %156 : vector<1x16xf32> to vector<256x16xf32>
    %158 = arith.mulf %153, %157 : vector<256x16xf32>
    %159 = arith.addf %152, %158 : vector<256x16xf32>
    %c41 = arith.constant 41 : index
    %c0_49 = arith.constant 0 : index
    %160 = vector.load %arg8[%c41, %c0_49] : memref<304x16xf32, #tpu.memory_space<vmem>>, vector<256x16xf32>
    %c1_i32_50 = arith.constant 1 : i32
    %161 = vector.broadcast %c1_i32_50 : i32 to vector<256x1xi32>
    %162 = arith.addi %37, %161 : vector<256x1xi32>
    %c0_i32_51 = arith.constant 0 : i32
    %163 = vector.broadcast %c0_i32_51 : i32 to vector<256x1xi32>
    %164 = arith.cmpi sge, %162, %163 : vector<256x1xi32>
    %c1_i32_52 = arith.constant 1 : i32
    %165 = vector.broadcast %c1_i32_52 : i32 to vector<256x1xi32>
    %166 = arith.addi %37, %165 : vector<256x1xi32>
    %c16_i32_53 = arith.constant 16 : i32
    %167 = vector.broadcast %c16_i32_53 : i32 to vector<256x1xi32>
    %168 = arith.cmpi slt, %166, %167 : vector<256x1xi32>
    %169 = arith.andi %164, %168 : vector<256x1xi1>
    %170 = arith.extui %169 : vector<256x1xi1> to vector<256x1xi32>
    %171 = arith.sitofp %170 : vector<256x1xi32> to vector<256x1xf32>
    %172 = vector.extract_strided_slice %20 {offsets = [2, 2, 0], sizes = [1, 1, 16], strides = [1, 1, 1]} : vector<3x3x16xf32> to vector<1x1x16xf32>
    %173 = vector.shape_cast %172 : vector<1x1x16xf32> to vector<16xf32>
    %174 = vector.shape_cast %173 : vector<16xf32> to vector<1x16xf32>
    %175 = vector.broadcast %174 : vector<1x16xf32> to vector<256x16xf32>
    %176 = vector.broadcast %171 : vector<256x1xf32> to vector<256x16xf32>
    %177 = arith.mulf %175, %176 : vector<256x16xf32>
    %178 = arith.mulf %160, %177 : vector<256x16xf32>
    %179 = arith.addf %159, %178 : vector<256x16xf32>
    %c0_54 = arith.constant 0 : index
    %c0_55 = arith.constant 0 : index
    %180 = vector.load %arg5[%c0_54, %c0_55] : memref<1x16xf32, #tpu.memory_space<vmem>>, vector<1x16xf32>
    %181 = vector.broadcast %180 : vector<1x16xf32> to vector<256x16xf32>
    %182 = arith.addf %179, %181 : vector<256x16xf32>
    %cst_56 = arith.constant 3.000000e+00 : f32
    %183 = vector.broadcast %cst_56 : f32 to vector<256x16xf32>
    %184 = arith.addf %182, %183 : vector<256x16xf32>
    %cst_57 = arith.constant 0.000000e+00 : f32
    %cst_58 = arith.constant 6.000000e+00 : f32
    %185 = vector.broadcast %cst_57 : f32 to vector<256x16xf32>
    %186 = arith.maximumf %185, %184 : vector<256x16xf32>
    %187 = vector.broadcast %cst_58 : f32 to vector<256x16xf32>
    %188 = arith.minimumf %187, %186 : vector<256x16xf32>
    %189 = arith.mulf %182, %188 : vector<256x16xf32>
    %cst_59 = arith.constant 0.166666672 : f32
    %190 = vector.broadcast %cst_59 : f32 to vector<256x16xf32>
    %191 = arith.mulf %189, %190 : vector<256x16xf32>
    %192 = arith.truncf %191 : vector<256x16xf32> to vector<256x16xbf16>
    %c0_60 = arith.constant 0 : index
    %c0_61 = arith.constant 0 : index
    %c0_62 = arith.constant 0 : index
    %193 = vector.load %arg6[%c0_60, %c0_61, %c0_62] : memref<1x256x16xbf16, #tpu.memory_space<vmem>>, vector<1x256x16xbf16>
    %194 = vector.shape_cast %193 : vector<1x256x16xbf16> to vector<256x16xbf16>
    %195 = vector.shape_cast %192 : vector<256x16xbf16> to vector<1x256x16xbf16>
    tpu.vector_store %arg6[%c0_60, %c0_61, %c0_62], %195 {strides = array<i32>} : memref<1x256x16xbf16, #tpu.memory_space<vmem>>, vector<1x256x16xbf16>,
    %cst_63 = arith.constant dense<0.000000e+00> : vector<16xf32>
    %196 = vector.multi_reduction <add>, %191, %cst_63 [0] : vector<256x16xf32> to vector<16xf32>
    %197 = vector.shape_cast %196 : vector<16xf32> to vector<1x16xf32>
    %cst_64 = arith.constant 3.906250e-03 : f32
    %198 = vector.broadcast %cst_64 : f32 to vector<1x16xf32>
    %199 = arith.mulf %197, %198 : vector<1x16xf32>
    %c0_65 = arith.constant 0 : index
    %c0_66 = arith.constant 0 : index
    %c0_67 = arith.constant 0 : index
    %200 = vector.load %arg7[%c0_65, %c0_66, %c0_67] : memref<1x1x16xf32, #tpu.memory_space<vmem>>, vector<1x1x16xf32>
    %201 = vector.shape_cast %200 : vector<1x1x16xf32> to vector<1x16xf32>
    %202 = vector.shape_cast %199 : vector<1x16xf32> to vector<1x1x16xf32>
    tpu.vector_store %arg7[%c0_65, %c0_66, %c0_67], %202 {strides = array<i32>} : memref<1x1x16xf32, #tpu.memory_space<vmem>>, vector<1x1x16xf32>,
    return
  }
  func.func @transform_0(%arg0: i32) -> (i32, i32, i32) {
    %c0_i32 = arith.constant 0 : i32
    %c0_i32_0 = arith.constant 0 : i32
    %c0_i32_1 = arith.constant 0 : i32
    return %arg0, %c0_i32, %c0_i32_0 : i32, i32, i32
  }
  func.func @transform_1(%arg0: i32) -> (i32, i32) {
    %c0_i32 = arith.constant 0 : i32
    %c0_i32_0 = arith.constant 0 : i32
    %c0_i32_1 = arith.constant 0 : i32
    return %c0_i32, %c0_i32_0 : i32, i32
  }
  func.func @transform_2(%arg0: i32) -> (i32, i32) {
    %c0_i32 = arith.constant 0 : i32
    %c0_i32_0 = arith.constant 0 : i32
    %c0_i32_1 = arith.constant 0 : i32
    return %c0_i32, %c0_i32_0 : i32, i32
  }
  func.func @transform_3(%arg0: i32) -> (i32, i32, i32) {
    %c0_i32 = arith.constant 0 : i32
    %c0_i32_0 = arith.constant 0 : i32
    %c0_i32_1 = arith.constant 0 : i32
    %c0_i32_2 = arith.constant 0 : i32
    return %c0_i32, %c0_i32_0, %c0_i32_1 : i32, i32, i32
  }
  func.func @transform_4(%arg0: i32) -> (i32, i32) {
    %c0_i32 = arith.constant 0 : i32
    %c0_i32_0 = arith.constant 0 : i32
    %c0_i32_1 = arith.constant 0 : i32
    return %c0_i32, %c0_i32_0 : i32, i32
  }
  func.func @transform_5(%arg0: i32) -> (i32, i32, i32) {
    %c0_i32 = arith.constant 0 : i32
    %c0_i32_0 = arith.constant 0 : i32
    %c0_i32_1 = arith.constant 0 : i32
    return %arg0, %c0_i32, %c0_i32_0 : i32, i32, i32
  }
  func.func @transform_6(%arg0: i32) -> (i32, i32, i32) {
    %c0_i32 = arith.constant 0 : i32
    %c0_i32_0 = arith.constant 0 : i32
    %c0_i32_1 = arith.constant 0 : i32
    return %arg0, %c0_i32, %c0_i32_0 : i32, i32, i32
  }
}

</mosaic_0001>

<llo_original>
// kernel: mobilenetv3_unit_forward.3
$region0: #{mobilenetv3_unit_forward.3}
  #allocation0 [shape = 'u32[]', space=smem, size = 0x4, offset = 0x4, fixed_abs, tag = 'smem constant byte address 0x4 - core index']
  #allocation1 [shape = 'u32[144,128]{1,0:T(1,128)}', space=vmem, size = 0x12000, scoped, tag = 'internal scratch']
  %s0 = inlined_call_operand.vmem [shape: bf16[2,256,16], index: 0, kind: input, shape index: {}]
  %s1 = inlined_call_operand.vmem [shape: f32[2,1,16], index: 1, kind: input, shape index: {}]
  %s2 = inlined_call_operand.vmem [shape: bf16[16,8], index: 2, kind: input, shape index: {}]
  %s3 = inlined_call_operand.vmem [shape: f32[1,8], index: 3, kind: input, shape index: {}]
  %s4 = inlined_call_operand.vmem [shape: f32[2,256,8], index: 4, kind: input, shape index: {}]
  %s5 = inlined_call_operand.vmem [shape: f32[2,256,8], index: 5, kind: output, shape index: {}]
  %s6 = sld [smem:[#allocation0]]
  $region53: #{mobilenetv3_unit_forward.3} parent=0
    _
  %s8 = ssub.s32 1, %s6
  %s9 = scalar_select 0, %s8, %s6
  loop: start=0, step=1, limit=4
  $region2: #{mobilenetv3_unit_forward.3} parent=0 // loop_pre_header
    _
  $region3: #{mobilenetv3_unit_forward.3} parent=0 // loop_header
    %s11 = sphi 0, %s15
    %p12 = scmp.ge.s32.totalorder %s11, 4
    %s18 = sphi 0, %s30
    %s19 = sphi 0, %s26
    %s20 = sphi 0, %s18
    %s21 = sphi 0, %s19
    %s22 = sphi 0, %s20
    %s23 = sphi 0, %s21
    %s35 = sphi 0, %s37
    %s38 = sphi 0, %s35
    %s39 = sphi 0, %s38
    %s55 = sphi 0, %s39
    %s61 = sphi 0, %s63
    %s64 = sphi 0, %s61
    %s65 = sphi 0, %s64
    %s81 = sphi 0, %s65
    %s85 = sphi 0, %s85
    %s87 = sphi 0, %s85
    %s88 = sphi 0, %s87
    %s102 = sphi 0, %s88
    %s106 = sphi 0, %s106
    %s108 = sphi 0, %s106
    %s109 = sphi 0, %s108
    %s123 = sphi 0, %s109
    %s131 = sphi 0, %s133
    %s134 = sphi 0, %s131
    %s135 = sphi 0, %s134
    %s151 = sphi 0, %s135
    %s159 = sphi 0, %s161
    %s162 = sphi 0, %s159
    %s163 = sphi 0, %s162
    %s179 = sphi 0, %s163
  $region4: #{mobilenetv3_unit_forward.3} parent=0 // loop_header_branch
    %14 = sbr.rel (%p12) target = $region8
  $region5: #{mobilenetv3_unit_forward.3} parent=0 // loop_body
    %s16 = ssub.s32 %s11, 1
    %s17 = ssub.s32 %s11, 2
    %s24 = sadd.s32 1, %s19
    %p25 = scmp.ge.s32.totalorder %s24, 1
    %s26 = scalar_select %p25, 0, %s24
    %s27 = sadd.s32 1, %s18
    %s28 = scalar_select %p25, %s27, %s18
    %p29 = scmp.ge.s32.totalorder %s28, 2
    %s30 = scalar_select %p29, 0, %s28
    %s31 = ssub.s32 %s18, %s30
    %s32 = ssub.s32 %s19, %s26
    %s33 = sor.u32 %s31, %s32
    %p34 = scmp.eq.s32.totalorder %s33, 0
    %s36 = sadd.s32 %s35, 1
    %s37 = scalar_select %p34, %s35, %s36
    %p40 = pneg %p34
    %p41 = scmp.eq.s32.totalorder %s11, 1
    %p42 = por %p40, %p41
    %p43 = scmp.ne.s32.totalorder %s35, %s38
    %p44 = scmp.eq.s32.totalorder %s11, 0
    %p45 = por %p43, %p44
    %p46 = scmp.ne.s32.totalorder %s35, %s38
    %p47 = scmp.eq.s32.totalorder %s16, 1
    %p48 = por %p46, %p47
    %p49 = scmp.ne.s32.totalorder %s38, %s39
    %p50 = scmp.eq.s32.totalorder %s16, 0
    %p51 = por %p49, %p50
    %p52 = scmp.ne.s32.totalorder %s38, %s39
    %p53 = scmp.eq.s32.totalorder %s17, 1
    %p54 = por %p52, %p53
    %p56 = scmp.ne.s32.totalorder %s39, %s55
    %p57 = scmp.eq.s32.totalorder %s17, 0
    %p58 = por %p56, %p57
    %s59 = ssub.s32 %s18, %s30
    %p60 = scmp.eq.s32.totalorder %s59, 0
    %s62 = sadd.s32 %s61, 1
    %s63 = scalar_select %p60, %s61, %s62
    %p66 = pneg %p60
    %p67 = scmp.eq.s32.totalorder %s11, 1
    %p68 = por %p66, %p67
    %p69 = scmp.ne.s32.totalorder %s61, %s64
    %p70 = scmp.eq.s32.totalorder %s11, 0
    %p71 = por %p69, %p70
    %p72 = scmp.ne.s32.totalorder %s61, %s64
    %p73 = scmp.eq.s32.totalorder %s16, 1
    %p74 = por %p72, %p73
    %p75 = scmp.ne.s32.totalorder %s64, %s65
    %p76 = scmp.eq.s32.totalorder %s16, 0
    %p77 = por %p75, %p76
    %p78 = scmp.ne.s32.totalorder %s64, %s65
    %p79 = scmp.eq.s32.totalorder %s17, 1
    %p80 = por %p78, %p79
    %p82 = scmp.ne.s32.totalorder %s65, %s81
    %p83 = scmp.eq.s32.totalorder %s17, 0
    %p84 = por %p82, %p83
    %s86 = sadd.s32 %s85, 1
    %p89 = scmp.eq.s32.totalorder %s11, 1
    %p90 = scmp.ne.s32.totalorder %s85, %s87
    %p91 = scmp.eq.s32.totalorder %s11, 0
    %p92 = por %p90, %p91
    %p93 = scmp.ne.s32.totalorder %s85, %s87
    %p94 = scmp.eq.s32.totalorder %s16, 1
    %p95 = por %p93, %p94
    %p96 = scmp.ne.s32.totalorder %s87, %s88
    %p97 = scmp.eq.s32.totalorder %s16, 0
    %p98 = por %p96, %p97
    %p99 = scmp.ne.s32.totalorder %s87, %s88
    %p100 = scmp.eq.s32.totalorder %s17, 1
    %p101 = por %p99, %p100
    %p103 = scmp.ne.s32.totalorder %s88, %s102
    %p104 = scmp.eq.s32.totalorder %s17, 0
    %p105 = por %p103, %p104
    %s107 = sadd.s32 %s106, 1
    %p110 = scmp.eq.s32.totalorder %s11, 1
    %p111 = scmp.ne.s32.totalorder %s106, %s108
    %p112 = scmp.eq.s32.totalorder %s11, 0
    %p113 = por %p111, %p112
    %p114 = scmp.ne.s32.totalorder %s106, %s108
    %p115 = scmp.eq.s32.totalorder %s16, 1
    %p116 = por %p114, %p115
    %p117 = scmp.ne.s32.totalorder %s108, %s109
    %p118 = scmp.eq.s32.totalorder %s16, 0
    %p119 = por %p117, %p118
    %p120 = scmp.ne.s32.totalorder %s108, %s109
    %p121 = scmp.eq.s32.totalorder %s17, 1
    %p122 = por %p120, %p121
    %p124 = scmp.ne.s32.totalorder %s109, %s123
    %p125 = scmp.eq.s32.totalorder %s17, 0
    %p126 = por %p124, %p125
    %s127 = ssub.s32 %s18, %s30
    %s128 = ssub.s32 %s19, %s26
    %s129 = sor.u32 %s127, %s128
    %p130 = scmp.eq.s32.totalorder %s129, 0
    %s132 = sadd.s32 %s131, 1
    %s133 = scalar_select %p130, %s131, %s132
    %p136 = pneg %p130
    %p137 = scmp.eq.s32.totalorder %s11, 1
    %p138 = por %p136, %p137
    %p139 = scmp.ne.s32.totalorder %s131, %s134
    %p140 = scmp.eq.s32.totalorder %s11, 0
    %p141 = por %p139, %p140
    %p142 = scmp.ne.s32.totalorder %s131, %s134
    %p143 = scmp.eq.s32.totalorder %s16, 1
    %p144 = por %p142, %p143
    %p145 = scmp.ne.s32.totalorder %s134, %s135
    %p146 = scmp.eq.s32.totalorder %s16, 0
    %p147 = por %p145, %p146
    %p148 = scmp.ne.s32.totalorder %s134, %s135
    %p149 = scmp.eq.s32.totalorder %s17, 1
    %p150 = por %p148, %p149
    %p152 = scmp.ne.s32.totalorder %s135, %s151
    %p153 = scmp.eq.s32.totalorder %s17, 0
    %p154 = por %p152, %p153
    %s155 = ssub.s32 %s18, %s30
    %s156 = ssub.s32 %s19, %s26
    %s157 = sor.u32 %s155, %s156
    %p158 = scmp.eq.s32.totalorder %s157, 0
    %s160 = sadd.s32 %s159, 1
    %s161 = scalar_select %p158, %s159, %s160
    %p164 = pneg %p158
    %p165 = scmp.eq.s32.totalorder %s11, 1
    %p166 = por %p164, %p165
    %p167 = scmp.ne.s32.totalorder %s159, %s162
    %p168 = scmp.eq.s32.totalorder %s11, 0
    %p169 = por %p167, %p168
    %p170 = scmp.ne.s32.totalorder %s159, %s162
    %p171 = scmp.eq.s32.totalorder %s16, 1
    %p172 = por %p170, %p171
    %p173 = scmp.ne.s32.totalorder %s162, %s163
    %p174 = scmp.eq.s32.totalorder %s16, 0
    %p175 = por %p173, %p174
    %p176 = scmp.ne.s32.totalorder %s162, %s163
    %p177 = scmp.eq.s32.totalorder %s17, 1
    %p178 = por %p176, %p177
    %p180 = scmp.ne.s32.totalorder %s163, %s179
    %p181 = scmp.eq.s32.totalorder %s17, 0
    %p182 = por %p180, %p181
    %p183 = scmp.le.s32.totalorder 1, %s11
    %p184 = scmp.lt.s32.totalorder %s11, 3
    %p185 = pnand %p183, %p184
    %p186 = pneg %p185
    // Predicated region
    $region9: #{mobilenetv3_unit_forward.3} parent=5 // pred_check
      _
    $region10: #{mobilenetv3_unit_forward.3} parent=5 // pred_check_branch
      %188 = sbr.rel (%p185) target = $region12
    $region11: #{mobilenetv3_unit_forward.3} parent=5 // pred_region
      %s189 = ssub.s32 %s11, 1
      // Predicated region
      $region13: #{mobilenetv3_unit_forward.3} parent=11 // pred_check
        %p190 = pneg %p98
      $region14: #{mobilenetv3_unit_forward.3} parent=11 // pred_check_branch
        %192 = sbr.rel (%p190) target = $region16
      $region15: #{mobilenetv3_unit_forward.3} parent=11 // pred_region
        _
      $region16: #{mobilenetv3_unit_forward.3} parent=11 // pred_fallthru
        _
      // Predicated region
      $region17: #{mobilenetv3_unit_forward.3} parent=11 // pred_check
        %p193 = pneg %p119
      $region18: #{mobilenetv3_unit_forward.3} parent=11 // pred_check_branch
        %195 = sbr.rel (%p193) target = $region20
      $region19: #{mobilenetv3_unit_forward.3} parent=11 // pred_region
        _
      $region20: #{mobilenetv3_unit_forward.3} parent=11 // pred_fallthru
        _
    $region12: #{mobilenetv3_unit_forward.3} parent=5 // pred_fallthru
      _
    %p196 = scmp.lt.s32.totalorder %s11, 2
    // Predicated region
    $region21: #{mobilenetv3_unit_forward.3} parent=5 // pred_check
      %p197 = pneg %p196
    $region22: #{mobilenetv3_unit_forward.3} parent=5 // pred_check_branch
      %199 = sbr.rel (%p197) target = $region24
    $region23: #{mobilenetv3_unit_forward.3} parent=5 // pred_region
      // Predicated region
      $region25: #{mobilenetv3_unit_forward.3} parent=23 // pred_check
        %p200 = pneg %p45
      $region26: #{mobilenetv3_unit_forward.3} parent=23 // pred_check_branch
        %202 = sbr.rel (%p200) target = $region28
      $region27: #{mobilenetv3_unit_forward.3} parent=23 // pred_region
        %s203 = smul.u32 32, %s19
        %p204 = scmp.lt.s32.totalorder %s18, 1
        %s205 = scalar_select %p204, %s18, 1
        %p206 = scmp.lt.s32.totalorder %s203, 31
        %s207 = scalar_select %p206, %s203, 31
        %s208 = smul.addr %s205, 32
        %s209 = sadd.s32 %s207, %s208
        %s210 = smul.addr %s209, 4
        %s211 = scalar_lea.vmem %s0, %s210
        %s212 = smul.u32 32, %s19
      $region28: #{mobilenetv3_unit_forward.3} parent=23 // pred_fallthru
        _
      // Predicated region
      $region29: #{mobilenetv3_unit_forward.3} parent=23 // pred_check
        %p213 = pneg %p71
      $region30: #{mobilenetv3_unit_forward.3} parent=23 // pred_check_branch
        %215 = sbr.rel (%p213) target = $region32
      $region31: #{mobilenetv3_unit_forward.3} parent=23 // pred_region
        %p216 = scmp.lt.s32.totalorder %s18, 1
        %s217 = scalar_select %p216, %s18, 1
        %s218 = scalar_lea.vmem %s1, %s217
      $region32: #{mobilenetv3_unit_forward.3} parent=23 // pred_fallthru
        _
      // Predicated region
      $region33: #{mobilenetv3_unit_forward.3} parent=23 // pred_check
        %p219 = pneg %p141
      $region34: #{mobilenetv3_unit_forward.3} parent=23 // pred_check_branch
        %221 = sbr.rel (%p219) target = $region36
      $region35: #{mobilenetv3_unit_forward.3} parent=23 // pred_region
        %s222 = smul.u32 32, %s19
        %p223 = scmp.lt.s32.totalorder %s18, 1
        %s224 = scalar_select %p223, %s18, 1
        %p225 = scmp.lt.s32.totalorder %s222, 31
        %s226 = scalar_select %p225, %s222, 31
        %s227 = smul.addr %s224, 32
        %s228 = sadd.s32 %s226, %s227
        %s229 = smul.addr %s228, 8
        %s230 = scalar_lea.vmem %s4, %s229
        %s231 = smul.u32 32, %s19
      $region36: #{mobilenetv3_unit_forward.3} parent=23 // pred_fallthru
        _
    $region24: #{mobilenetv3_unit_forward.3} parent=5 // pred_fallthru
      _
    %p232 = scmp.le.s32.totalorder 1, %s11
    %p233 = scmp.lt.s32.totalorder %s11, 3
    %p234 = pnand %p232, %p233
    %p235 = pneg %p234
    // Predicated region
    $region37: #{mobilenetv3_unit_forward.3} parent=5 // pred_check
      _
    $region38: #{mobilenetv3_unit_forward.3} parent=5 // pred_check_branch
      %237 = sbr.rel (%p234) target = $region40
    $region39: #{mobilenetv3_unit_forward.3} parent=5 // pred_region
      %s238 = ssub.s32 %s11, 1
      %s239 = smul.u32 32, %s21
      %p240 = scmp.lt.s32.totalorder %s20, 1
      %s241 = scalar_select %p240, %s20, 1
      %p242 = scmp.lt.s32.totalorder %s239, 31
      %s243 = scalar_select %p242, %s239, 31
      %s244 = smul.addr %s241, 32
      %s245 = sadd.s32 %s243, %s244
      %s246 = smul.addr %s245, 4
      %s247 = scalar_lea.vmem %s0, %s246
      %p248 = pneg %p51
      %p249 = pneg %p48
      %p250 = scmp.lt.s32.totalorder %s20, 1
      %s251 = scalar_select %p250, %s20, 1
      %s252 = scalar_lea.vmem %s1, %s251
      %p253 = pneg %p77
      %p254 = pneg %p74
      %p255 = pneg %p98
      %p256 = pneg %p95
      %p257 = pneg %p119
      %p258 = pneg %p116
      %s259 = smul.u32 32, %s21
      %p260 = scmp.lt.s32.totalorder %s20, 1
      %s261 = scalar_select %p260, %s20, 1
      %p262 = scmp.lt.s32.totalorder %s259, 31
      %s263 = scalar_select %p262, %s259, 31
      %s264 = smul.addr %s261, 32
      %s265 = sadd.s32 %s263, %s264
      %s266 = smul.addr %s265, 8
      %s267 = scalar_lea.vmem %s4, %s266
      %p268 = pneg %p147
      %p269 = pneg %p144
      %p270 = pneg %p175
      %p271 = pneg %p172
      %s272 = smul.u32 32, %s21
      %p273 = scmp.lt.s32.totalorder %s20, 1
      %s274 = scalar_select %p273, %s20, 1
      %p275 = scmp.lt.s32.totalorder %s272, 31
      %s276 = scalar_select %p275, %s272, 31
      %s277 = smul.addr %s274, 32
      %s278 = sadd.s32 %s276, %s277
      %s279 = smul.addr %s278, 8
      %s280 = scalar_lea.vmem %s5, %s279
      %s281 = smul.u32 32, %s21
      %p282 = scmp.lt.s32.totalorder %s20, 1
      %s283 = scalar_select %p282, %s20, 1
      %p284 = scmp.lt.s32.totalorder %s281, 31
      %s285 = scalar_select %p284, %s281, 31
      %s286 = smul.addr %s283, 32
      %s287 = sadd.s32 %s285, %s286
      %s288 = smul.addr %s287, 4
      %s289 = scalar_lea.vmem %s0, %s288
      %s290 = smul.u32 32, %s21
      %p291 = scmp.lt.s32.totalorder %s20, 1
      %s292 = scalar_select %p291, %s20, 1
      %s293 = scalar_lea.vmem %s1, %s292
      %s294 = smul.u32 32, %s21
      %p295 = scmp.lt.s32.totalorder %s20, 1
      %s296 = scalar_select %p295, %s20, 1
      %p297 = scmp.lt.s32.totalorder %s294, 31
      %s298 = scalar_select %p297, %s294, 31
      %s299 = smul.addr %s296, 32
      %s300 = sadd.s32 %s298, %s299
      %s301 = smul.addr %s300, 8
      %s302 = scalar_lea.vmem %s4, %s301
      %s303 = smul.u32 32, %s21
      %s304 = smul.u32 32, %s21
      %p305 = scmp.lt.s32.totalorder %s20, 1
      %s306 = scalar_select %p305, %s20, 1
      %p307 = scmp.lt.s32.totalorder %s304, 31
      %s308 = scalar_select %p307, %s304, 31
      %s309 = smul.addr %s306, 32
      %s310 = sadd.s32 %s308, %s309
      %s311 = smul.addr %s310, 8
      %s312 = scalar_lea.vmem %s5, %s311
      %s313 = smul.u32 32, %s21
      %v315 = vld [vmem:[%s289] sm:$0xf]
      %v316 = vld [vmem:[%s289 + $0x4] sm:$0xf]
      %v317 = vld [vmem:[%s289 + $0x8] sm:$0xf]
      %v318 = vld [vmem:[%s289 + $0xc] sm:$0xf]
      %v319 = vld [vmem:[%s289 + $0x10] sm:$0xf]
      %v320 = vld [vmem:[%s289 + $0x14] sm:$0xf]
      %v321 = vld [vmem:[%s289 + $0x18] sm:$0xf]
      %v322 = vld [vmem:[%s289 + $0x1c] sm:$0xf]
      %v323 = vld [vmem:[%s289 + $0x20] sm:$0xf]
      %v324 = vld [vmem:[%s289 + $0x24] sm:$0xf]
      %v325 = vld [vmem:[%s289 + $0x28] sm:$0xf]
      %v326 = vld [vmem:[%s289 + $0x2c] sm:$0xf]
      %v327 = vld [vmem:[%s289 + $0x30] sm:$0xf]
      %v328 = vld [vmem:[%s289 + $0x34] sm:$0xf]
      %v329 = vld [vmem:[%s289 + $0x38] sm:$0xf]
      %v330 = vld [vmem:[%s289 + $0x3c] sm:$0xf]
      %v331 = vld [vmem:[%s289 + $0x40] sm:$0xf]
      %v332 = vld [vmem:[%s289 + $0x44] sm:$0xf]
      %v333 = vld [vmem:[%s289 + $0x48] sm:$0xf]
      %v334 = vld [vmem:[%s289 + $0x4c] sm:$0xf]
      %v335 = vld [vmem:[%s289 + $0x50] sm:$0xf]
      %v336 = vld [vmem:[%s289 + $0x54] sm:$0xf]
      %v337 = vld [vmem:[%s289 + $0x58] sm:$0xf]
      %v338 = vld [vmem:[%s289 + $0x5c] sm:$0xf]
      %v339 = vld [vmem:[%s289 + $0x60] sm:$0xf]
      %v340 = vld [vmem:[%s289 + $0x64] sm:$0xf]
      %v341 = vld [vmem:[%s289 + $0x68] sm:$0xf]
      %v342 = vld [vmem:[%s289 + $0x6c] sm:$0xf]
      %v343 = vld [vmem:[%s289 + $0x70] sm:$0xf]
      %v344 = vld [vmem:[%s289 + $0x74] sm:$0xf]
      %v345 = vld [vmem:[%s289 + $0x78] sm:$0xf]
      %v346 = vld [vmem:[%s289 + $0x7c] sm:$0xf]
      %v347 = vunpack.c.l.bf16 %v315
      %v348 = vunpack.c.l.bf16 %v316
      %v349 = vunpack.c.l.bf16 %v317
      %v350 = vunpack.c.l.bf16 %v318
      %v351 = vunpack.c.l.bf16 %v319
      %v352 = vunpack.c.l.bf16 %v320
      %v353 = vunpack.c.l.bf16 %v321
      %v354 = vunpack.c.l.bf16 %v322
      %v355 = vunpack.c.l.bf16 %v323
      %v356 = vunpack.c.l.bf16 %v324
      %v357 = vunpack.c.l.bf16 %v325
      %v358 = vunpack.c.l.bf16 %v326
      %v359 = vunpack.c.l.bf16 %v327
      %v360 = vunpack.c.l.bf16 %v328
      %v361 = vunpack.c.l.bf16 %v329
      %v362 = vunpack.c.l.bf16 %v330
      %v363 = vunpack.c.l.bf16 %v331
      %v364 = vunpack.c.l.bf16 %v332
      %v365 = vunpack.c.l.bf16 %v333
      %v366 = vunpack.c.l.bf16 %v334
      %v367 = vunpack.c.l.bf16 %v335
      %v368 = vunpack.c.l.bf16 %v336
      %v369 = vunpack.c.l.bf16 %v337
      %v370 = vunpack.c.l.bf16 %v338
      %v371 = vunpack.c.l.bf16 %v339
      %v372 = vunpack.c.l.bf16 %v340
      %v373 = vunpack.c.l.bf16 %v341
      %v374 = vunpack.c.l.bf16 %v342
      %v375 = vunpack.c.l.bf16 %v343
      %v376 = vunpack.c.l.bf16 %v344
      %v377 = vunpack.c.l.bf16 %v345
      %v378 = vunpack.c.l.bf16 %v346
      %v379 = vld [vmem:[%s293] sm:$0x1]
      %v381 = vlaneseq
      %v382 = vshrl.u32 %v381, 7
      %v383 = vsub.s32 0, %v382
      %v384 = vrot.slane %v379, %v383
      %v386 = vmul.f32 %v347, %v384
      %v387 = vmul.f32 %v348, %v384
      %v388 = vmul.f32 %v349, %v384
      %v389 = vmul.f32 %v350, %v384
      %v390 = vmul.f32 %v351, %v384
      %v391 = vmul.f32 %v352, %v384
      %v392 = vmul.f32 %v353, %v384
      %v393 = vmul.f32 %v354, %v384
      %v394 = vmul.f32 %v355, %v384
      %v395 = vmul.f32 %v356, %v384
      %v396 = vmul.f32 %v357, %v384
      %v397 = vmul.f32 %v358, %v384
      %v398 = vmul.f32 %v359, %v384
      %v399 = vmul.f32 %v360, %v384
      %v400 = vmul.f32 %v361, %v384
      %v401 = vmul.f32 %v362, %v384
      %v402 = vmul.f32 %v363, %v384
      %v403 = vmul.f32 %v364, %v384
      %v404 = vmul.f32 %v365, %v384
      %v405 = vmul.f32 %v366, %v384
      %v406 = vmul.f32 %v367, %v384
      %v407 = vmul.f32 %v368, %v384
      %v408 = vmul.f32 %v369, %v384
      %v409 = vmul.f32 %v370, %v384
      %v410 = vmul.f32 %v371, %v384
      %v411 = vmul.f32 %v372, %v384
      %v412 = vmul.f32 %v373, %v384
      %v413 = vmul.f32 %v374, %v384
      %v414 = vmul.f32 %v375, %v384
      %v415 = vmul.f32 %v376, %v384
      %v416 = vmul.f32 %v377, %v384
      %v417 = vmul.f32 %v378, %v384
      %v418 = vpack.c.bf16 %v387, %v386
      %v419 = vpack.c.bf16 %v389, %v388
      %v420 = vpack.c.bf16 %v391, %v390
      %v421 = vpack.c.bf16 %v393, %v392
      %v422 = vpack.c.bf16 %v395, %v394
      %v423 = vpack.c.bf16 %v397, %v396
      %v424 = vpack.c.bf16 %v399, %v398
      %v425 = vpack.c.bf16 %v401, %v400
      %v426 = vpack.c.bf16 %v403, %v402
      %v427 = vpack.c.bf16 %v405, %v404
      %v428 = vpack.c.bf16 %v407, %v406
      %v429 = vpack.c.bf16 %v409, %v408
      %v430 = vpack.c.bf16 %v411, %v410
      %v431 = vpack.c.bf16 %v413, %v412
      %v432 = vpack.c.bf16 %v415, %v414
      %v433 = vpack.c.bf16 %v417, %v416
      %v434 = vld [vmem:[%s2] sm:$0xf]
      %v435 = vld [vmem:[%s2 + $0x4] sm:$0xf]
      %v436 = vld [vmem:[%s3] sm:$0x1]
      %v438 = vlaneseq
      %v439 = vshrl.u32 %v438, 7
      %v440 = vsub.s32 0, %v439
      %v441 = vrot.slane %v436, %v440
      %v445 = vunpack.c.l.b16 %v434
      %v446 = vunpack.c.l.b16 %v435
      %v447 = vpack.c.b16 %v446, %v445
      %vm449 = vcmask 130048
      %v451 = vsel %vm449, %v418, 0
      %v454 = vsel %vm449, %v419, 0
      %v457 = vsel %vm449, %v420, 0
      %v460 = vsel %vm449, %v421, 0
      %v463 = vsel %vm449, %v422, 0
      %v466 = vsel %vm449, %v423, 0
      %v469 = vsel %vm449, %v424, 0
      %v472 = vsel %vm449, %v425, 0
      %v475 = vsel %vm449, %v426, 0
      %v478 = vsel %vm449, %v427, 0
      %v481 = vsel %vm449, %v428, 0
      %v484 = vsel %vm449, %v429, 0
      %v487 = vsel %vm449, %v430, 0
      %v490 = vsel %vm449, %v431, 0
      %v493 = vsel %vm449, %v432, 0
      %v496 = vsel %vm449, %v433, 0
      %498 = vmatprep.subr.bf16.mxu0 0
      %499 = vmatpush1.bf16.msra.mxu0 0
      %500 = vmatprep.subr.bf16.mxu0 0
      %501 = vmatpush1.bf16.msra.mxu0 0
      %502 = vmatprep.subr.bf16.mxu0 0
      %503 = vmatpush1.bf16.msra.mxu0 0
      %504 = vmatprep.subr.bf16.mxu0 0
      %505 = vmatpush1.bf16.msra.mxu0 0
      %506 = vmatprep.subr.bf16.mxu0 0
      %507 = vmatpush1.bf16.msra.mxu0 0
      %508 = vmatprep.subr.bf16.mxu0 0
      %509 = vmatpush1.bf16.msra.mxu0 0
      %510 = vmatprep.subr.bf16.mxu0 0
      %511 = vmatpush1.bf16.msra.mxu0 0
      %512 = vmatprep.subr.bf16.mxu0 0
      %513 = vmatpush1.bf16.msra.mxu0 %v447
      %514 = vmatprep.subr.bf16.mxu0 0
      %515 = vmatpush2.bf16.msra.mxu0 0
      %516 = vmatprep.subr.bf16.mxu0 0
      %517 = vmatpush2.bf16.msra.mxu0 0
      %518 = vmatprep.subr.bf16.mxu0 0
      %519 = vmatpush2.bf16.msra.mxu0 0
      %520 = vmatprep.subr.bf16.mxu0 0
      %521 = vmatpush2.bf16.msra.mxu0 0
      %522 = vmatprep.subr.bf16.mxu0 0
      %523 = vmatpush2.bf16.msra.mxu0 0
      %524 = vmatprep.subr.bf16.mxu0 0
      %525 = vmatpush2.bf16.msra.mxu0 0
      %526 = vmatprep.subr.bf16.mxu0 0
      %527 = vmatpush2.bf16.msra.mxu0 0
      %528 = vmatprep.subr.bf16.mxu0 0
      %529 = vmatpush2.bf16.msra.mxu0 0
      %530 = vmatprep.mubr.bf16.mxu0 0
      %531 = vmatmul.mubr.bf16.gmra.mxu0 %v451
      %v532 = vpop.f32.mrf.mxu0
      %v533 = vadd.f32 %v441, %v532
      %v534 = vpop.f32.mrf.mxu0
      %v535 = vpop.f32.mrf.mxu0
      %v536 = vadd.f32 %v441, %v535
      %v537 = vpop.f32.mrf.mxu0
      %538 = vmatprep.mubr.bf16.mxu0 0
      %539 = vmatmul.mubr.bf16.gmra.mxu0 %v454
      %v540 = vpop.f32.mrf.mxu0
      %v541 = vadd.f32 %v441, %v540
      %v542 = vpop.f32.mrf.mxu0
      %v543 = vpop.f32.mrf.mxu0
      %v544 = vadd.f32 %v441, %v543
      %v545 = vpop.f32.mrf.mxu0
      %546 = vmatprep.mubr.bf16.mxu0 0
      %547 = vmatmul.mubr.bf16.gmra.mxu0 %v457
      %v548 = vpop.f32.mrf.mxu0
      %v549 = vadd.f32 %v441, %v548
      %v550 = vpop.f32.mrf.mxu0
      %v551 = vpop.f32.mrf.mxu0
      %v552 = vadd.f32 %v441, %v551
      %v553 = vpop.f32.mrf.mxu0
      %554 = vmatprep.mubr.bf16.mxu0 0
      %555 = vmatmul.mubr.bf16.gmra.mxu0 %v460
      %v556 = vpop.f32.mrf.mxu0
      %v557 = vadd.f32 %v441, %v556
      %v558 = vpop.f32.mrf.mxu0
      %v559 = vpop.f32.mrf.mxu0
      %v560 = vadd.f32 %v441, %v559
      %v561 = vpop.f32.mrf.mxu0
      %562 = vmatprep.mubr.bf16.mxu0 0
      %563 = vmatmul.mubr.bf16.gmra.mxu0 %v463
      %v564 = vpop.f32.mrf.mxu0
      %v565 = vadd.f32 %v441, %v564
      %v566 = vpop.f32.mrf.mxu0
      %v567 = vpop.f32.mrf.mxu0
      %v568 = vadd.f32 %v441, %v567
      %v569 = vpop.f32.mrf.mxu0
      %570 = vmatprep.mubr.bf16.mxu0 0
      %571 = vmatmul.mubr.bf16.gmra.mxu0 %v466
      %v572 = vpop.f32.mrf.mxu0
      %v573 = vadd.f32 %v441, %v572
      %v574 = vpop.f32.mrf.mxu0
      %v575 = vpop.f32.mrf.mxu0
      %v576 = vadd.f32 %v441, %v575
      %v577 = vpop.f32.mrf.mxu0
      %578 = vmatprep.mubr.bf16.mxu0 0
      %579 = vmatmul.mubr.bf16.gmra.mxu0 %v469
      %v580 = vpop.f32.mrf.mxu0
      %v581 = vadd.f32 %v441, %v580
      %v582 = vpop.f32.mrf.mxu0
      %v583 = vpop.f32.mrf.mxu0
      %v584 = vadd.f32 %v441, %v583
      %v585 = vpop.f32.mrf.mxu0
      %586 = vmatprep.mubr.bf16.mxu0 0
      %587 = vmatmul.mubr.bf16.gmra.mxu0 %v472
      %v588 = vpop.f32.mrf.mxu0
      %v589 = vadd.f32 %v441, %v588
      %v590 = vpop.f32.mrf.mxu0
      %v591 = vpop.f32.mrf.mxu0
      %v592 = vadd.f32 %v441, %v591
      %v593 = vpop.f32.mrf.mxu0
      %594 = vmatprep.mubr.bf16.mxu0 0
      %595 = vmatmul.mubr.bf16.gmra.mxu0 %v475
      %v596 = vpop.f32.mrf.mxu0
      %v597 = vadd.f32 %v441, %v596
      %v598 = vpop.f32.mrf.mxu0
      %v599 = vpop.f32.mrf.mxu0
      %v600 = vadd.f32 %v441, %v599
      %v601 = vpop.f32.mrf.mxu0
      %602 = vmatprep.mubr.bf16.mxu0 0
      %603 = vmatmul.mubr.bf16.gmra.mxu0 %v478
      %v604 = vpop.f32.mrf.mxu0
      %v605 = vadd.f32 %v441, %v604
      %v606 = vpop.f32.mrf.mxu0
      %v607 = vpop.f32.mrf.mxu0
      %v608 = vadd.f32 %v441, %v607
      %v609 = vpop.f32.mrf.mxu0
      %610 = vmatprep.mubr.bf16.mxu0 0
      %611 = vmatmul.mubr.bf16.gmra.mxu0 %v481
      %v612 = vpop.f32.mrf.mxu0
      %v613 = vadd.f32 %v441, %v612
      %v614 = vpop.f32.mrf.mxu0
      %v615 = vpop.f32.mrf.mxu0
      %v616 = vadd.f32 %v441, %v615
      %v617 = vpop.f32.mrf.mxu0
      %618 = vmatprep.mubr.bf16.mxu0 0
      %619 = vmatmul.mubr.bf16.gmra.mxu0 %v484
      %v620 = vpop.f32.mrf.mxu0
      %v621 = vadd.f32 %v441, %v620
      %v622 = vpop.f32.mrf.mxu0
      %v623 = vpop.f32.mrf.mxu0
      %v624 = vadd.f32 %v441, %v623
      %v625 = vpop.f32.mrf.mxu0
      %626 = vmatprep.mubr.bf16.mxu0 0
      %627 = vmatmul.mubr.bf16.gmra.mxu0 %v487
      %v628 = vpop.f32.mrf.mxu0
      %v629 = vadd.f32 %v441, %v628
      %v630 = vpop.f32.mrf.mxu0
      %v631 = vpop.f32.mrf.mxu0
      %v632 = vadd.f32 %v441, %v631
      %v633 = vpop.f32.mrf.mxu0
      %634 = vmatprep.mubr.bf16.mxu0 0
      %635 = vmatmul.mubr.bf16.gmra.mxu0 %v490
      %v636 = vpop.f32.mrf.mxu0
      %v637 = vadd.f32 %v441, %v636
      %v638 = vpop.f32.mrf.mxu0
      %v639 = vpop.f32.mrf.mxu0
      %v640 = vadd.f32 %v441, %v639
      %v641 = vpop.f32.mrf.mxu0
      %642 = vmatprep.mubr.bf16.mxu0 0
      %643 = vmatmul.mubr.bf16.gmra.mxu0 %v493
      %v644 = vpop.f32.mrf.mxu0
      %v645 = vadd.f32 %v441, %v644
      %v646 = vpop.f32.mrf.mxu0
      %v647 = vpop.f32.mrf.mxu0
      %v648 = vadd.f32 %v441, %v647
      %v649 = vpop.f32.mrf.mxu0
      %650 = vmatprep.mubr.bf16.mxu0 0
      %651 = vmatmul.mubr.bf16.gmra.mxu0 %v496
      %v652 = vpop.f32.mrf.mxu0
      %v653 = vadd.f32 %v441, %v652
      %v654 = vpop.f32.mrf.mxu0
      %v655 = vpop.f32.mrf.mxu0
      %v656 = vadd.f32 %v441, %v655
      %v657 = vpop.f32.mrf.mxu0
      %658 = vdwg.mxu0
      %v659 = vld [vmem:[%s302] sm:$0xff]
      %v660 = vld [vmem:[%s302 + $0x8] sm:$0xff]
      %v661 = vld [vmem:[%s302 + $0x10] sm:$0xff]
      %v662 = vld [vmem:[%s302 + $0x18] sm:$0xff]
      %v663 = vld [vmem:[%s302 + $0x20] sm:$0xff]
      %v664 = vld [vmem:[%s302 + $0x28] sm:$0xff]
      %v665 = vld [vmem:[%s302 + $0x30] sm:$0xff]
      %v666 = vld [vmem:[%s302 + $0x38] sm:$0xff]
      %v667 = vld [vmem:[%s302 + $0x40] sm:$0xff]
      %v668 = vld [vmem:[%s302 + $0x48] sm:$0xff]
      %v669 = vld [vmem:[%s302 + $0x50] sm:$0xff]
      %v670 = vld [vmem:[%s302 + $0x58] sm:$0xff]
      %v671 = vld [vmem:[%s302 + $0x60] sm:$0xff]
      %v672 = vld [vmem:[%s302 + $0x68] sm:$0xff]
      %v673 = vld [vmem:[%s302 + $0x70] sm:$0xff]
      %v674 = vld [vmem:[%s302 + $0x78] sm:$0xff]
      %v675 = vld [vmem:[%s302 + $0x80] sm:$0xff]
      %v676 = vld [vmem:[%s302 + $0x88] sm:$0xff]
      %v677 = vld [vmem:[%s302 + $0x90] sm:$0xff]
      %v678 = vld [vmem:[%s302 + $0x98] sm:$0xff]
      %v679 = vld [vmem:[%s302 + $0xa0] sm:$0xff]
      %v680 = vld [vmem:[%s302 + $0xa8] sm:$0xff]
      %v681 = vld [vmem:[%s302 + $0xb0] sm:$0xff]
      %v682 = vld [vmem:[%s302 + $0xb8] sm:$0xff]
      %v683 = vld [vmem:[%s302 + $0xc0] sm:$0xff]
      %v684 = vld [vmem:[%s302 + $0xc8] sm:$0xff]
      %v685 = vld [vmem:[%s302 + $0xd0] sm:$0xff]
      %v686 = vld [vmem:[%s302 + $0xd8] sm:$0xff]
      %v687 = vld [vmem:[%s302 + $0xe0] sm:$0xff]
      %v688 = vld [vmem:[%s302 + $0xe8] sm:$0xff]
      %v689 = vld [vmem:[%s302 + $0xf0] sm:$0xff]
      %v690 = vld [vmem:[%s302 + $0xf8] sm:$0xff]
      %v691 = vadd.f32 %v533, %v659
      %v692 = vadd.f32 %v536, %v660
      %v693 = vadd.f32 %v541, %v661
      %v694 = vadd.f32 %v544, %v662
      %v695 = vadd.f32 %v549, %v663
      %v696 = vadd.f32 %v552, %v664
      %v697 = vadd.f32 %v557, %v665
      %v698 = vadd.f32 %v560, %v666
      %v699 = vadd.f32 %v565, %v667
      %v700 = vadd.f32 %v568, %v668
      %v701 = vadd.f32 %v573, %v669
      %v702 = vadd.f32 %v576, %v670
      %v703 = vadd.f32 %v581, %v671
      %v704 = vadd.f32 %v584, %v672
      %v705 = vadd.f32 %v589, %v673
      %v706 = vadd.f32 %v592, %v674
      %v707 = vadd.f32 %v597, %v675
      %v708 = vadd.f32 %v600, %v676
      %v709 = vadd.f32 %v605, %v677
      %v710 = vadd.f32 %v608, %v678
      %v711 = vadd.f32 %v613, %v679
      %v712 = vadd.f32 %v616, %v680
      %v713 = vadd.f32 %v621, %v681
      %v714 = vadd.f32 %v624, %v682
      %v715 = vadd.f32 %v629, %v683
      %v716 = vadd.f32 %v632, %v684
      %v717 = vadd.f32 %v637, %v685
      %v718 = vadd.f32 %v640, %v686
      %v719 = vadd.f32 %v645, %v687
      %v720 = vadd.f32 %v648, %v688
      %v721 = vadd.f32 %v653, %v689
      %v722 = vadd.f32 %v656, %v690
      %vm723 = vcmask 64512
      %724 = vst.msk [vmem:[%s312] sm:$0xff] %vm723, %v691
      %725 = vst.msk [vmem:[%s312 + $0x8] sm:$0xff] %vm723, %v692
      %726 = vst.msk [vmem:[%s312 + $0x10] sm:$0xff] %vm723, %v693
      %727 = vst.msk [vmem:[%s312 + $0x18] sm:$0xff] %vm723, %v694
      %728 = vst.msk [vmem:[%s312 + $0x20] sm:$0xff] %vm723, %v695
      %729 = vst.msk [vmem:[%s312 + $0x28] sm:$0xff] %vm723, %v696
      %730 = vst.msk [vmem:[%s312 + $0x30] sm:$0xff] %vm723, %v697
      %731 = vst.msk [vmem:[%s312 + $0x38] sm:$0xff] %vm723, %v698
      %732 = vst.msk [vmem:[%s312 + $0x40] sm:$0xff] %vm723, %v699
      %733 = vst.msk [vmem:[%s312 + $0x48] sm:$0xff] %vm723, %v700
      %734 = vst.msk [vmem:[%s312 + $0x50] sm:$0xff] %vm723, %v701
      %735 = vst.msk [vmem:[%s312 + $0x58] sm:$0xff] %vm723, %v702
      %736 = vst.msk [vmem:[%s312 + $0x60] sm:$0xff] %vm723, %v703
      %737 = vst.msk [vmem:[%s312 + $0x68] sm:$0xff] %vm723, %v704
      %738 = vst.msk [vmem:[%s312 + $0x70] sm:$0xff] %vm723, %v705
      %739 = vst.msk [vmem:[%s312 + $0x78] sm:$0xff] %vm723, %v706
      %740 = vst.msk [vmem:[%s312 + $0x80] sm:$0xff] %vm723, %v707
      %741 = vst.msk [vmem:[%s312 + $0x88] sm:$0xff] %vm723, %v708
      %742 = vst.msk [vmem:[%s312 + $0x90] sm:$0xff] %vm723, %v709
      %743 = vst.msk [vmem:[%s312 + $0x98] sm:$0xff] %vm723, %v710
      %744 = vst.msk [vmem:[%s312 + $0xa0] sm:$0xff] %vm723, %v711
      %745 = vst.msk [vmem:[%s312 + $0xa8] sm:$0xff] %vm723, %v712
      %746 = vst.msk [vmem:[%s312 + $0xb0] sm:$0xff] %vm723, %v713
      %747 = vst.msk [vmem:[%s312 + $0xb8] sm:$0xff] %vm723, %v714
      %748 = vst.msk [vmem:[%s312 + $0xc0] sm:$0xff] %vm723, %v715
      %749 = vst.msk [vmem:[%s312 + $0xc8] sm:$0xff] %vm723, %v716
      %750 = vst.msk [vmem:[%s312 + $0xd0] sm:$0xff] %vm723, %v717
      %751 = vst.msk [vmem:[%s312 + $0xd8] sm:$0xff] %vm723, %v718
      %752 = vst.msk [vmem:[%s312 + $0xe0] sm:$0xff] %vm723, %v719
      %753 = vst.msk [vmem:[%s312 + $0xe8] sm:$0xff] %vm723, %v720
      %754 = vst.msk [vmem:[%s312 + $0xf0] sm:$0xff] %vm723, %v721
      %755 = vst.msk [vmem:[%s312 + $0xf8] sm:$0xff] %vm723, %v722
      %s756 = smul.u32 32, %s21
      %p757 = scmp.lt.s32.totalorder %s20, 1
      %s758 = scalar_select %p757, %s20, 1
      %p759 = scmp.lt.s32.totalorder %s756, 31
      %s760 = scalar_select %p759, %s756, 31
      %s761 = smul.addr %s758, 32
      %s762 = sadd.s32 %s760, %s761
      %s763 = smul.addr %s762, 8
      %s764 = scalar_lea.vmem %s5, %s763
      // Predicated region
      $region41: #{mobilenetv3_unit_forward.3} parent=39 // pred_check
        %p765 = pneg %p172
      $region42: #{mobilenetv3_unit_forward.3} parent=39 // pred_check_branch
        %767 = sbr.rel (%p765) target = $region44
      $region43: #{mobilenetv3_unit_forward.3} parent=39 // pred_region
        %s768 = smul.u32 32, %s21
      $region44: #{mobilenetv3_unit_forward.3} parent=39 // pred_fallthru
        _
    $region40: #{mobilenetv3_unit_forward.3} parent=5 // pred_fallthru
      _
    %p769 = scmp.le.s32.totalorder 2, %s11
    // Predicated region
    $region45: #{mobilenetv3_unit_forward.3} parent=5 // pred_check
      %p770 = pneg %p769
    $region46: #{mobilenetv3_unit_forward.3} parent=5 // pred_check_branch
      %772 = sbr.rel (%p770) target = $region48
    $region47: #{mobilenetv3_unit_forward.3} parent=5 // pred_region
      %s773 = ssub.s32 %s11, 2
      // Predicated region
      $region49: #{mobilenetv3_unit_forward.3} parent=47 // pred_check
        %p774 = pneg %p178
      $region50: #{mobilenetv3_unit_forward.3} parent=47 // pred_check_branch
        %776 = sbr.rel (%p774) target = $region52
      $region51: #{mobilenetv3_unit_forward.3} parent=47 // pred_region
        %s777 = smul.u32 32, %s23
        %p778 = scmp.lt.s32.totalorder %s22, 1
        %s779 = scalar_select %p778, %s22, 1
        %p780 = scmp.lt.s32.totalorder %s777, 31
        %s781 = scalar_select %p780, %s777, 31
        %s782 = smul.addr %s779, 32
        %s783 = sadd.s32 %s781, %s782
        %s784 = smul.addr %s783, 8
        %s785 = scalar_lea.vmem %s5, %s784
      $region52: #{mobilenetv3_unit_forward.3} parent=47 // pred_fallthru
        _
    $region48: #{mobilenetv3_unit_forward.3} parent=5 // pred_fallthru
      _
  $region6: #{mobilenetv3_unit_forward.3} parent=0 // loop_footer
    %s15 = sadd.s32 1, %s11
  $region7: #{mobilenetv3_unit_forward.3} parent=0 // loop_footer_branch
    %10 = sbr.rel target = $region3
  $region8: #{mobilenetv3_unit_forward.3} parent=0 // loop_exit
    _

// kernel: mobilenetv3_unit_forward.2
$region0: #{mobilenetv3_unit_forward.2}
  #allocation0 [shape = 'u32[]', space=smem, size = 0x4, offset = 0x4, fixed_abs, tag = 'smem constant byte address 0x4 - core index']
  #allocation1 [shape = 'u32[144,128]{1,0:T(1,128)}', space=vmem, size = 0x12000, scoped, tag = 'internal scratch']
  #allocation2 [shape = 'f32[304,16]{1,0:T(8,128)}', space=vmem, size = 0x26000, scoped, tag = 'scratch operand']
  %s0 = inlined_call_operand.vmem [shape: f32[2,256,8], index: 0, kind: input, shape index: {}]
  %s1 = inlined_call_operand.vmem [shape: bf16[8,16], index: 1, kind: input, shape index: {}]
  %s2 = inlined_call_operand.vmem [shape: f32[1,16], index: 2, kind: input, shape index: {}]
  %s3 = inlined_call_operand.vmem [shape: f32[3,3,16], index: 3, kind: input, shape index: {}]
  %s4 = inlined_call_operand.vmem [shape: f32[1,16], index: 4, kind: input, shape index: {}]
  %s5 = inlined_call_operand.vmem [shape: bf16[2,256,16], index: 5, kind: output, shape index: {0}]
  %s6 = inlined_call_operand.vmem [shape: f32[2,1,16], index: 6, kind: output, shape index: {1}]
  %7 = xla_tuple %s5, %s6
  %s8 = sld [smem:[#allocation0]]
  $region61: #{mobilenetv3_unit_forward.2} parent=0
    _
  %s10 = ssub.s32 1, %s8
  %s11 = scalar_select 0, %s10, %s8
  loop: start=0, step=1, limit=4
  $region2: #{mobilenetv3_unit_forward.2} parent=0 // loop_pre_header
    _
  $region3: #{mobilenetv3_unit_forward.2} parent=0 // loop_header
    %s13 = sphi 0, %s17
    %p14 = scmp.ge.s32.totalorder %s13, 4
    %s23 = sphi 0, %s25
    %s26 = sphi 0, %s23
    %s27 = sphi 0, %s26
    %s43 = sphi 0, %s27
    %s47 = sphi 0, %s47
    %s49 = sphi 0, %s47
    %s50 = sphi 0, %s49
    %s64 = sphi 0, %s50
    %s68 = sphi 0, %s68
    %s70 = sphi 0, %s68
    %s71 = sphi 0, %s70
    %s85 = sphi 0, %s71
    %s89 = sphi 0, %s89
    %s91 = sphi 0, %s89
    %s92 = sphi 0, %s91
    %s106 = sphi 0, %s92
    %s110 = sphi 0, %s110
    %s112 = sphi 0, %s110
    %s113 = sphi 0, %s112
    %s127 = sphi 0, %s113
    %s133 = sphi 0, %s135
    %s136 = sphi 0, %s133
    %s137 = sphi 0, %s136
    %s153 = sphi 0, %s137
    %s159 = sphi 0, %s161
    %s162 = sphi 0, %s159
    %s163 = sphi 0, %s162
    %s179 = sphi 0, %s163
  $region4: #{mobilenetv3_unit_forward.2} parent=0 // loop_header_branch
    %16 = sbr.rel (%p14) target = $region8
  $region5: #{mobilenetv3_unit_forward.2} parent=0 // loop_body
    %s18 = ssub.s32 %s13, 1
    %s19 = ssub.s32 %s13, 2
    %s20 = sadd.s32 %s13, 1
    %s21 = ssub.s32 %s13, %s20
    %p22 = scmp.eq.s32.totalorder %s21, 0
    %s24 = sadd.s32 %s23, 1
    %s25 = scalar_select %p22, %s23, %s24
    %p28 = pneg %p22
    %p29 = scmp.eq.s32.totalorder %s13, 1
    %p30 = por %p28, %p29
    %p31 = scmp.ne.s32.totalorder %s23, %s26
    %p32 = scmp.eq.s32.totalorder %s13, 0
    %p33 = por %p31, %p32
    %p34 = scmp.ne.s32.totalorder %s23, %s26
    %p35 = scmp.eq.s32.totalorder %s18, 1
    %p36 = por %p34, %p35
    %p37 = scmp.ne.s32.totalorder %s26, %s27
    %p38 = scmp.eq.s32.totalorder %s18, 0
    %p39 = por %p37, %p38
    %p40 = scmp.ne.s32.totalorder %s26, %s27
    %p41 = scmp.eq.s32.totalorder %s19, 1
    %p42 = por %p40, %p41
    %p44 = scmp.ne.s32.totalorder %s27, %s43
    %p45 = scmp.eq.s32.totalorder %s19, 0
    %p46 = por %p44, %p45
    %s48 = sadd.s32 %s47, 1
    %p51 = scmp.eq.s32.totalorder %s13, 1
    %p52 = scmp.ne.s32.totalorder %s47, %s49
    %p53 = scmp.eq.s32.totalorder %s13, 0
    %p54 = por %p52, %p53
    %p55 = scmp.ne.s32.totalorder %s47, %s49
    %p56 = scmp.eq.s32.totalorder %s18, 1
    %p57 = por %p55, %p56
    %p58 = scmp.ne.s32.totalorder %s49, %s50
    %p59 = scmp.eq.s32.totalorder %s18, 0
    %p60 = por %p58, %p59
    %p61 = scmp.ne.s32.totalorder %s49, %s50
    %p62 = scmp.eq.s32.totalorder %s19, 1
    %p63 = por %p61, %p62
    %p65 = scmp.ne.s32.totalorder %s50, %s64
    %p66 = scmp.eq.s32.totalorder %s19, 0
    %p67 = por %p65, %p66
    %s69 = sadd.s32 %s68, 1
    %p72 = scmp.eq.s32.totalorder %s13, 1
    %p73 = scmp.ne.s32.totalorder %s68, %s70
    %p74 = scmp.eq.s32.totalorder %s13, 0
    %p75 = por %p73, %p74
    %p76 = scmp.ne.s32.totalorder %s68, %s70
    %p77 = scmp.eq.s32.totalorder %s18, 1
    %p78 = por %p76, %p77
    %p79 = scmp.ne.s32.totalorder %s70, %s71
    %p80 = scmp.eq.s32.totalorder %s18, 0
    %p81 = por %p79, %p80
    %p82 = scmp.ne.s32.totalorder %s70, %s71
    %p83 = scmp.eq.s32.totalorder %s19, 1
    %p84 = por %p82, %p83
    %p86 = scmp.ne.s32.totalorder %s71, %s85
    %p87 = scmp.eq.s32.totalorder %s19, 0
    %p88 = por %p86, %p87
    %s90 = sadd.s32 %s89, 1
    %p93 = scmp.eq.s32.totalorder %s13, 1
    %p94 = scmp.ne.s32.totalorder %s89, %s91
    %p95 = scmp.eq.s32.totalorder %s13, 0
    %p96 = por %p94, %p95
    %p97 = scmp.ne.s32.totalorder %s89, %s91
    %p98 = scmp.eq.s32.totalorder %s18, 1
    %p99 = por %p97, %p98
    %p100 = scmp.ne.s32.totalorder %s91, %s92
    %p101 = scmp.eq.s32.totalorder %s18, 0
    %p102 = por %p100, %p101
    %p103 = scmp.ne.s32.totalorder %s91, %s92
    %p104 = scmp.eq.s32.totalorder %s19, 1
    %p105 = por %p103, %p104
    %p107 = scmp.ne.s32.totalorder %s92, %s106
    %p108 = scmp.eq.s32.totalorder %s19, 0
    %p109 = por %p107, %p108
    %s111 = sadd.s32 %s110, 1
    %p114 = scmp.eq.s32.totalorder %s13, 1
    %p115 = scmp.ne.s32.totalorder %s110, %s112
    %p116 = scmp.eq.s32.totalorder %s13, 0
    %p117 = por %p115, %p116
    %p118 = scmp.ne.s32.totalorder %s110, %s112
    %p119 = scmp.eq.s32.totalorder %s18, 1
    %p120 = por %p118, %p119
    %p121 = scmp.ne.s32.totalorder %s112, %s113
    %p122 = scmp.eq.s32.totalorder %s18, 0
    %p123 = por %p121, %p122
    %p124 = scmp.ne.s32.totalorder %s112, %s113
    %p125 = scmp.eq.s32.totalorder %s19, 1
    %p126 = por %p124, %p125
    %p128 = scmp.ne.s32.totalorder %s113, %s127
    %p129 = scmp.eq.s32.totalorder %s19, 0
    %p130 = por %p128, %p129
    %s131 = ssub.s32 %s13, %s20
    %p132 = scmp.eq.s32.totalorder %s131, 0
    %s134 = sadd.s32 %s133, 1
    %s135 = scalar_select %p132, %s133, %s134
    %p138 = pneg %p132
    %p139 = scmp.eq.s32.totalorder %s13, 1
    %p140 = por %p138, %p139
    %p141 = scmp.ne.s32.totalorder %s133, %s136
    %p142 = scmp.eq.s32.totalorder %s13, 0
    %p143 = por %p141, %p142
    %p144 = scmp.ne.s32.totalorder %s133, %s136
    %p145 = scmp.eq.s32.totalorder %s18, 1
    %p146 = por %p144, %p145
    %p147 = scmp.ne.s32.totalorder %s136, %s137
    %p148 = scmp.eq.s32.totalorder %s18, 0
    %p149 = por %p147, %p148
    %p150 = scmp.ne.s32.totalorder %s136, %s137
    %p151 = scmp.eq.s32.totalorder %s19, 1
    %p152 = por %p150, %p151
    %p154 = scmp.ne.s32.totalorder %s137, %s153
    %p155 = scmp.eq.s32.totalorder %s19, 0
    %p156 = por %p154, %p155
    %s157 = ssub.s32 %s13, %s20
    %p158 = scmp.eq.s32.totalorder %s157, 0
    %s160 = sadd.s32 %s159, 1
    %s161 = scalar_select %p158, %s159, %s160
    %p164 = pneg %p158
    %p165 = scmp.eq.s32.totalorder %s13, 1
    %p166 = por %p164, %p165
    %p167 = scmp.ne.s32.totalorder %s159, %s162
    %p168 = scmp.eq.s32.totalorder %s13, 0
    %p169 = por %p167, %p168
    %p170 = scmp.ne.s32.totalorder %s159, %s162
    %p171 = scmp.eq.s32.totalorder %s18, 1
    %p172 = por %p170, %p171
    %p173 = scmp.ne.s32.totalorder %s162, %s163
    %p174 = scmp.eq.s32.totalorder %s18, 0
    %p175 = por %p173, %p174
    %p176 = scmp.ne.s32.totalorder %s162, %s163
    %p177 = scmp.eq.s32.totalorder %s19, 1
    %p178 = por %p176, %p177
    %p180 = scmp.ne.s32.totalorder %s163, %s179
    %p181 = scmp.eq.s32.totalorder %s19, 0
    %p182 = por %p180, %p181
    %p183 = scmp.le.s32.totalorder 1, %s13
    %p184 = scmp.lt.s32.totalorder %s13, 3
    %p185 = pnand %p183, %p184
    %p186 = pneg %p185
    // Predicated region
    $region9: #{mobilenetv3_unit_forward.2} parent=5 // pred_check
      _
    $region10: #{mobilenetv3_unit_forward.2} parent=5 // pred_check_branch
      %188 = sbr.rel (%p185) target = $region12
    $region11: #{mobilenetv3_unit_forward.2} parent=5 // pred_region
      %s189 = ssub.s32 %s13, 1
      // Predicated region
      $region13: #{mobilenetv3_unit_forward.2} parent=11 // pred_check
        %p190 = pneg %p60
      $region14: #{mobilenetv3_unit_forward.2} parent=11 // pred_check_branch
        %192 = sbr.rel (%p190) target = $region16
      $region15: #{mobilenetv3_unit_forward.2} parent=11 // pred_region
        _
      $region16: #{mobilenetv3_unit_forward.2} parent=11 // pred_fallthru
        _
      // Predicated region
      $region17: #{mobilenetv3_unit_forward.2} parent=11 // pred_check
        %p193 = pneg %p81
      $region18: #{mobilenetv3_unit_forward.2} parent=11 // pred_check_branch
        %195 = sbr.rel (%p193) target = $region20
      $region19: #{mobilenetv3_unit_forward.2} parent=11 // pred_region
        _
      $region20: #{mobilenetv3_unit_forward.2} parent=11 // pred_fallthru
        _
      // Predicated region
      $region21: #{mobilenetv3_unit_forward.2} parent=11 // pred_check
        %p196 = pneg %p102
      $region22: #{mobilenetv3_unit_forward.2} parent=11 // pred_check_branch
        %198 = sbr.rel (%p196) target = $region24
      $region23: #{mobilenetv3_unit_forward.2} parent=11 // pred_region
        _
      $region24: #{mobilenetv3_unit_forward.2} parent=11 // pred_fallthru
        _
      // Predicated region
      $region25: #{mobilenetv3_unit_forward.2} parent=11 // pred_check
        %p199 = pneg %p123
      $region26: #{mobilenetv3_unit_forward.2} parent=11 // pred_check_branch
        %201 = sbr.rel (%p199) target = $region28
      $region27: #{mobilenetv3_unit_forward.2} parent=11 // pred_region
        _
      $region28: #{mobilenetv3_unit_forward.2} parent=11 // pred_fallthru
        _
    $region12: #{mobilenetv3_unit_forward.2} parent=5 // pred_fallthru
      _
    %p202 = scmp.lt.s32.totalorder %s13, 2
    // Predicated region
    $region29: #{mobilenetv3_unit_forward.2} parent=5 // pred_check
      %p203 = pneg %p202
    $region30: #{mobilenetv3_unit_forward.2} parent=5 // pred_check_branch
      %205 = sbr.rel (%p203) target = $region32
    $region31: #{mobilenetv3_unit_forward.2} parent=5 // pred_region
      // Predicated region
      $region33: #{mobilenetv3_unit_forward.2} parent=31 // pred_check
        %p206 = pneg %p33
      $region34: #{mobilenetv3_unit_forward.2} parent=31 // pred_check_branch
        %208 = sbr.rel (%p206) target = $region36
      $region35: #{mobilenetv3_unit_forward.2} parent=31 // pred_region
        %p209 = scmp.lt.s32.totalorder %s13, 1
        %s210 = scalar_select %p209, %s13, 1
        %s211 = smul.addr %s210, 32
        %s212 = smul.addr %s211, 8
        %s213 = scalar_lea.vmem %s0, %s212
      $region36: #{mobilenetv3_unit_forward.2} parent=31 // pred_fallthru
        _
    $region32: #{mobilenetv3_unit_forward.2} parent=5 // pred_fallthru
      _
    %p214 = scmp.le.s32.totalorder 1, %s13
    %p215 = scmp.lt.s32.totalorder %s13, 3
    %p216 = pnand %p214, %p215
    %p217 = pneg %p216
    // Predicated region
    $region37: #{mobilenetv3_unit_forward.2} parent=5 // pred_check
      _
    $region38: #{mobilenetv3_unit_forward.2} parent=5 // pred_check_branch
      %219 = sbr.rel (%p216) target = $region40
    $region39: #{mobilenetv3_unit_forward.2} parent=5 // pred_region
      %s220 = ssub.s32 %s13, 1
      %p221 = scmp.lt.s32.totalorder %s18, 1
      %s222 = scalar_select %p221, %s18, 1
      %s223 = smul.addr %s222, 32
      %s224 = smul.addr %s223, 8
      %s225 = scalar_lea.vmem %s0, %s224
      %p226 = pneg %p39
      %p227 = pneg %p36
      %p228 = pneg %p60
      %p229 = pneg %p57
      %p230 = pneg %p81
      %p231 = pneg %p78
      %p232 = pneg %p102
      %p233 = pneg %p99
      %p234 = pneg %p123
      %p235 = pneg %p120
      %p236 = pneg %p149
      %p237 = pneg %p146
      %p238 = scmp.lt.s32.totalorder %s18, 1
      %s239 = scalar_select %p238, %s18, 1
      %s240 = smul.addr %s239, 32
      %s241 = smul.addr %s240, 4
      %s242 = scalar_lea.vmem %s5, %s241
      %p243 = pneg %p175
      %p244 = pneg %p172
      %p245 = scmp.lt.s32.totalorder %s18, 1
      %s246 = scalar_select %p245, %s18, 1
      %s247 = scalar_lea.vmem %s6, %s246
      %p248 = scmp.lt.s32.totalorder %s18, 1
      %s249 = scalar_select %p248, %s18, 1
      %s250 = smul.addr %s249, 32
      %s251 = smul.addr %s250, 8
      %s252 = scalar_lea.vmem %s0, %s251
      %p253 = scmp.lt.s32.totalorder %s18, 1
      %s254 = scalar_select %p253, %s18, 1
      %s255 = smul.addr %s254, 32
      %s256 = smul.addr %s255, 4
      %s257 = scalar_lea.vmem %s5, %s256
      %p258 = scmp.lt.s32.totalorder %s18, 1
      %s259 = scalar_select %p258, %s18, 1
      %s260 = scalar_lea.vmem %s6, %s259
      %v262 = vld [vmem:[%s252] sm:$0xff]
      %v263 = vld [vmem:[%s252 + $0x8] sm:$0xff]
      %v264 = vld [vmem:[%s252 + $0x10] sm:$0xff]
      %v265 = vld [vmem:[%s252 + $0x18] sm:$0xff]
      %v266 = vld [vmem:[%s252 + $0x20] sm:$0xff]
      %v267 = vld [vmem:[%s252 + $0x28] sm:$0xff]
      %v268 = vld [vmem:[%s252 + $0x30] sm:$0xff]
      %v269 = vld [vmem:[%s252 + $0x38] sm:$0xff]
      %v270 = vld [vmem:[%s252 + $0x40] sm:$0xff]
      %v271 = vld [vmem:[%s252 + $0x48] sm:$0xff]
      %v272 = vld [vmem:[%s252 + $0x50] sm:$0xff]
      %v273 = vld [vmem:[%s252 + $0x58] sm:$0xff]
      %v274 = vld [vmem:[%s252 + $0x60] sm:$0xff]
      %v275 = vld [vmem:[%s252 + $0x68] sm:$0xff]
      %v276 = vld [vmem:[%s252 + $0x70] sm:$0xff]
      %v277 = vld [vmem:[%s252 + $0x78] sm:$0xff]
      %v278 = vld [vmem:[%s252 + $0x80] sm:$0xff]
      %v279 = vld [vmem:[%s252 + $0x88] sm:$0xff]
      %v280 = vld [vmem:[%s252 + $0x90] sm:$0xff]
      %v281 = vld [vmem:[%s252 + $0x98] sm:$0xff]
      %v282 = vld [vmem:[%s252 + $0xa0] sm:$0xff]
      %v283 = vld [vmem:[%s252 + $0xa8] sm:$0xff]
      %v284 = vld [vmem:[%s252 + $0xb0] sm:$0xff]
      %v285 = vld [vmem:[%s252 + $0xb8] sm:$0xff]
      %v286 = vld [vmem:[%s252 + $0xc0] sm:$0xff]
      %v287 = vld [vmem:[%s252 + $0xc8] sm:$0xff]
      %v288 = vld [vmem:[%s252 + $0xd0] sm:$0xff]
      %v289 = vld [vmem:[%s252 + $0xd8] sm:$0xff]
      %v290 = vld [vmem:[%s252 + $0xe0] sm:$0xff]
      %v291 = vld [vmem:[%s252 + $0xe8] sm:$0xff]
      %v292 = vld [vmem:[%s252 + $0xf0] sm:$0xff]
      %v293 = vld [vmem:[%s252 + $0xf8] sm:$0xff]
      %v294 = vpack.c.bf16 %v263, %v262
      %v295 = vpack.c.bf16 %v265, %v264
      %v296 = vpack.c.bf16 %v267, %v266
      %v297 = vpack.c.bf16 %v269, %v268
      %v298 = vpack.c.bf16 %v271, %v270
      %v299 = vpack.c.bf16 %v273, %v272
      %v300 = vpack.c.bf16 %v275, %v274
      %v301 = vpack.c.bf16 %v277, %v276
      %v302 = vpack.c.bf16 %v279, %v278
      %v303 = vpack.c.bf16 %v281, %v280
      %v304 = vpack.c.bf16 %v283, %v282
      %v305 = vpack.c.bf16 %v285, %v284
      %v306 = vpack.c.bf16 %v287, %v286
      %v307 = vpack.c.bf16 %v289, %v288
      %v308 = vpack.c.bf16 %v291, %v290
      %v309 = vpack.c.bf16 %v293, %v292
      %v310 = vld [vmem:[%s1] sm:$0xf]
      %v311 = vld [vmem:[%s2] sm:$0x1]
      %v313 = vlaneseq
      %v314 = vshrl.u32 %v313, 7
      %v315 = vsub.s32 0, %v314
      %v316 = vrot.slane %v311, %v315
      %vm318 = vcmask 64512
      %v320 = vsel %vm318, %v294, 0
      %v323 = vsel %vm318, %v295, 0
      %v326 = vsel %vm318, %v296, 0
      %v329 = vsel %vm318, %v297, 0
      %v332 = vsel %vm318, %v298, 0
      %v335 = vsel %vm318, %v299, 0
      %v338 = vsel %vm318, %v300, 0
      %v341 = vsel %vm318, %v301, 0
      %v344 = vsel %vm318, %v302, 0
      %v347 = vsel %vm318, %v303, 0
      %v350 = vsel %vm318, %v304, 0
      %v353 = vsel %vm318, %v305, 0
      %v356 = vsel %vm318, %v306, 0
      %v359 = vsel %vm318, %v307, 0
      %v362 = vsel %vm318, %v308, 0
      %v365 = vsel %vm318, %v309, 0
      %vm367 = vcmask 1043456
      %v369 = vsel %vm367, %v310, 0
      %371 = vmatprep.subr.bf16.mxu0 0
      %372 = vmatpush1.bf16.msra.mxu0 0
      %373 = vmatprep.subr.bf16.mxu0 0
      %374 = vmatpush1.bf16.msra.mxu0 0
      %375 = vmatprep.subr.bf16.mxu0 0
      %376 = vmatpush1.bf16.msra.mxu0 0
      %377 = vmatprep.subr.bf16.mxu0 0
      %378 = vmatpush1.bf16.msra.mxu0 0
      %379 = vmatprep.subr.bf16.mxu0 0
      %380 = vmatpush1.bf16.msra.mxu0 0
      %381 = vmatprep.subr.bf16.mxu0 0
      %382 = vmatpush1.bf16.msra.mxu0 0
      %383 = vmatprep.subr.bf16.mxu0 0
      %384 = vmatpush1.bf16.msra.mxu0 0
      %385 = vmatprep.subr.bf16.mxu0 0
      %386 = vmatpush1.bf16.msra.mxu0 %v369
      %387 = vmatprep.subr.bf16.mxu0 0
      %388 = vmatpush2.bf16.msra.mxu0 0
      %389 = vmatprep.subr.bf16.mxu0 0
      %390 = vmatpush2.bf16.msra.mxu0 0
      %391 = vmatprep.subr.bf16.mxu0 0
      %392 = vmatpush2.bf16.msra.mxu0 0
      %393 = vmatprep.subr.bf16.mxu0 0
      %394 = vmatpush2.bf16.msra.mxu0 0
      %395 = vmatprep.subr.bf16.mxu0 0
      %396 = vmatpush2.bf16.msra.mxu0 0
      %397 = vmatprep.subr.bf16.mxu0 0
      %398 = vmatpush2.bf16.msra.mxu0 0
      %399 = vmatprep.subr.bf16.mxu0 0
      %400 = vmatpush2.bf16.msra.mxu0 0
      %401 = vmatprep.subr.bf16.mxu0 0
      %402 = vmatpush2.bf16.msra.mxu0 0
      %403 = vmatprep.mubr.bf16.mxu0 0
      %404 = vmatmul.mubr.bf16.gmra.mxu0 %v320
      %v405 = vpop.f32.mrf.mxu0
      %v406 = vadd.f32 %v316, %v405
      %v407 = vpop.f32.mrf.mxu0
      %v408 = vpop.f32.mrf.mxu0
      %v409 = vadd.f32 %v316, %v408
      %v410 = vpop.f32.mrf.mxu0
      %411 = vmatprep.mubr.bf16.mxu0 0
      %412 = vmatmul.mubr.bf16.gmra.mxu0 %v323
      %v413 = vpop.f32.mrf.mxu0
      %v414 = vadd.f32 %v316, %v413
      %v415 = vpop.f32.mrf.mxu0
      %v416 = vpop.f32.mrf.mxu0
      %v417 = vadd.f32 %v316, %v416
      %v418 = vpop.f32.mrf.mxu0
      %419 = vmatprep.mubr.bf16.mxu0 0
      %420 = vmatmul.mubr.bf16.gmra.mxu0 %v326
      %v421 = vpop.f32.mrf.mxu0
      %v422 = vadd.f32 %v316, %v421
      %v423 = vpop.f32.mrf.mxu0
      %v424 = vpop.f32.mrf.mxu0
      %v425 = vadd.f32 %v316, %v424
      %v426 = vpop.f32.mrf.mxu0
      %427 = vmatprep.mubr.bf16.mxu0 0
      %428 = vmatmul.mubr.bf16.gmra.mxu0 %v329
      %v429 = vpop.f32.mrf.mxu0
      %v430 = vadd.f32 %v316, %v429
      %v431 = vpop.f32.mrf.mxu0
      %v432 = vpop.f32.mrf.mxu0
      %v433 = vadd.f32 %v316, %v432
      %v434 = vpop.f32.mrf.mxu0
      %435 = vmatprep.mubr.bf16.mxu0 0
      %436 = vmatmul.mubr.bf16.gmra.mxu0 %v332
      %v437 = vpop.f32.mrf.mxu0
      %v438 = vadd.f32 %v316, %v437
      %v439 = vpop.f32.mrf.mxu0
      %v440 = vpop.f32.mrf.mxu0
      %v441 = vadd.f32 %v316, %v440
      %v442 = vpop.f32.mrf.mxu0
      %443 = vmatprep.mubr.bf16.mxu0 0
      %444 = vmatmul.mubr.bf16.gmra.mxu0 %v335
      %v445 = vpop.f32.mrf.mxu0
      %v446 = vadd.f32 %v316, %v445
      %v447 = vpop.f32.mrf.mxu0
      %v448 = vpop.f32.mrf.mxu0
      %v449 = vadd.f32 %v316, %v448
      %v450 = vpop.f32.mrf.mxu0
      %451 = vmatprep.mubr.bf16.mxu0 0
      %452 = vmatmul.mubr.bf16.gmra.mxu0 %v338
      %v453 = vpop.f32.mrf.mxu0
      %v454 = vadd.f32 %v316, %v453
      %v455 = vpop.f32.mrf.mxu0
      %v456 = vpop.f32.mrf.mxu0
      %v457 = vadd.f32 %v316, %v456
      %v458 = vpop.f32.mrf.mxu0
      %459 = vmatprep.mubr.bf16.mxu0 0
      %460 = vmatmul.mubr.bf16.gmra.mxu0 %v341
      %v461 = vpop.f32.mrf.mxu0
      %v462 = vadd.f32 %v316, %v461
      %v463 = vpop.f32.mrf.mxu0
      %v464 = vpop.f32.mrf.mxu0
      %v465 = vadd.f32 %v316, %v464
      %v466 = vpop.f32.mrf.mxu0
      %467 = vmatprep.mubr.bf16.mxu0 0
      %468 = vmatmul.mubr.bf16.gmra.mxu0 %v344
      %v469 = vpop.f32.mrf.mxu0
      %v470 = vadd.f32 %v316, %v469
      %v471 = vpop.f32.mrf.mxu0
      %v472 = vpop.f32.mrf.mxu0
      %v473 = vadd.f32 %v316, %v472
      %v474 = vpop.f32.mrf.mxu0
      %475 = vmatprep.mubr.bf16.mxu0 0
      %476 = vmatmul.mubr.bf16.gmra.mxu0 %v347
      %v477 = vpop.f32.mrf.mxu0
      %v478 = vadd.f32 %v316, %v477
      %v479 = vpop.f32.mrf.mxu0
      %v480 = vpop.f32.mrf.mxu0
      %v481 = vadd.f32 %v316, %v480
      %v482 = vpop.f32.mrf.mxu0
      %483 = vmatprep.mubr.bf16.mxu0 0
      %484 = vmatmul.mubr.bf16.gmra.mxu0 %v350
      %v485 = vpop.f32.mrf.mxu0
      %v486 = vadd.f32 %v316, %v485
      %v487 = vpop.f32.mrf.mxu0
      %v488 = vpop.f32.mrf.mxu0
      %v489 = vadd.f32 %v316, %v488
      %v490 = vpop.f32.mrf.mxu0
      %491 = vmatprep.mubr.bf16.mxu0 0
      %492 = vmatmul.mubr.bf16.gmra.mxu0 %v353
      %v493 = vpop.f32.mrf.mxu0
      %v494 = vadd.f32 %v316, %v493
      %v495 = vpop.f32.mrf.mxu0
      %v496 = vpop.f32.mrf.mxu0
      %v497 = vadd.f32 %v316, %v496
      %v498 = vpop.f32.mrf.mxu0
      %499 = vmatprep.mubr.bf16.mxu0 0
      %500 = vmatmul.mubr.bf16.gmra.mxu0 %v356
      %v501 = vpop.f32.mrf.mxu0
      %v502 = vadd.f32 %v316, %v501
      %v503 = vpop.f32.mrf.mxu0
      %v504 = vpop.f32.mrf.mxu0
      %v505 = vadd.f32 %v316, %v504
      %v506 = vpop.f32.mrf.mxu0
      %507 = vmatprep.mubr.bf16.mxu0 0
      %508 = vmatmul.mubr.bf16.gmra.mxu0 %v359
      %v509 = vpop.f32.mrf.mxu0
      %v510 = vadd.f32 %v316, %v509
      %v511 = vpop.f32.mrf.mxu0
      %v512 = vpop.f32.mrf.mxu0
      %v513 = vadd.f32 %v316, %v512
      %v514 = vpop.f32.mrf.mxu0
      %515 = vmatprep.mubr.bf16.mxu0 0
      %516 = vmatmul.mubr.bf16.gmra.mxu0 %v362
      %v517 = vpop.f32.mrf.mxu0
      %v518 = vadd.f32 %v316, %v517
      %v519 = vpop.f32.mrf.mxu0
      %v520 = vpop.f32.mrf.mxu0
      %v521 = vadd.f32 %v316, %v520
      %v522 = vpop.f32.mrf.mxu0
      %523 = vmatprep.mubr.bf16.mxu0 0
      %524 = vmatmul.mubr.bf16.gmra.mxu0 %v365
      %v525 = vpop.f32.mrf.mxu0
      %v526 = vadd.f32 %v316, %v525
      %v527 = vpop.f32.mrf.mxu0
      %v528 = vpop.f32.mrf.mxu0
      %v529 = vadd.f32 %v316, %v528
      %v530 = vpop.f32.mrf.mxu0
      %531 = vdwg.mxu0
      %v532 = vadd.f32 %v406, 3.0
      %v533 = vadd.f32 %v409, 3.0
      %v534 = vadd.f32 %v414, 3.0
      %v535 = vadd.f32 %v417, 3.0
      %v536 = vadd.f32 %v422, 3.0
      %v537 = vadd.f32 %v425, 3.0
      %v538 = vadd.f32 %v430, 3.0
      %v539 = vadd.f32 %v433, 3.0
      %v540 = vadd.f32 %v438, 3.0
      %v541 = vadd.f32 %v441, 3.0
      %v542 = vadd.f32 %v446, 3.0
      %v543 = vadd.f32 %v449, 3.0
      %v544 = vadd.f32 %v454, 3.0
      %v545 = vadd.f32 %v457, 3.0
      %v546 = vadd.f32 %v462, 3.0
      %v547 = vadd.f32 %v465, 3.0
      %v548 = vadd.f32 %v470, 3.0
      %v549 = vadd.f32 %v473, 3.0
      %v550 = vadd.f32 %v478, 3.0
      %v551 = vadd.f32 %v481, 3.0
      %v552 = vadd.f32 %v486, 3.0
      %v553 = vadd.f32 %v489, 3.0
      %v554 = vadd.f32 %v494, 3.0
      %v555 = vadd.f32 %v497, 3.0
      %v556 = vadd.f32 %v502, 3.0
      %v557 = vadd.f32 %v505, 3.0
      %v558 = vadd.f32 %v510, 3.0
      %v559 = vadd.f32 %v513, 3.0
      %v560 = vadd.f32 %v518, 3.0
      %v561 = vadd.f32 %v521, 3.0
      %v562 = vadd.f32 %v526, 3.0
      %v563 = vadd.f32 %v529, 3.0
      %v564 = vmax.f32 %v532, 0.0
      %v565 = vmax.f32 %v533, 0.0
      %v566 = vmax.f32 %v534, 0.0
      %v567 = vmax.f32 %v535, 0.0
      %v568 = vmax.f32 %v536, 0.0
      %v569 = vmax.f32 %v537, 0.0
      %v570 = vmax.f32 %v538, 0.0
      %v571 = vmax.f32 %v539, 0.0
      %v572 = vmax.f32 %v540, 0.0
      %v573 = vmax.f32 %v541, 0.0
      %v574 = vmax.f32 %v542, 0.0
      %v575 = vmax.f32 %v543, 0.0
      %v576 = vmax.f32 %v544, 0.0
      %v577 = vmax.f32 %v545, 0.0
      %v578 = vmax.f32 %v546, 0.0
      %v579 = vmax.f32 %v547, 0.0
      %v580 = vmax.f32 %v548, 0.0
      %v581 = vmax.f32 %v549, 0.0
      %v582 = vmax.f32 %v550, 0.0
      %v583 = vmax.f32 %v551, 0.0
      %v584 = vmax.f32 %v552, 0.0
      %v585 = vmax.f32 %v553, 0.0
      %v586 = vmax.f32 %v554, 0.0
      %v587 = vmax.f32 %v555, 0.0
      %v588 = vmax.f32 %v556, 0.0
      %v589 = vmax.f32 %v557, 0.0
      %v590 = vmax.f32 %v558, 0.0
      %v591 = vmax.f32 %v559, 0.0
      %v592 = vmax.f32 %v560, 0.0
      %v593 = vmax.f32 %v561, 0.0
      %v594 = vmax.f32 %v562, 0.0
      %v595 = vmax.f32 %v563, 0.0
      %v596 = vmin.f32 %v564, 6.0
      %v597 = vmin.f32 %v565, 6.0
      %v598 = vmin.f32 %v566, 6.0
      %v599 = vmin.f32 %v567, 6.0
      %v600 = vmin.f32 %v568, 6.0
      %v601 = vmin.f32 %v569, 6.0
      %v602 = vmin.f32 %v570, 6.0
      %v603 = vmin.f32 %v571, 6.0
      %v604 = vmin.f32 %v572, 6.0
      %v605 = vmin.f32 %v573, 6.0
      %v606 = vmin.f32 %v574, 6.0
      %v607 = vmin.f32 %v575, 6.0
      %v608 = vmin.f32 %v576, 6.0
      %v609 = vmin.f32 %v577, 6.0
      %v610 = vmin.f32 %v578, 6.0
      %v611 = vmin.f32 %v579, 6.0
      %v612 = vmin.f32 %v580, 6.0
      %v613 = vmin.f32 %v581, 6.0
      %v614 = vmin.f32 %v582, 6.0
      %v615 = vmin.f32 %v583, 6.0
      %v616 = vmin.f32 %v584, 6.0
      %v617 = vmin.f32 %v585, 6.0
      %v618 = vmin.f32 %v586, 6.0
      %v619 = vmin.f32 %v587, 6.0
      %v620 = vmin.f32 %v588, 6.0
      %v621 = vmin.f32 %v589, 6.0
      %v622 = vmin.f32 %v590, 6.0
      %v623 = vmin.f32 %v591, 6.0
      %v624 = vmin.f32 %v592, 6.0
      %v625 = vmin.f32 %v593, 6.0
      %v626 = vmin.f32 %v594, 6.0
      %v627 = vmin.f32 %v595, 6.0
      %v628 = vmul.f32 %v406, %v596
      %v629 = vmul.f32 %v409, %v597
      %v630 = vmul.f32 %v414, %v598
      %v631 = vmul.f32 %v417, %v599
      %v632 = vmul.f32 %v422, %v600
      %v633 = vmul.f32 %v425, %v601
      %v634 = vmul.f32 %v430, %v602
      %v635 = vmul.f32 %v433, %v603
      %v636 = vmul.f32 %v438, %v604
      %v637 = vmul.f32 %v441, %v605
      %v638 = vmul.f32 %v446, %v606
      %v639 = vmul.f32 %v449, %v607
      %v640 = vmul.f32 %v454, %v608
      %v641 = vmul.f32 %v457, %v609
      %v642 = vmul.f32 %v462, %v610
      %v643 = vmul.f32 %v465, %v611
      %v644 = vmul.f32 %v470, %v612
      %v645 = vmul.f32 %v473, %v613
      %v646 = vmul.f32 %v478, %v614
      %v647 = vmul.f32 %v481, %v615
      %v648 = vmul.f32 %v486, %v616
      %v649 = vmul.f32 %v489, %v617
      %v650 = vmul.f32 %v494, %v618
      %v651 = vmul.f32 %v497, %v619
      %v652 = vmul.f32 %v502, %v620
      %v653 = vmul.f32 %v505, %v621
      %v654 = vmul.f32 %v510, %v622
      %v655 = vmul.f32 %v513, %v623
      %v656 = vmul.f32 %v518, %v624
      %v657 = vmul.f32 %v521, %v625
      %v658 = vmul.f32 %v526, %v626
      %v659 = vmul.f32 %v529, %v627
      %v660 = vmul.f32 %v628, 0.16666667
      %v661 = vmul.f32 %v629, 0.16666667
      %v662 = vmul.f32 %v630, 0.16666667
      %v663 = vmul.f32 %v631, 0.16666667
      %v664 = vmul.f32 %v632, 0.16666667
      %v665 = vmul.f32 %v633, 0.16666667
      %v666 = vmul.f32 %v634, 0.16666667
      %v667 = vmul.f32 %v635, 0.16666667
      %v668 = vmul.f32 %v636, 0.16666667
      %v669 = vmul.f32 %v637, 0.16666667
      %v670 = vmul.f32 %v638, 0.16666667
      %v671 = vmul.f32 %v639, 0.16666667
      %v672 = vmul.f32 %v640, 0.16666667
      %v673 = vmul.f32 %v641, 0.16666667
      %v674 = vmul.f32 %v642, 0.16666667
      %v675 = vmul.f32 %v643, 0.16666667
      %v676 = vmul.f32 %v644, 0.16666667
      %v677 = vmul.f32 %v645, 0.16666667
      %v678 = vmul.f32 %v646, 0.16666667
      %v679 = vmul.f32 %v647, 0.16666667
      %v680 = vmul.f32 %v648, 0.16666667
      %v681 = vmul.f32 %v649, 0.16666667
      %v682 = vmul.f32 %v650, 0.16666667
      %v683 = vmul.f32 %v651, 0.16666667
      %v684 = vmul.f32 %v652, 0.16666667
      %v685 = vmul.f32 %v653, 0.16666667
      %v686 = vmul.f32 %v654, 0.16666667
      %v687 = vmul.f32 %v655, 0.16666667
      %v688 = vmul.f32 %v656, 0.16666667
      %v689 = vmul.f32 %v657, 0.16666667
      %v690 = vmul.f32 %v658, 0.16666667
      %v691 = vmul.f32 %v659, 0.16666667
      %vm692 = vcmask 130048
      %693 = vst.msk [vmem:[#allocation2] sm:$0xff] %vm692, 0.0
      %694 = vst.msk [vmem:[#allocation2 + $0x8] sm:$0xff] %vm692, 0.0
      %695 = vst.msk [vmem:[#allocation2 + $0x10] sm:$0xff] %vm692, 0.0
      %696 = vst.msk [vmem:[#allocation2 + $0x18] sm:$0xff] %vm692, 0.0
      %697 = vst.msk [vmem:[#allocation2 + $0x20] sm:$0xff] %vm692, 0.0
      %698 = vst.msk [vmem:[#allocation2 + $0x28] sm:$0xff] %vm692, 0.0
      %699 = vst.msk [vmem:[#allocation2 + $0x30] sm:$0xff] %vm692, 0.0
      %700 = vst.msk [vmem:[#allocation2 + $0x38] sm:$0xff] %vm692, 0.0
      %701 = vst.msk [vmem:[#allocation2 + $0x40] sm:$0xff] %vm692, 0.0
      %702 = vst.msk [vmem:[#allocation2 + $0x48] sm:$0xff] %vm692, 0.0
      %703 = vst.msk [vmem:[#allocation2 + $0x50] sm:$0xff] %vm692, 0.0
      %704 = vst.msk [vmem:[#allocation2 + $0x58] sm:$0xff] %vm692, 0.0
      %705 = vst.msk [vmem:[#allocation2 + $0x60] sm:$0xff] %vm692, 0.0
      %706 = vst.msk [vmem:[#allocation2 + $0x68] sm:$0xff] %vm692, 0.0
      %707 = vst.msk [vmem:[#allocation2 + $0x70] sm:$0xff] %vm692, 0.0
      %708 = vst.msk [vmem:[#allocation2 + $0x78] sm:$0xff] %vm692, 0.0
      %709 = vst.msk [vmem:[#allocation2 + $0x80] sm:$0xff] %vm692, 0.0
      %710 = vst.msk [vmem:[#allocation2 + $0x88] sm:$0xff] %vm692, 0.0
      %711 = vst.msk [vmem:[#allocation2 + $0x90] sm:$0xff] %vm692, 0.0
      %712 = vst.msk [vmem:[#allocation2 + $0x98] sm:$0xff] %vm692, 0.0
      %713 = vst.msk [vmem:[#allocation2 + $0xa0] sm:$0xff] %vm692, 0.0
      %714 = vst.msk [vmem:[#allocation2 + $0xa8] sm:$0xff] %vm692, 0.0
      %715 = vst.msk [vmem:[#allocation2 + $0xb0] sm:$0xff] %vm692, 0.0
      %716 = vst.msk [vmem:[#allocation2 + $0xb8] sm:$0xff] %vm692, 0.0
      %717 = vst.msk [vmem:[#allocation2 + $0xc0] sm:$0xff] %vm692, 0.0
      %718 = vst.msk [vmem:[#allocation2 + $0xc8] sm:$0xff] %vm692, 0.0
      %719 = vst.msk [vmem:[#allocation2 + $0xd0] sm:$0xff] %vm692, 0.0
      %720 = vst.msk [vmem:[#allocation2 + $0xd8] sm:$0xff] %vm692, 0.0
      %721 = vst.msk [vmem:[#allocation2 + $0xe0] sm:$0xff] %vm692, 0.0
      %722 = vst.msk [vmem:[#allocation2 + $0xe8] sm:$0xff] %vm692, 0.0
      %723 = vst.msk [vmem:[#allocation2 + $0xf0] sm:$0xff] %vm692, 0.0
      %724 = vst.msk [vmem:[#allocation2 + $0xf8] sm:$0xff] %vm692, 0.0
      %725 = vst.msk [vmem:[#allocation2 + $0x100] sm:$0xff] %vm692, 0.0
      %726 = vst.msk [vmem:[#allocation2 + $0x108] sm:$0xff] %vm692, 0.0
      %727 = vst.msk [vmem:[#allocation2 + $0x110] sm:$0xff] %vm692, 0.0
      %728 = vst.msk [vmem:[#allocation2 + $0x118] sm:$0xff] %vm692, 0.0
      %729 = vst.msk [vmem:[#allocation2 + $0x120] sm:$0xff] %vm692, 0.0
      %730 = vst.msk [vmem:[#allocation2 + $0x128] sm:$0xff] %vm692, 0.0
      %731 = vst.msk [vmem:[#allocation2 + $0x18] sm:$0xff] %vm692, %v660
      %732 = vst.msk [vmem:[#allocation2 + $0x20] sm:$0xff] %vm692, %v661
      %733 = vst.msk [vmem:[#allocation2 + $0x28] sm:$0xff] %vm692, %v662
      %734 = vst.msk [vmem:[#allocation2 + $0x30] sm:$0xff] %vm692, %v663
      %735 = vst.msk [vmem:[#allocation2 + $0x38] sm:$0xff] %vm692, %v664
      %736 = vst.msk [vmem:[#allocation2 + $0x40] sm:$0xff] %vm692, %v665
      %737 = vst.msk [vmem:[#allocation2 + $0x48] sm:$0xff] %vm692, %v666
      %738 = vst.msk [vmem:[#allocation2 + $0x50] sm:$0xff] %vm692, %v667
      %739 = vst.msk [vmem:[#allocation2 + $0x58] sm:$0xff] %vm692, %v668
      %740 = vst.msk [vmem:[#allocation2 + $0x60] sm:$0xff] %vm692, %v669
      %741 = vst.msk [vmem:[#allocation2 + $0x68] sm:$0xff] %vm692, %v670
      %742 = vst.msk [vmem:[#allocation2 + $0x70] sm:$0xff] %vm692, %v671
      %743 = vst.msk [vmem:[#allocation2 + $0x78] sm:$0xff] %vm692, %v672
      %744 = vst.msk [vmem:[#allocation2 + $0x80] sm:$0xff] %vm692, %v673
      %745 = vst.msk [vmem:[#allocation2 + $0x88] sm:$0xff] %vm692, %v674
      %746 = vst.msk [vmem:[#allocation2 + $0x90] sm:$0xff] %vm692, %v675
      %747 = vst.msk [vmem:[#allocation2 + $0x98] sm:$0xff] %vm692, %v676
      %748 = vst.msk [vmem:[#allocation2 + $0xa0] sm:$0xff] %vm692, %v677
      %749 = vst.msk [vmem:[#allocation2 + $0xa8] sm:$0xff] %vm692, %v678
      %750 = vst.msk [vmem:[#allocation2 + $0xb0] sm:$0xff] %vm692, %v679
      %751 = vst.msk [vmem:[#allocation2 + $0xb8] sm:$0xff] %vm692, %v680
      %752 = vst.msk [vmem:[#allocation2 + $0xc0] sm:$0xff] %vm692, %v681
      %753 = vst.msk [vmem:[#allocation2 + $0xc8] sm:$0xff] %vm692, %v682
      %754 = vst.msk [vmem:[#allocation2 + $0xd0] sm:$0xff] %vm692, %v683
      %755 = vst.msk [vmem:[#allocation2 + $0xd8] sm:$0xff] %vm692, %v684
      %756 = vst.msk [vmem:[#allocation2 + $0xe0] sm:$0xff] %vm692, %v685
      %757 = vst.msk [vmem:[#allocation2 + $0xe8] sm:$0xff] %vm692, %v686
      %758 = vst.msk [vmem:[#allocation2 + $0xf0] sm:$0xff] %vm692, %v687
      %759 = vst.msk [vmem:[#allocation2 + $0xf8] sm:$0xff] %vm692, %v688
      %760 = vst.msk [vmem:[#allocation2 + $0x100] sm:$0xff] %vm692, %v689
      %761 = vst.msk [vmem:[#allocation2 + $0x108] sm:$0xff] %vm692, %v690
      %762 = vst.msk [vmem:[#allocation2 + $0x110] sm:$0xff] %vm692, %v691
      %v763 = vld [vmem:[%s3] sm:$0x7]
      %v764 = vld [vmem:[%s3 + $0x4] sm:$0x7]
      %v765 = vld [vmem:[%s3 + $0x8] sm:$0x7]
      %v766 = vlaneseq
      %v767 = vshrl.u32 %v766, 7
      %v768 = vadd.s32 %v767, 8
      %v769 = vadd.s32 %v767, 16
      %v770 = vadd.s32 %v767, 24
      %v771 = vadd.s32 %v767, 32
      %v772 = vadd.s32 %v767, 40
      %v773 = vadd.s32 %v767, 48
      %v774 = vadd.s32 %v767, 56
      %v775 = vadd.s32 %v767, 64
      %v776 = vadd.s32 %v767, 72
      %v777 = vadd.s32 %v767, 80
      %v778 = vadd.s32 %v767, 88
      %v779 = vadd.s32 %v767, 96
      %v780 = vadd.s32 %v767, 104
      %v781 = vadd.s32 %v767, 112
      %v782 = vadd.s32 %v767, 120
      %v783 = vadd.s32 %v767, 128
      %v784 = vadd.s32 %v767, 136
      %v785 = vadd.s32 %v767, 144
      %v786 = vadd.s32 %v767, 152
      %v787 = vadd.s32 %v767, 160
      %v788 = vadd.s32 %v767, 168
      %v789 = vadd.s32 %v767, 176
      %v790 = vadd.s32 %v767, 184
      %v791 = vadd.s32 %v767, 192
      %v792 = vadd.s32 %v767, 200
      %v793 = vadd.s32 %v767, 208
      %v794 = vadd.s32 %v767, 216
      %v795 = vadd.s32 %v767, 224
      %v796 = vadd.s32 %v767, 232
      %v797 = vadd.s32 %v767, 240
      %v798 = vadd.s32 %v767, 248
      %vm799 = vcmp.lt.s32.totalorder %v767, 0
      %v800 = vsub.s32 0, %v767
      %v801 = vsel %vm799, %v800, %v767
      %v802 = vshrl.u32 %v801, 4
      %v803 = vand.u32 %v801, 15
      %v804 = vsub.s32 0, %v803
      %v805 = vsel %vm799, %v804, %v803
      %vm806 = vcmp.lt.s32.totalorder %v768, 0
      %v807 = vsub.s32 0, %v768
      %v808 = vsel %vm806, %v807, %v768
      %v809 = vshrl.u32 %v808, 4
      %v810 = vand.u32 %v808, 15
      %v811 = vsub.s32 0, %v810
      %v812 = vsel %vm806, %v811, %v810
      %vm813 = vcmp.lt.s32.totalorder %v769, 0
      %v814 = vsub.s32 0, %v769
      %v815 = vsel %vm813, %v814, %v769
      %v816 = vshrl.u32 %v815, 4
      %v817 = vand.u32 %v815, 15
      %v818 = vsub.s32 0, %v817
      %v819 = vsel %vm813, %v818, %v817
      %vm820 = vcmp.lt.s32.totalorder %v770, 0
      %v821 = vsub.s32 0, %v770
      %v822 = vsel %vm820, %v821, %v770
      %v823 = vshrl.u32 %v822, 4
      %v824 = vand.u32 %v822, 15
      %v825 = vsub.s32 0, %v824
      %v826 = vsel %vm820, %v825, %v824
      %vm827 = vcmp.lt.s32.totalorder %v771, 0
      %v828 = vsub.s32 0, %v771
      %v829 = vsel %vm827, %v828, %v771
      %v830 = vshrl.u32 %v829, 4
      %v831 = vand.u32 %v829, 15
      %v832 = vsub.s32 0, %v831
      %v833 = vsel %vm827, %v832, %v831
      %vm834 = vcmp.lt.s32.totalorder %v772, 0
      %v835 = vsub.s32 0, %v772
      %v836 = vsel %vm834, %v835, %v772
      %v837 = vshrl.u32 %v836, 4
      %v838 = vand.u32 %v836, 15
      %v839 = vsub.s32 0, %v838
      %v840 = vsel %vm834, %v839, %v838
      %vm841 = vcmp.lt.s32.totalorder %v773, 0
      %v842 = vsub.s32 0, %v773
      %v843 = vsel %vm841, %v842, %v773
      %v844 = vshrl.u32 %v843, 4
      %v845 = vand.u32 %v843, 15
      %v846 = vsub.s32 0, %v845
      %v847 = vsel %vm841, %v846, %v845
      %vm848 = vcmp.lt.s32.totalorder %v774, 0
      %v849 = vsub.s32 0, %v774
      %v850 = vsel %vm848, %v849, %v774
      %v851 = vshrl.u32 %v850, 4
      %v852 = vand.u32 %v850, 15
      %v853 = vsub.s32 0, %v852
      %v854 = vsel %vm848, %v853, %v852
      %vm855 = vcmp.lt.s32.totalorder %v775, 0
      %v856 = vsub.s32 0, %v775
      %v857 = vsel %vm855, %v856, %v775
      %v858 = vshrl.u32 %v857, 4
      %v859 = vand.u32 %v857, 15
      %v860 = vsub.s32 0, %v859
      %v861 = vsel %vm855, %v860, %v859
      %vm862 = vcmp.lt.s32.totalorder %v776, 0
      %v863 = vsub.s32 0, %v776
      %v864 = vsel %vm862, %v863, %v776
      %v865 = vshrl.u32 %v864, 4
      %v866 = vand.u32 %v864, 15
      %v867 = vsub.s32 0, %v866
      %v868 = vsel %vm862, %v867, %v866
      %vm869 = vcmp.lt.s32.totalorder %v777, 0
      %v870 = vsub.s32 0, %v777
      %v871 = vsel %vm869, %v870, %v777
      %v872 = vshrl.u32 %v871, 4
      %v873 = vand.u32 %v871, 15
      %v874 = vsub.s32 0, %v873
      %v875 = vsel %vm869, %v874, %v873
      %vm876 = vcmp.lt.s32.totalorder %v778, 0
      %v877 = vsub.s32 0, %v778
      %v878 = vsel %vm876, %v877, %v778
      %v879 = vshrl.u32 %v878, 4
      %v880 = vand.u32 %v878, 15
      %v881 = vsub.s32 0, %v880
      %v882 = vsel %vm876, %v881, %v880
      %vm883 = vcmp.lt.s32.totalorder %v779, 0
      %v884 = vsub.s32 0, %v779
      %v885 = vsel %vm883, %v884, %v779
      %v886 = vshrl.u32 %v885, 4
      %v887 = vand.u32 %v885, 15
      %v888 = vsub.s32 0, %v887
      %v889 = vsel %vm883, %v888, %v887
      %vm890 = vcmp.lt.s32.totalorder %v780, 0
      %v891 = vsub.s32 0, %v780
      %v892 = vsel %vm890, %v891, %v780
      %v893 = vshrl.u32 %v892, 4
      %v894 = vand.u32 %v892, 15
      %v895 = vsub.s32 0, %v894
      %v896 = vsel %vm890, %v895, %v894
      %vm897 = vcmp.lt.s32.totalorder %v781, 0
      %v898 = vsub.s32 0, %v781
      %v899 = vsel %vm897, %v898, %v781
      %v900 = vshrl.u32 %v899, 4
      %v901 = vand.u32 %v899, 15
      %v902 = vsub.s32 0, %v901
      %v903 = vsel %vm897, %v902, %v901
      %vm904 = vcmp.lt.s32.totalorder %v782, 0
      %v905 = vsub.s32 0, %v782
      %v906 = vsel %vm904, %v905, %v782
      %v907 = vshrl.u32 %v906, 4
      %v908 = vand.u32 %v906, 15
      %v909 = vsub.s32 0, %v908
      %v910 = vsel %vm904, %v909, %v908
      %vm911 = vcmp.lt.s32.totalorder %v783, 0
      %v912 = vsub.s32 0, %v783
      %v913 = vsel %vm911, %v912, %v783
      %v914 = vshrl.u32 %v913, 4
      %v915 = vand.u32 %v913, 15
      %v916 = vsub.s32 0, %v915
      %v917 = vsel %vm911, %v916, %v915
      %vm918 = vcmp.lt.s32.totalorder %v784, 0
      %v919 = vsub.s32 0, %v784
      %v920 = vsel %vm918, %v919, %v784
      %v921 = vshrl.u32 %v920, 4
      %v922 = vand.u32 %v920, 15
      %v923 = vsub.s32 0, %v922
      %v924 = vsel %vm918, %v923, %v922
      %vm925 = vcmp.lt.s32.totalorder %v785, 0
      %v926 = vsub.s32 0, %v785
      %v927 = vsel %vm925, %v926, %v785
      %v928 = vshrl.u32 %v927, 4
      %v929 = vand.u32 %v927, 15
      %v930 = vsub.s32 0, %v929
      %v931 = vsel %vm925, %v930, %v929
      %vm932 = vcmp.lt.s32.totalorder %v786, 0
      %v933 = vsub.s32 0, %v786
      %v934 = vsel %vm932, %v933, %v786
      %v935 = vshrl.u32 %v934, 4
      %v936 = vand.u32 %v934, 15
      %v937 = vsub.s32 0, %v936
      %v938 = vsel %vm932, %v937, %v936
      %vm939 = vcmp.lt.s32.totalorder %v787, 0
      %v940 = vsub.s32 0, %v787
      %v941 = vsel %vm939, %v940, %v787
      %v942 = vshrl.u32 %v941, 4
      %v943 = vand.u32 %v941, 15
      %v944 = vsub.s32 0, %v943
      %v945 = vsel %vm939, %v944, %v943
      %vm946 = vcmp.lt.s32.totalorder %v788, 0
      %v947 = vsub.s32 0, %v788
      %v948 = vsel %vm946, %v947, %v788
      %v949 = vshrl.u32 %v948, 4
      %v950 = vand.u32 %v948, 15
      %v951 = vsub.s32 0, %v950
      %v952 = vsel %vm946, %v951, %v950
      %vm953 = vcmp.lt.s32.totalorder %v789, 0
      %v954 = vsub.s32 0, %v789
      %v955 = vsel %vm953, %v954, %v789
      %v956 = vshrl.u32 %v955, 4
      %v957 = vand.u32 %v955, 15
      %v958 = vsub.s32 0, %v957
      %v959 = vsel %vm953, %v958, %v957
      %vm960 = vcmp.lt.s32.totalorder %v790, 0
      %v961 = vsub.s32 0, %v790
      %v962 = vsel %vm960, %v961, %v790
      %v963 = vshrl.u32 %v962, 4
      %v964 = vand.u32 %v962, 15
      %v965 = vsub.s32 0, %v964
      %v966 = vsel %vm960, %v965, %v964
      %vm967 = vcmp.lt.s32.totalorder %v791, 0
      %v968 = vsub.s32 0, %v791
      %v969 = vsel %vm967, %v968, %v791
      %v970 = vshrl.u32 %v969, 4
      %v971 = vand.u32 %v969, 15
      %v972 = vsub.s32 0, %v971
      %v973 = vsel %vm967, %v972, %v971
      %vm974 = vcmp.lt.s32.totalorder %v792, 0
      %v975 = vsub.s32 0, %v792
      %v976 = vsel %vm974, %v975, %v792
      %v977 = vshrl.u32 %v976, 4
      %v978 = vand.u32 %v976, 15
      %v979 = vsub.s32 0, %v978
      %v980 = vsel %vm974, %v979, %v978
      %vm981 = vcmp.lt.s32.totalorder %v793, 0
      %v982 = vsub.s32 0, %v793
      %v983 = vsel %vm981, %v982, %v793
      %v984 = vshrl.u32 %v983, 4
      %v985 = vand.u32 %v983, 15
      %v986 = vsub.s32 0, %v985
      %v987 = vsel %vm981, %v986, %v985
      %vm988 = vcmp.lt.s32.totalorder %v794, 0
      %v989 = vsub.s32 0, %v794
      %v990 = vsel %vm988, %v989, %v794
      %v991 = vshrl.u32 %v990, 4
      %v992 = vand.u32 %v990, 15
      %v993 = vsub.s32 0, %v992
      %v994 = vsel %vm988, %v993, %v992
      %vm995 = vcmp.lt.s32.totalorder %v795, 0
      %v996 = vsub.s32 0, %v795
      %v997 = vsel %vm995, %v996, %v795
      %v998 = vshrl.u32 %v997, 4
      %v999 = vand.u32 %v997, 15
      %v1000 = vsub.s32 0, %v999
      %v1001 = vsel %vm995, %v1000, %v999
      %vm1002 = vcmp.lt.s32.totalorder %v796, 0
      %v1003 = vsub.s32 0, %v796
      %v1004 = vsel %vm1002, %v1003, %v796
      %v1005 = vshrl.u32 %v1004, 4
      %v1006 = vand.u32 %v1004, 15
      %v1007 = vsub.s32 0, %v1006
      %v1008 = vsel %vm1002, %v1007, %v1006
      %vm1009 = vcmp.lt.s32.totalorder %v797, 0
      %v1010 = vsub.s32 0, %v797
      %v1011 = vsel %vm1009, %v1010, %v797
      %v1012 = vshrl.u32 %v1011, 4
      %v1013 = vand.u32 %v1011, 15
      %v1014 = vsub.s32 0, %v1013
      %v1015 = vsel %vm1009, %v1014, %v1013
      %vm1016 = vcmp.lt.s32.totalorder %v798, 0
      %v1017 = vsub.s32 0, %v798
      %v1018 = vsel %vm1016, %v1017, %v798
      %v1019 = vshrl.u32 %v1018, 4
      %v1020 = vand.u32 %v1018, 15
      %v1021 = vsub.s32 0, %v1020
      %v1022 = vsel %vm1016, %v1021, %v1020
      %vm1023 = vcmp.ne.s32.totalorder %v805, 0
      %vm1024 = vcmp.ne.s32.totalorder %v812, 0
      %vm1025 = vcmp.ne.s32.totalorder %v819, 0
      %vm1026 = vcmp.ne.s32.totalorder %v826, 0
      %vm1027 = vcmp.ne.s32.totalorder %v833, 0
      %vm1028 = vcmp.ne.s32.totalorder %v840, 0
      %vm1029 = vcmp.ne.s32.totalorder %v847, 0
      %vm1030 = vcmp.ne.s32.totalorder %v854, 0
      %vm1031 = vcmp.ne.s32.totalorder %v861, 0
      %vm1032 = vcmp.ne.s32.totalorder %v868, 0
      %vm1033 = vcmp.ne.s32.totalorder %v875, 0
      %vm1034 = vcmp.ne.s32.totalorder %v882, 0
      %vm1035 = vcmp.ne.s32.totalorder %v889, 0
      %vm1036 = vcmp.ne.s32.totalorder %v896, 0
      %vm1037 = vcmp.ne.s32.totalorder %v903, 0
      %vm1038 = vcmp.ne.s32.totalorder %v910, 0
      %vm1039 = vcmp.ne.s32.totalorder %v917, 0
      %vm1040 = vcmp.ne.s32.totalorder %v924, 0
      %vm1041 = vcmp.ne.s32.totalorder %v931, 0
      %vm1042 = vcmp.ne.s32.totalorder %v938, 0
      %vm1043 = vcmp.ne.s32.totalorder %v945, 0
      %vm1044 = vcmp.ne.s32.totalorder %v952, 0
      %vm1045 = vcmp.ne.s32.totalorder %v959, 0
      %vm1046 = vcmp.ne.s32.totalorder %v966, 0
      %vm1047 = vcmp.ne.s32.totalorder %v973, 0
      %vm1048 = vcmp.ne.s32.totalorder %v980, 0
      %vm1049 = vcmp.ne.s32.totalorder %v987, 0
      %vm1050 = vcmp.ne.s32.totalorder %v994, 0
      %vm1051 = vcmp.ne.s32.totalorder %v1001, 0
      %vm1052 = vcmp.ne.s32.totalorder %v1008, 0
      %vm1053 = vcmp.ne.s32.totalorder %v1015, 0
      %vm1054 = vcmp.ne.s32.totalorder %v1022, 0
      %vm1055 = vcmp.lt.s32.totalorder %v805, 0
      %vm1056 = vcmp.lt.s32.totalorder %v812, 0
      %vm1057 = vcmp.lt.s32.totalorder %v819, 0
      %vm1058 = vcmp.lt.s32.totalorder %v826, 0
      %vm1059 = vcmp.lt.s32.totalorder %v833, 0
      %vm1060 = vcmp.lt.s32.totalorder %v840, 0
      %vm1061 = vcmp.lt.s32.totalorder %v847, 0
      %vm1062 = vcmp.lt.s32.totalorder %v854, 0
      %vm1063 = vcmp.lt.s32.totalorder %v861, 0
      %vm1064 = vcmp.lt.s32.totalorder %v868, 0
      %vm1065 = vcmp.lt.s32.totalorder %v875, 0
      %vm1066 = vcmp.lt.s32.totalorder %v882, 0
      %vm1067 = vcmp.lt.s32.totalorder %v889, 0
      %vm1068 = vcmp.lt.s32.totalorder %v896, 0
      %vm1069 = vcmp.lt.s32.totalorder %v903, 0
      %vm1070 = vcmp.lt.s32.totalorder %v910, 0
      %vm1071 = vcmp.lt.s32.totalorder %v917, 0
      %vm1072 = vcmp.lt.s32.totalorder %v924, 0
      %vm1073 = vcmp.lt.s32.totalorder %v931, 0
      %vm1074 = vcmp.lt.s32.totalorder %v938, 0
      %vm1075 = vcmp.lt.s32.totalorder %v945, 0
      %vm1076 = vcmp.lt.s32.totalorder %v952, 0
      %vm1077 = vcmp.lt.s32.totalorder %v959, 0
      %vm1078 = vcmp.lt.s32.totalorder %v966, 0
      %vm1079 = vcmp.lt.s32.totalorder %v973, 0
      %vm1080 = vcmp.lt.s32.totalorder %v980, 0
      %vm1081 = vcmp.lt.s32.totalorder %v987, 0
      %vm1082 = vcmp.lt.s32.totalorder %v994, 0
      %vm1083 = vcmp.lt.s32.totalorder %v1001, 0
      %vm1084 = vcmp.lt.s32.totalorder %v1008, 0
      %vm1085 = vcmp.lt.s32.totalorder %v1015, 0
      %vm1086 = vcmp.lt.s32.totalorder %v1022, 0
      %vm1087 = vmand %vm1055, %vm1023
      %vm1088 = vmand %vm1056, %vm1024
      %vm1089 = vmand %vm1057, %vm1025
      %vm1090 = vmand %vm1058, %vm1026
      %vm1091 = vmand %vm1059, %vm1027
      %vm1092 = vmand %vm1060, %vm1028
      %vm1093 = vmand %vm1061, %vm1029
      %vm1094 = vmand %vm1062, %vm1030
      %vm1095 = vmand %vm1063, %vm1031
      %vm1096 = vmand %vm1064, %vm1032
      %vm1097 = vmand %vm1065, %vm1033
      %vm1098 = vmand %vm1066, %vm1034
      %vm1099 = vmand %vm1067, %vm1035
      %vm1100 = vmand %vm1068, %vm1036
      %vm1101 = vmand %vm1069, %vm1037
      %vm1102 = vmand %vm1070, %vm1038
      %vm1103 = vmand %vm1071, %vm1039
      %vm1104 = vmand %vm1072, %vm1040
      %vm1105 = vmand %vm1073, %vm1041
      %vm1106 = vmand %vm1074, %vm1042
      %vm1107 = vmand %vm1075, %vm1043
      %vm1108 = vmand %vm1076, %vm1044
      %vm1109 = vmand %vm1077, %vm1045
      %vm1110 = vmand %vm1078, %vm1046
      %vm1111 = vmand %vm1079, %vm1047
      %vm1112 = vmand %vm1080, %vm1048
      %vm1113 = vmand %vm1081, %vm1049
      %vm1114 = vmand %vm1082, %vm1050
      %vm1115 = vmand %vm1083, %vm1051
      %vm1116 = vmand %vm1084, %vm1052
      %vm1117 = vmand %vm1085, %vm1053
      %vm1118 = vmand %vm1086, %vm1054
      %v1119 = vadd.s32 %v805, 16
      %v1120 = vadd.s32 %v812, 16
      %v1121 = vadd.s32 %v819, 16
      %v1122 = vadd.s32 %v826, 16
      %v1123 = vadd.s32 %v833, 16
      %v1124 = vadd.s32 %v840, 16
      %v1125 = vadd.s32 %v847, 16
      %v1126 = vadd.s32 %v854, 16
      %v1127 = vadd.s32 %v861, 16
      %v1128 = vadd.s32 %v868, 16
      %v1129 = vadd.s32 %v875, 16
      %v1130 = vadd.s32 %v882, 16
      %v1131 = vadd.s32 %v889, 16
      %v1132 = vadd.s32 %v896, 16
      %v1133 = vadd.s32 %v903, 16
      %v1134 = vadd.s32 %v910, 16
      %v1135 = vadd.s32 %v917, 16
      %v1136 = vadd.s32 %v924, 16
      %v1137 = vadd.s32 %v931, 16
      %v1138 = vadd.s32 %v938, 16
      %v1139 = vadd.s32 %v945, 16
      %v1140 = vadd.s32 %v952, 16
      %v1141 = vadd.s32 %v959, 16
      %v1142 = vadd.s32 %v966, 16
      %v1143 = vadd.s32 %v973, 16
      %v1144 = vadd.s32 %v980, 16
      %v1145 = vadd.s32 %v987, 16
      %v1146 = vadd.s32 %v994, 16
      %v1147 = vadd.s32 %v1001, 16
      %v1148 = vadd.s32 %v1008, 16
      %v1149 = vadd.s32 %v1015, 16
      %v1150 = vadd.s32 %v1022, 16
      %v1151 = vsel %vm1087, %v1119, %v805
      %v1152 = vsel %vm1088, %v1120, %v812
      %v1153 = vsel %vm1089, %v1121, %v819
      %v1154 = vsel %vm1090, %v1122, %v826
      %v1155 = vsel %vm1091, %v1123, %v833
      %v1156 = vsel %vm1092, %v1124, %v840
      %v1157 = vsel %vm1093, %v1125, %v847
      %v1158 = vsel %vm1094, %v1126, %v854
      %v1159 = vsel %vm1095, %v1127, %v861
      %v1160 = vsel %vm1096, %v1128, %v868
      %v1161 = vsel %vm1097, %v1129, %v875
      %v1162 = vsel %vm1098, %v1130, %v882
      %v1163 = vsel %vm1099, %v1131, %v889
      %v1164 = vsel %vm1100, %v1132, %v896
      %v1165 = vsel %vm1101, %v1133, %v903
      %v1166 = vsel %vm1102, %v1134, %v910
      %v1167 = vsel %vm1103, %v1135, %v917
      %v1168 = vsel %vm1104, %v1136, %v924
      %v1169 = vsel %vm1105, %v1137, %v931
      %v1170 = vsel %vm1106, %v1138, %v938
      %v1171 = vsel %vm1107, %v1139, %v945
      %v1172 = vsel %vm1108, %v1140, %v952
      %v1173 = vsel %vm1109, %v1141, %v959
      %v1174 = vsel %vm1110, %v1142, %v966
      %v1175 = vsel %vm1111, %v1143, %v973
      %v1176 = vsel %vm1112, %v1144, %v980
      %v1177 = vsel %vm1113, %v1145, %v987
      %v1178 = vsel %vm1114, %v1146, %v994
      %v1179 = vsel %vm1115, %v1147, %v1001
      %v1180 = vsel %vm1116, %v1148, %v1008
      %v1181 = vsel %vm1117, %v1149, %v1015
      %v1182 = vsel %vm1118, %v1150, %v1022
      %v1183 = vld [vmem:[#allocation2 + $0x7] sm:$0xff]
      %v1184 = vld [vmem:[#allocation2 + $0xf] sm:$0xff]
      %v1185 = vld [vmem:[#allocation2 + $0x17] sm:$0xff]
      %v1186 = vld [vmem:[#allocation2 + $0x1f] sm:$0xff]
      %v1187 = vld [vmem:[#allocation2 + $0x27] sm:$0xff]
      %v1188 = vld [vmem:[#allocation2 + $0x2f] sm:$0xff]
      %v1189 = vld [vmem:[#allocation2 + $0x37] sm:$0xff]
      %v1190 = vld [vmem:[#allocation2 + $0x3f] sm:$0xff]
      %v1191 = vld [vmem:[#allocation2 + $0x47] sm:$0xff]
      %v1192 = vld [vmem:[#allocation2 + $0x4f] sm:$0xff]
      %v1193 = vld [vmem:[#allocation2 + $0x57] sm:$0xff]
      %v1194 = vld [vmem:[#allocation2 + $0x5f] sm:$0xff]
      %v1195 = vld [vmem:[#allocation2 + $0x67] sm:$0xff]
      %v1196 = vld [vmem:[#allocation2 + $0x6f] sm:$0xff]
      %v1197 = vld [vmem:[#allocation2 + $0x77] sm:$0xff]
      %v1198 = vld [vmem:[#allocation2 + $0x7f] sm:$0xff]
      %v1199 = vld [vmem:[#allocation2 + $0x87] sm:$0xff]
      %v1200 = vld [vmem:[#allocation2 + $0x8f] sm:$0xff]
      %v1201 = vld [vmem:[#allocation2 + $0x97] sm:$0xff]
      %v1202 = vld [vmem:[#allocation2 + $0x9f] sm:$0xff]
      %v1203 = vld [vmem:[#allocation2 + $0xa7] sm:$0xff]
      %v1204 = vld [vmem:[#allocation2 + $0xaf] sm:$0xff]
      %v1205 = vld [vmem:[#allocation2 + $0xb7] sm:$0xff]
      %v1206 = vld [vmem:[#allocation2 + $0xbf] sm:$0xff]
      %v1207 = vld [vmem:[#allocation2 + $0xc7] sm:$0xff]
      %v1208 = vld [vmem:[#allocation2 + $0xcf] sm:$0xff]
      %v1209 = vld [vmem:[#allocation2 + $0xd7] sm:$0xff]
      %v1210 = vld [vmem:[#allocation2 + $0xdf] sm:$0xff]
      %v1211 = vld [vmem:[#allocation2 + $0xe7] sm:$0xff]
      %v1212 = vld [vmem:[#allocation2 + $0xef] sm:$0xff]
      %v1213 = vld [vmem:[#allocation2 + $0xf7] sm:$0xff]
      %v1214 = vld [vmem:[#allocation2 + $0xff] sm:$0xff]
      %v1215 = vadd.s32 %v1151, 4294967295
      %v1216 = vadd.s32 %v1152, 4294967295
      %v1217 = vadd.s32 %v1153, 4294967295
      %v1218 = vadd.s32 %v1154, 4294967295
      %v1219 = vadd.s32 %v1155, 4294967295
      %v1220 = vadd.s32 %v1156, 4294967295
      %v1221 = vadd.s32 %v1157, 4294967295
      %v1222 = vadd.s32 %v1158, 4294967295
      %v1223 = vadd.s32 %v1159, 4294967295
      %v1224 = vadd.s32 %v1160, 4294967295
      %v1225 = vadd.s32 %v1161, 4294967295
      %v1226 = vadd.s32 %v1162, 4294967295
      %v1227 = vadd.s32 %v1163, 4294967295
      %v1228 = vadd.s32 %v1164, 4294967295
      %v1229 = vadd.s32 %v1165, 4294967295
      %v1230 = vadd.s32 %v1166, 4294967295
      %v1231 = vadd.s32 %v1167, 4294967295
      %v1232 = vadd.s32 %v1168, 4294967295
      %v1233 = vadd.s32 %v1169, 4294967295
      %v1234 = vadd.s32 %v1170, 4294967295
      %v1235 = vadd.s32 %v1171, 4294967295
      %v1236 = vadd.s32 %v1172, 4294967295
      %v1237 = vadd.s32 %v1173, 4294967295
      %v1238 = vadd.s32 %v1174, 4294967295
      %v1239 = vadd.s32 %v1175, 4294967295
      %v1240 = vadd.s32 %v1176, 4294967295
      %v1241 = vadd.s32 %v1177, 4294967295
      %v1242 = vadd.s32 %v1178, 4294967295
      %v1243 = vadd.s32 %v1179, 4294967295
      %v1244 = vadd.s32 %v1180, 4294967295
      %v1245 = vadd.s32 %v1181, 4294967295
      %v1246 = vadd.s32 %v1182, 4294967295
      %vm1247 = vcmp.ge.s32.totalorder %v1215, 0
      %vm1248 = vcmp.ge.s32.totalorder %v1216, 0
      %vm1249 = vcmp.ge.s32.totalorder %v1217, 0
      %vm1250 = vcmp.ge.s32.totalorder %v1218, 0
      %vm1251 = vcmp.ge.s32.totalorder %v1219, 0
      %vm1252 = vcmp.ge.s32.totalorder %v1220, 0
      %vm1253 = vcmp.ge.s32.totalorder %v1221, 0
      %vm1254 = vcmp.ge.s32.totalorder %v1222, 0
      %vm1255 = vcmp.ge.s32.totalorder %v1223, 0
      %vm1256 = vcmp.ge.s32.totalorder %v1224, 0
      %vm1257 = vcmp.ge.s32.totalorder %v1225, 0
      %vm1258 = vcmp.ge.s32.totalorder %v1226, 0
      %vm1259 = vcmp.ge.s32.totalorder %v1227, 0
      %vm1260 = vcmp.ge.s32.totalorder %v1228, 0
      %vm1261 = vcmp.ge.s32.totalorder %v1229, 0
      %vm1262 = vcmp.ge.s32.totalorder %v1230, 0
      %vm1263 = vcmp.ge.s32.totalorder %v1231, 0
      %vm1264 = vcmp.ge.s32.totalorder %v1232, 0
      %vm1265 = vcmp.ge.s32.totalorder %v1233, 0
      %vm1266 = vcmp.ge.s32.totalorder %v1234, 0
      %vm1267 = vcmp.ge.s32.totalorder %v1235, 0
      %vm1268 = vcmp.ge.s32.totalorder %v1236, 0
      %vm1269 = vcmp.ge.s32.totalorder %v1237, 0
      %vm1270 = vcmp.ge.s32.totalorder %v1238, 0
      %vm1271 = vcmp.ge.s32.totalorder %v1239, 0
      %vm1272 = vcmp.ge.s32.totalorder %v1240, 0
      %vm1273 = vcmp.ge.s32.totalorder %v1241, 0
      %vm1274 = vcmp.ge.s32.totalorder %v1242, 0
      %vm1275 = vcmp.ge.s32.totalorder %v1243, 0
      %vm1276 = vcmp.ge.s32.totalorder %v1244, 0
      %vm1277 = vcmp.ge.s32.totalorder %v1245, 0
      %vm1278 = vcmp.ge.s32.totalorder %v1246, 0
      %vm1279 = vcmp.lt.s32.totalorder %v1215, 16
      %vm1280 = vcmp.lt.s32.totalorder %v1216, 16
      %vm1281 = vcmp.lt.s32.totalorder %v1217, 16
      %vm1282 = vcmp.lt.s32.totalorder %v1218, 16
      %vm1283 = vcmp.lt.s32.totalorder %v1219, 16
      %vm1284 = vcmp.lt.s32.totalorder %v1220, 16
      %vm1285 = vcmp.lt.s32.totalorder %v1221, 16
      %vm1286 = vcmp.lt.s32.totalorder %v1222, 16
      %vm1287 = vcmp.lt.s32.totalorder %v1223, 16
      %vm1288 = vcmp.lt.s32.totalorder %v1224, 16
      %vm1289 = vcmp.lt.s32.totalorder %v1225, 16
      %vm1290 = vcmp.lt.s32.totalorder %v1226, 16
      %vm1291 = vcmp.lt.s32.totalorder %v1227, 16
      %vm1292 = vcmp.lt.s32.totalorder %v1228, 16
      %vm1293 = vcmp.lt.s32.totalorder %v1229, 16
      %vm1294 = vcmp.lt.s32.totalorder %v1230, 16
      %vm1295 = vcmp.lt.s32.totalorder %v1231, 16
      %vm1296 = vcmp.lt.s32.totalorder %v1232, 16
      %vm1297 = vcmp.lt.s32.totalorder %v1233, 16
      %vm1298 = vcmp.lt.s32.totalorder %v1234, 16
      %vm1299 = vcmp.lt.s32.totalorder %v1235, 16
      %vm1300 = vcmp.lt.s32.totalorder %v1236, 16
      %vm1301 = vcmp.lt.s32.totalorder %v1237, 16
      %vm1302 = vcmp.lt.s32.totalorder %v1238, 16
      %vm1303 = vcmp.lt.s32.totalorder %v1239, 16
      %vm1304 = vcmp.lt.s32.totalorder %v1240, 16
      %vm1305 = vcmp.lt.s32.totalorder %v1241, 16
      %vm1306 = vcmp.lt.s32.totalorder %v1242, 16
      %vm1307 = vcmp.lt.s32.totalorder %v1243, 16
      %vm1308 = vcmp.lt.s32.totalorder %v1244, 16
      %vm1309 = vcmp.lt.s32.totalorder %v1245, 16
      %vm1310 = vcmp.lt.s32.totalorder %v1246, 16
      %vm1311 = vmand %vm1247, %vm1279
      %vm1312 = vmand %vm1248, %vm1280
      %vm1313 = vmand %vm1249, %vm1281
      %vm1314 = vmand %vm1250, %vm1282
      %vm1315 = vmand %vm1251, %vm1283
      %vm1316 = vmand %vm1252, %vm1284
      %vm1317 = vmand %vm1253, %vm1285
      %vm1318 = vmand %vm1254, %vm1286
      %vm1319 = vmand %vm1255, %vm1287
      %vm1320 = vmand %vm1256, %vm1288
      %vm1321 = vmand %vm1257, %vm1289
      %vm1322 = vmand %vm1258, %vm1290
      %vm1323 = vmand %vm1259, %vm1291
      %vm1324 = vmand %vm1260, %vm1292
      %vm1325 = vmand %vm1261, %vm1293
      %vm1326 = vmand %vm1262, %vm1294
      %vm1327 = vmand %vm1263, %vm1295
      %vm1328 = vmand %vm1264, %vm1296
      %vm1329 = vmand %vm1265, %vm1297
      %vm1330 = vmand %vm1266, %vm1298
      %vm1331 = vmand %vm1267, %vm1299
      %vm1332 = vmand %vm1268, %vm1300
      %vm1333 = vmand %vm1269, %vm1301
      %vm1334 = vmand %vm1270, %vm1302
      %vm1335 = vmand %vm1271, %vm1303
      %vm1336 = vmand %vm1272, %vm1304
      %vm1337 = vmand %vm1273, %vm1305
      %vm1338 = vmand %vm1274, %vm1306
      %vm1339 = vmand %vm1275, %vm1307
      %vm1340 = vmand %vm1276, %vm1308
      %vm1341 = vmand %vm1277, %vm1309
      %vm1342 = vmand %vm1278, %vm1310
      %v1343 = vsel %vm1311, 1, 0
      %v1344 = vsel %vm1312, 1, 0
      %v1345 = vsel %vm1313, 1, 0
      %v1346 = vsel %vm1314, 1, 0
      %v1347 = vsel %vm1315, 1, 0
      %v1348 = vsel %vm1316, 1, 0
      %v1349 = vsel %vm1317, 1, 0
      %v1350 = vsel %vm1318, 1, 0
      %v1351 = vsel %vm1319, 1, 0
      %v1352 = vsel %vm1320, 1, 0
      %v1353 = vsel %vm1321, 1, 0
      %v1354 = vsel %vm1322, 1, 0
      %v1355 = vsel %vm1323, 1, 0
      %v1356 = vsel %vm1324, 1, 0
      %v1357 = vsel %vm1325, 1, 0
      %v1358 = vsel %vm1326, 1, 0
      %v1359 = vsel %vm1327, 1, 0
      %v1360 = vsel %vm1328, 1, 0
      %v1361 = vsel %vm1329, 1, 0
      %v1362 = vsel %vm1330, 1, 0
      %v1363 = vsel %vm1331, 1, 0
      %v1364 = vsel %vm1332, 1, 0
      %v1365 = vsel %vm1333, 1, 0
      %v1366 = vsel %vm1334, 1, 0
      %v1367 = vsel %vm1335, 1, 0
      %v1368 = vsel %vm1336, 1, 0
      %v1369 = vsel %vm1337, 1, 0
      %v1370 = vsel %vm1338, 1, 0
      %v1371 = vsel %vm1339, 1, 0
      %v1372 = vsel %vm1340, 1, 0
      %v1373 = vsel %vm1341, 1, 0
      %v1374 = vsel %vm1342, 1, 0
      %v1375 = vcvt.s32.f32 %v1343
      %v1376 = vcvt.s32.f32 %v1344
      %v1377 = vcvt.s32.f32 %v1345
      %v1378 = vcvt.s32.f32 %v1346
      %v1379 = vcvt.s32.f32 %v1347
      %v1380 = vcvt.s32.f32 %v1348
      %v1381 = vcvt.s32.f32 %v1349
      %v1382 = vcvt.s32.f32 %v1350
      %v1383 = vcvt.s32.f32 %v1351
      %v1384 = vcvt.s32.f32 %v1352
      %v1385 = vcvt.s32.f32 %v1353
      %v1386 = vcvt.s32.f32 %v1354
      %v1387 = vcvt.s32.f32 %v1355
      %v1388 = vcvt.s32.f32 %v1356
      %v1389 = vcvt.s32.f32 %v1357
      %v1390 = vcvt.s32.f32 %v1358
      %v1391 = vcvt.s32.f32 %v1359
      %v1392 = vcvt.s32.f32 %v1360
      %v1393 = vcvt.s32.f32 %v1361
      %v1394 = vcvt.s32.f32 %v1362
      %v1395 = vcvt.s32.f32 %v1363
      %v1396 = vcvt.s32.f32 %v1364
      %v1397 = vcvt.s32.f32 %v1365
      %v1398 = vcvt.s32.f32 %v1366
      %v1399 = vcvt.s32.f32 %v1367
      %v1400 = vcvt.s32.f32 %v1368
      %v1401 = vcvt.s32.f32 %v1369
      %v1402 = vcvt.s32.f32 %v1370
      %v1403 = vcvt.s32.f32 %v1371
      %v1404 = vcvt.s32.f32 %v1372
      %v1405 = vcvt.s32.f32 %v1373
      %v1406 = vcvt.s32.f32 %v1374
      %v1407 = vlaneseq
      %v1408 = vshrl.u32 %v1407, 7
      %v1409 = vsub.s32 0, %v1408
      %v1410 = vrot.slane %v763, %v1409
      %v1411 = vmul.f32 %v1410, %v1375
      %v1412 = vmul.f32 %v1410, %v1376
      %v1413 = vmul.f32 %v1410, %v1377
      %v1414 = vmul.f32 %v1410, %v1378
      %v1415 = vmul.f32 %v1410, %v1379
      %v1416 = vmul.f32 %v1410, %v1380
      %v1417 = vmul.f32 %v1410, %v1381
      %v1418 = vmul.f32 %v1410, %v1382
      %v1419 = vmul.f32 %v1410, %v1383
      %v1420 = vmul.f32 %v1410, %v1384
      %v1421 = vmul.f32 %v1410, %v1385
      %v1422 = vmul.f32 %v1410, %v1386
      %v1423 = vmul.f32 %v1410, %v1387
      %v1424 = vmul.f32 %v1410, %v1388
      %v1425 = vmul.f32 %v1410, %v1389
      %v1426 = vmul.f32 %v1410, %v1390
      %v1427 = vmul.f32 %v1410, %v1391
      %v1428 = vmul.f32 %v1410, %v1392
      %v1429 = vmul.f32 %v1410, %v1393
      %v1430 = vmul.f32 %v1410, %v1394
      %v1431 = vmul.f32 %v1410, %v1395
      %v1432 = vmul.f32 %v1410, %v1396
      %v1433 = vmul.f32 %v1410, %v1397
      %v1434 = vmul.f32 %v1410, %v1398
      %v1435 = vmul.f32 %v1410, %v1399
      %v1436 = vmul.f32 %v1410, %v1400
      %v1437 = vmul.f32 %v1410, %v1401
      %v1438 = vmul.f32 %v1410, %v1402
      %v1439 = vmul.f32 %v1410, %v1403
      %v1440 = vmul.f32 %v1410, %v1404
      %v1441 = vmul.f32 %v1410, %v1405
      %v1442 = vmul.f32 %v1410, %v1406
      %v1443 = vmul.f32 %v1183, %v1411
      %v1444 = vmul.f32 %v1184, %v1412
      %v1445 = vmul.f32 %v1185, %v1413
      %v1446 = vmul.f32 %v1186, %v1414
      %v1447 = vmul.f32 %v1187, %v1415
      %v1448 = vmul.f32 %v1188, %v1416
      %v1449 = vmul.f32 %v1189, %v1417
      %v1450 = vmul.f32 %v1190, %v1418
      %v1451 = vmul.f32 %v1191, %v1419
      %v1452 = vmul.f32 %v1192, %v1420
      %v1453 = vmul.f32 %v1193, %v1421
      %v1454 = vmul.f32 %v1194, %v1422
      %v1455 = vmul.f32 %v1195, %v1423
      %v1456 = vmul.f32 %v1196, %v1424
      %v1457 = vmul.f32 %v1197, %v1425
      %v1458 = vmul.f32 %v1198, %v1426
      %v1459 = vmul.f32 %v1199, %v1427
      %v1460 = vmul.f32 %v1200, %v1428
      %v1461 = vmul.f32 %v1201, %v1429
      %v1462 = vmul.f32 %v1202, %v1430
      %v1463 = vmul.f32 %v1203, %v1431
      %v1464 = vmul.f32 %v1204, %v1432
      %v1465 = vmul.f32 %v1205, %v1433
      %v1466 = vmul.f32 %v1206, %v1434
      %v1467 = vmul.f32 %v1207, %v1435
      %v1468 = vmul.f32 %v1208, %v1436
      %v1469 = vmul.f32 %v1209, %v1437
      %v1470 = vmul.f32 %v1210, %v1438
      %v1471 = vmul.f32 %v1211, %v1439
      %v1472 = vmul.f32 %v1212, %v1440
      %v1473 = vmul.f32 %v1213, %v1441
      %v1474 = vmul.f32 %v1214, %v1442
      %v1475 = vadd.f32 %v1443, 0.0
      %v1476 = vadd.f32 %v1444, 0.0
      %v1477 = vadd.f32 %v1445, 0.0
      %v1478 = vadd.f32 %v1446, 0.0
      %v1479 = vadd.f32 %v1447, 0.0
      %v1480 = vadd.f32 %v1448, 0.0
      %v1481 = vadd.f32 %v1449, 0.0
      %v1482 = vadd.f32 %v1450, 0.0
      %v1483 = vadd.f32 %v1451, 0.0
      %v1484 = vadd.f32 %v1452, 0.0
      %v1485 = vadd.f32 %v1453, 0.0
      %v1486 = vadd.f32 %v1454, 0.0
      %v1487 = vadd.f32 %v1455, 0.0
      %v1488 = vadd.f32 %v1456, 0.0
      %v1489 = vadd.f32 %v1457, 0.0
      %v1490 = vadd.f32 %v1458, 0.0
      %v1491 = vadd.f32 %v1459, 0.0
      %v1492 = vadd.f32 %v1460, 0.0
      %v1493 = vadd.f32 %v1461, 0.0
      %v1494 = vadd.f32 %v1462, 0.0
      %v1495 = vadd.f32 %v1463, 0.0
      %v1496 = vadd.f32 %v1464, 0.0
      %v1497 = vadd.f32 %v1465, 0.0
      %v1498 = vadd.f32 %v1466, 0.0
      %v1499 = vadd.f32 %v1467, 0.0
      %v1500 = vadd.f32 %v1468, 0.0
      %v1501 = vadd.f32 %v1469, 0.0
      %v1502 = vadd.f32 %v1470, 0.0
      %v1503 = vadd.f32 %v1471, 0.0
      %v1504 = vadd.f32 %v1472, 0.0
      %v1505 = vadd.f32 %v1473, 0.0
      %v1506 = vadd.f32 %v1474, 0.0
      %v1507 = vld [vmem:[#allocation2 + $0x8] sm:$0xff]
      %v1508 = vld [vmem:[#allocation2 + $0x10] sm:$0xff]
      %v1509 = vld [vmem:[#allocation2 + $0x18] sm:$0xff]
      %v1510 = vld [vmem:[#allocation2 + $0x20] sm:$0xff]
      %v1511 = vld [vmem:[#allocation2 + $0x28] sm:$0xff]
      %v1512 = vld [vmem:[#allocation2 + $0x30] sm:$0xff]
      %v1513 = vld [vmem:[#allocation2 + $0x38] sm:$0xff]
      %v1514 = vld [vmem:[#allocation2 + $0x40] sm:$0xff]
      %v1515 = vld [vmem:[#allocation2 + $0x48] sm:$0xff]
      %v1516 = vld [vmem:[#allocation2 + $0x50] sm:$0xff]
      %v1517 = vld [vmem:[#allocation2 + $0x58] sm:$0xff]
      %v1518 = vld [vmem:[#allocation2 + $0x60] sm:$0xff]
      %v1519 = vld [vmem:[#allocation2 + $0x68] sm:$0xff]
      %v1520 = vld [vmem:[#allocation2 + $0x70] sm:$0xff]
      %v1521 = vld [vmem:[#allocation2 + $0x78] sm:$0xff]
      %v1522 = vld [vmem:[#allocation2 + $0x80] sm:$0xff]
      %v1523 = vld [vmem:[#allocation2 + $0x88] sm:$0xff]
      %v1524 = vld [vmem:[#allocation2 + $0x90] sm:$0xff]
      %v1525 = vld [vmem:[#allocation2 + $0x98] sm:$0xff]
      %v1526 = vld [vmem:[#allocation2 + $0xa0] sm:$0xff]
      %v1527 = vld [vmem:[#allocation2 + $0xa8] sm:$0xff]
      %v1528 = vld [vmem:[#allocation2 + $0xb0] sm:$0xff]
      %v1529 = vld [vmem:[#allocation2 + $0xb8] sm:$0xff]
      %v1530 = vld [vmem:[#allocation2 + $0xc0] sm:$0xff]
      %v1531 = vld [vmem:[#allocation2 + $0xc8] sm:$0xff]
      %v1532 = vld [vmem:[#allocation2 + $0xd0] sm:$0xff]
      %v1533 = vld [vmem:[#allocation2 + $0xd8] sm:$0xff]
      %v1534 = vld [vmem:[#allocation2 + $0xe0] sm:$0xff]
      %v1535 = vld [vmem:[#allocation2 + $0xe8] sm:$0xff]
      %v1536 = vld [vmem:[#allocation2 + $0xf0] sm:$0xff]
      %v1537 = vld [vmem:[#allocation2 + $0xf8] sm:$0xff]
      %v1538 = vld [vmem:[#allocation2 + $0x100] sm:$0xff]
      %v1539 = vlaneseq
      %v1540 = vshrl.u32 %v1539, 7
      %v1541 = vsub.s32 1, %v1540
      %v1542 = vrot.slane %v763, %v1541
      %v1543 = vmul.f32 %v1507, %v1542
      %v1544 = vmul.f32 %v1508, %v1542
      %v1545 = vmul.f32 %v1509, %v1542
      %v1546 = vmul.f32 %v1510, %v1542
      %v1547 = vmul.f32 %v1511, %v1542
      %v1548 = vmul.f32 %v1512, %v1542
      %v1549 = vmul.f32 %v1513, %v1542
      %v1550 = vmul.f32 %v1514, %v1542
      %v1551 = vmul.f32 %v1515, %v1542
      %v1552 = vmul.f32 %v1516, %v1542
      %v1553 = vmul.f32 %v1517, %v1542
      %v1554 = vmul.f32 %v1518, %v1542
      %v1555 = vmul.f32 %v1519, %v1542
      %v1556 = vmul.f32 %v1520, %v1542
      %v1557 = vmul.f32 %v1521, %v1542
      %v1558 = vmul.f32 %v1522, %v1542
      %v1559 = vmul.f32 %v1523, %v1542
      %v1560 = vmul.f32 %v1524, %v1542
      %v1561 = vmul.f32 %v1525, %v1542
      %v1562 = vmul.f32 %v1526, %v1542
      %v1563 = vmul.f32 %v1527, %v1542
      %v1564 = vmul.f32 %v1528, %v1542
      %v1565 = vmul.f32 %v1529, %v1542
      %v1566 = vmul.f32 %v1530, %v1542
      %v1567 = vmul.f32 %v1531, %v1542
      %v1568 = vmul.f32 %v1532, %v1542
      %v1569 = vmul.f32 %v1533, %v1542
      %v1570 = vmul.f32 %v1534, %v1542
      %v1571 = vmul.f32 %v1535, %v1542
      %v1572 = vmul.f32 %v1536, %v1542
      %v1573 = vmul.f32 %v1537, %v1542
      %v1574 = vmul.f32 %v1538, %v1542
      %v1575 = vadd.f32 %v1475, %v1543
      %v1576 = vadd.f32 %v1476, %v1544
      %v1577 = vadd.f32 %v1477, %v1545
      %v1578 = vadd.f32 %v1478, %v1546
      %v1579 = vadd.f32 %v1479, %v1547
      %v1580 = vadd.f32 %v1480, %v1548
      %v1581 = vadd.f32 %v1481, %v1549
      %v1582 = vadd.f32 %v1482, %v1550
      %v1583 = vadd.f32 %v1483, %v1551
      %v1584 = vadd.f32 %v1484, %v1552
      %v1585 = vadd.f32 %v1485, %v1553
      %v1586 = vadd.f32 %v1486, %v1554
      %v1587 = vadd.f32 %v1487, %v1555
      %v1588 = vadd.f32 %v1488, %v1556
      %v1589 = vadd.f32 %v1489, %v1557
      %v1590 = vadd.f32 %v1490, %v1558
      %v1591 = vadd.f32 %v1491, %v1559
      %v1592 = vadd.f32 %v1492, %v1560
      %v1593 = vadd.f32 %v1493, %v1561
      %v1594 = vadd.f32 %v1494, %v1562
      %v1595 = vadd.f32 %v1495, %v1563
      %v1596 = vadd.f32 %v1496, %v1564
      %v1597 = vadd.f32 %v1497, %v1565
      %v1598 = vadd.f32 %v1498, %v1566
      %v1599 = vadd.f32 %v1499, %v1567
      %v1600 = vadd.f32 %v1500, %v1568
      %v1601 = vadd.f32 %v1501, %v1569
      %v1602 = vadd.f32 %v1502, %v1570
      %v1603 = vadd.f32 %v1503, %v1571
      %v1604 = vadd.f32 %v1504, %v1572
      %v1605 = vadd.f32 %v1505, %v1573
      %v1606 = vadd.f32 %v1506, %v1574
      %v1607 = vld [vmem:[#allocation2 + $0x9] sm:$0xff]
      %v1608 = vld [vmem:[#allocation2 + $0x11] sm:$0xff]
      %v1609 = vld [vmem:[#allocation2 + $0x19] sm:$0xff]
      %v1610 = vld [vmem:[#allocation2 + $0x21] sm:$0xff]
      %v1611 = vld [vmem:[#allocation2 + $0x29] sm:$0xff]
      %v1612 = vld [vmem:[#allocation2 + $0x31] sm:$0xff]
      %v1613 = vld [vmem:[#allocation2 + $0x39] sm:$0xff]
      %v1614 = vld [vmem:[#allocation2 + $0x41] sm:$0xff]
      %v1615 = vld [vmem:[#allocation2 + $0x49] sm:$0xff]
      %v1616 = vld [vmem:[#allocation2 + $0x51] sm:$0xff]
      %v1617 = vld [vmem:[#allocation2 + $0x59] sm:$0xff]
      %v1618 = vld [vmem:[#allocation2 + $0x61] sm:$0xff]
      %v1619 = vld [vmem:[#allocation2 + $0x69] sm:$0xff]
      %v1620 = vld [vmem:[#allocation2 + $0x71] sm:$0xff]
      %v1621 = vld [vmem:[#allocation2 + $0x79] sm:$0xff]
      %v1622 = vld [vmem:[#allocation2 + $0x81] sm:$0xff]
      %v1623 = vld [vmem:[#allocation2 + $0x89] sm:$0xff]
      %v1624 = vld [vmem:[#allocation2 + $0x91] sm:$0xff]
      %v1625 = vld [vmem:[#allocation2 + $0x99] sm:$0xff]
      %v1626 = vld [vmem:[#allocation2 + $0xa1] sm:$0xff]
      %v1627 = vld [vmem:[#allocation2 + $0xa9] sm:$0xff]
      %v1628 = vld [vmem:[#allocation2 + $0xb1] sm:$0xff]
      %v1629 = vld [vmem:[#allocation2 + $0xb9] sm:$0xff]
      %v1630 = vld [vmem:[#allocation2 + $0xc1] sm:$0xff]
      %v1631 = vld [vmem:[#allocation2 + $0xc9] sm:$0xff]
      %v1632 = vld [vmem:[#allocation2 + $0xd1] sm:$0xff]
      %v1633 = vld [vmem:[#allocation2 + $0xd9] sm:$0xff]
      %v1634 = vld [vmem:[#allocation2 + $0xe1] sm:$0xff]
      %v1635 = vld [vmem:[#allocation2 + $0xe9] sm:$0xff]
      %v1636 = vld [vmem:[#allocation2 + $0xf1] sm:$0xff]
      %v1637 = vld [vmem:[#allocation2 + $0xf9] sm:$0xff]
      %v1638 = vld [vmem:[#allocation2 + $0x101] sm:$0xff]
      %v1639 = vadd.s32 %v1151, 1
      %v1640 = vadd.s32 %v1152, 1
      %v1641 = vadd.s32 %v1153, 1
      %v1642 = vadd.s32 %v1154, 1
      %v1643 = vadd.s32 %v1155, 1
      %v1644 = vadd.s32 %v1156, 1
      %v1645 = vadd.s32 %v1157, 1
      %v1646 = vadd.s32 %v1158, 1
      %v1647 = vadd.s32 %v1159, 1
      %v1648 = vadd.s32 %v1160, 1
      %v1649 = vadd.s32 %v1161, 1
      %v1650 = vadd.s32 %v1162, 1
      %v1651 = vadd.s32 %v1163, 1
      %v1652 = vadd.s32 %v1164, 1
      %v1653 = vadd.s32 %v1165, 1
      %v1654 = vadd.s32 %v1166, 1
      %v1655 = vadd.s32 %v1167, 1
      %v1656 = vadd.s32 %v1168, 1
      %v1657 = vadd.s32 %v1169, 1
      %v1658 = vadd.s32 %v1170, 1
      %v1659 = vadd.s32 %v1171, 1
      %v1660 = vadd.s32 %v1172, 1
      %v1661 = vadd.s32 %v1173, 1
      %v1662 = vadd.s32 %v1174, 1
      %v1663 = vadd.s32 %v1175, 1
      %v1664 = vadd.s32 %v1176, 1
      %v1665 = vadd.s32 %v1177, 1
      %v1666 = vadd.s32 %v1178, 1
      %v1667 = vadd.s32 %v1179, 1
      %v1668 = vadd.s32 %v1180, 1
      %v1669 = vadd.s32 %v1181, 1
      %v1670 = vadd.s32 %v1182, 1
      %vm1671 = vcmp.ge.s32.totalorder %v1639, 0
      %vm1672 = vcmp.ge.s32.totalorder %v1640, 0
      %vm1673 = vcmp.ge.s32.totalorder %v1641, 0
      %vm1674 = vcmp.ge.s32.totalorder %v1642, 0
      %vm1675 = vcmp.ge.s32.totalorder %v1643, 0
      %vm1676 = vcmp.ge.s32.totalorder %v1644, 0
      %vm1677 = vcmp.ge.s32.totalorder %v1645, 0
      %vm1678 = vcmp.ge.s32.totalorder %v1646, 0
      %vm1679 = vcmp.ge.s32.totalorder %v1647, 0
      %vm1680 = vcmp.ge.s32.totalorder %v1648, 0
      %vm1681 = vcmp.ge.s32.totalorder %v1649, 0
      %vm1682 = vcmp.ge.s32.totalorder %v1650, 0
      %vm1683 = vcmp.ge.s32.totalorder %v1651, 0
      %vm1684 = vcmp.ge.s32.totalorder %v1652, 0
      %vm1685 = vcmp.ge.s32.totalorder %v1653, 0
      %vm1686 = vcmp.ge.s32.totalorder %v1654, 0
      %vm1687 = vcmp.ge.s32.totalorder %v1655, 0
      %vm1688 = vcmp.ge.s32.totalorder %v1656, 0
      %vm1689 = vcmp.ge.s32.totalorder %v1657, 0
      %vm1690 = vcmp.ge.s32.totalorder %v1658, 0
      %vm1691 = vcmp.ge.s32.totalorder %v1659, 0
      %vm1692 = vcmp.ge.s32.totalorder %v1660, 0
      %vm1693 = vcmp.ge.s32.totalorder %v1661, 0
      %vm1694 = vcmp.ge.s32.totalorder %v1662, 0
      %vm1695 = vcmp.ge.s32.totalorder %v1663, 0
      %vm1696 = vcmp.ge.s32.totalorder %v1664, 0
      %vm1697 = vcmp.ge.s32.totalorder %v1665, 0
      %vm1698 = vcmp.ge.s32.totalorder %v1666, 0
      %vm1699 = vcmp.ge.s32.totalorder %v1667, 0
      %vm1700 = vcmp.ge.s32.totalorder %v1668, 0
      %vm1701 = vcmp.ge.s32.totalorder %v1669, 0
      %vm1702 = vcmp.ge.s32.totalorder %v1670, 0
      %vm1703 = vcmp.lt.s32.totalorder %v1639, 16
      %vm1704 = vcmp.lt.s32.totalorder %v1640, 16
      %vm1705 = vcmp.lt.s32.totalorder %v1641, 16
      %vm1706 = vcmp.lt.s32.totalorder %v1642, 16
      %vm1707 = vcmp.lt.s32.totalorder %v1643, 16
      %vm1708 = vcmp.lt.s32.totalorder %v1644, 16
      %vm1709 = vcmp.lt.s32.totalorder %v1645, 16
      %vm1710 = vcmp.lt.s32.totalorder %v1646, 16
      %vm1711 = vcmp.lt.s32.totalorder %v1647, 16
      %vm1712 = vcmp.lt.s32.totalorder %v1648, 16
      %vm1713 = vcmp.lt.s32.totalorder %v1649, 16
      %vm1714 = vcmp.lt.s32.totalorder %v1650, 16
      %vm1715 = vcmp.lt.s32.totalorder %v1651, 16
      %vm1716 = vcmp.lt.s32.totalorder %v1652, 16
      %vm1717 = vcmp.lt.s32.totalorder %v1653, 16
      %vm1718 = vcmp.lt.s32.totalorder %v1654, 16
      %vm1719 = vcmp.lt.s32.totalorder %v1655, 16
      %vm1720 = vcmp.lt.s32.totalorder %v1656, 16
      %vm1721 = vcmp.lt.s32.totalorder %v1657, 16
      %vm1722 = vcmp.lt.s32.totalorder %v1658, 16
      %vm1723 = vcmp.lt.s32.totalorder %v1659, 16
      %vm1724 = vcmp.lt.s32.totalorder %v1660, 16
      %vm1725 = vcmp.lt.s32.totalorder %v1661, 16
      %vm1726 = vcmp.lt.s32.totalorder %v1662, 16
      %vm1727 = vcmp.lt.s32.totalorder %v1663, 16
      %vm1728 = vcmp.lt.s32.totalorder %v1664, 16
      %vm1729 = vcmp.lt.s32.totalorder %v1665, 16
      %vm1730 = vcmp.lt.s32.totalorder %v1666, 16
      %vm1731 = vcmp.lt.s32.totalorder %v1667, 16
      %vm1732 = vcmp.lt.s32.totalorder %v1668, 16
      %vm1733 = vcmp.lt.s32.totalorder %v1669, 16
      %vm1734 = vcmp.lt.s32.totalorder %v1670, 16
      %vm1735 = vmand %vm1671, %vm1703
      %vm1736 = vmand %vm1672, %vm1704
      %vm1737 = vmand %vm1673, %vm1705
      %vm1738 = vmand %vm1674, %vm1706
      %vm1739 = vmand %vm1675, %vm1707
      %vm1740 = vmand %vm1676, %vm1708
      %vm1741 = vmand %vm1677, %vm1709
      %vm1742 = vmand %vm1678, %vm1710
      %vm1743 = vmand %vm1679, %vm1711
      %vm1744 = vmand %vm1680, %vm1712
      %vm1745 = vmand %vm1681, %vm1713
      %vm1746 = vmand %vm1682, %vm1714
      %vm1747 = vmand %vm1683, %vm1715
      %vm1748 = vmand %vm1684, %vm1716
      %vm1749 = vmand %vm1685, %vm1717
      %vm1750 = vmand %vm1686, %vm1718
      %vm1751 = vmand %vm1687, %vm1719
      %vm1752 = vmand %vm1688, %vm1720
      %vm1753 = vmand %vm1689, %vm1721
      %vm1754 = vmand %vm1690, %vm1722
      %vm1755 = vmand %vm1691, %vm1723
      %vm1756 = vmand %vm1692, %vm1724
      %vm1757 = vmand %vm1693, %vm1725
      %vm1758 = vmand %vm1694, %vm1726
      %vm1759 = vmand %vm1695, %vm1727
      %vm1760 = vmand %vm1696, %vm1728
      %vm1761 = vmand %vm1697, %vm1729
      %vm1762 = vmand %vm1698, %vm1730
      %vm1763 = vmand %vm1699, %vm1731
      %vm1764 = vmand %vm1700, %vm1732
      %vm1765 = vmand %vm1701, %vm1733
      %vm1766 = vmand %vm1702, %vm1734
      %v1767 = vsel %vm1735, 1, 0
      %v1768 = vsel %vm1736, 1, 0
      %v1769 = vsel %vm1737, 1, 0
      %v1770 = vsel %vm1738, 1, 0
      %v1771 = vsel %vm1739, 1, 0
      %v1772 = vsel %vm1740, 1, 0
      %v1773 = vsel %vm1741, 1, 0
      %v1774 = vsel %vm1742, 1, 0
      %v1775 = vsel %vm1743, 1, 0
      %v1776 = vsel %vm1744, 1, 0
      %v1777 = vsel %vm1745, 1, 0
      %v1778 = vsel %vm1746, 1, 0
      %v1779 = vsel %vm1747, 1, 0
      %v1780 = vsel %vm1748, 1, 0
      %v1781 = vsel %vm1749, 1, 0
      %v1782 = vsel %vm1750, 1, 0
      %v1783 = vsel %vm1751, 1, 0
      %v1784 = vsel %vm1752, 1, 0
      %v1785 = vsel %vm1753, 1, 0
      %v1786 = vsel %vm1754, 1, 0
      %v1787 = vsel %vm1755, 1, 0
      %v1788 = vsel %vm1756, 1, 0
      %v1789 = vsel %vm1757, 1, 0
      %v1790 = vsel %vm1758, 1, 0
      %v1791 = vsel %vm1759, 1, 0
      %v1792 = vsel %vm1760, 1, 0
      %v1793 = vsel %vm1761, 1, 0
      %v1794 = vsel %vm1762, 1, 0
      %v1795 = vsel %vm1763, 1, 0
      %v1796 = vsel %vm1764, 1, 0
      %v1797 = vsel %vm1765, 1, 0
      %v1798 = vsel %vm1766, 1, 0
      %v1799 = vcvt.s32.f32 %v1767
      %v1800 = vcvt.s32.f32 %v1768
      %v1801 = vcvt.s32.f32 %v1769
      %v1802 = vcvt.s32.f32 %v1770
      %v1803 = vcvt.s32.f32 %v1771
      %v1804 = vcvt.s32.f32 %v1772
      %v1805 = vcvt.s32.f32 %v1773
      %v1806 = vcvt.s32.f32 %v1774
      %v1807 = vcvt.s32.f32 %v1775
      %v1808 = vcvt.s32.f32 %v1776
      %v1809 = vcvt.s32.f32 %v1777
      %v1810 = vcvt.s32.f32 %v1778
      %v1811 = vcvt.s32.f32 %v1779
      %v1812 = vcvt.s32.f32 %v1780
      %v1813 = vcvt.s32.f32 %v1781
      %v1814 = vcvt.s32.f32 %v1782
      %v1815 = vcvt.s32.f32 %v1783
      %v1816 = vcvt.s32.f32 %v1784
      %v1817 = vcvt.s32.f32 %v1785
      %v1818 = vcvt.s32.f32 %v1786
      %v1819 = vcvt.s32.f32 %v1787
      %v1820 = vcvt.s32.f32 %v1788
      %v1821 = vcvt.s32.f32 %v1789
      %v1822 = vcvt.s32.f32 %v1790
      %v1823 = vcvt.s32.f32 %v1791
      %v1824 = vcvt.s32.f32 %v1792
      %v1825 = vcvt.s32.f32 %v1793
      %v1826 = vcvt.s32.f32 %v1794
      %v1827 = vcvt.s32.f32 %v1795
      %v1828 = vcvt.s32.f32 %v1796
      %v1829 = vcvt.s32.f32 %v1797
      %v1830 = vcvt.s32.f32 %v1798
      %v1831 = vlaneseq
      %v1832 = vshrl.u32 %v1831, 7
      %v1833 = vsub.s32 2, %v1832
      %v1834 = vrot.slane %v763, %v1833
      %v1835 = vmul.f32 %v1834, %v1799
      %v1836 = vmul.f32 %v1834, %v1800
      %v1837 = vmul.f32 %v1834, %v1801
      %v1838 = vmul.f32 %v1834, %v1802
      %v1839 = vmul.f32 %v1834, %v1803
      %v1840 = vmul.f32 %v1834, %v1804
      %v1841 = vmul.f32 %v1834, %v1805
      %v1842 = vmul.f32 %v1834, %v1806
      %v1843 = vmul.f32 %v1834, %v1807
      %v1844 = vmul.f32 %v1834, %v1808
      %v1845 = vmul.f32 %v1834, %v1809
      %v1846 = vmul.f32 %v1834, %v1810
      %v1847 = vmul.f32 %v1834, %v1811
      %v1848 = vmul.f32 %v1834, %v1812
      %v1849 = vmul.f32 %v1834, %v1813
      %v1850 = vmul.f32 %v1834, %v1814
      %v1851 = vmul.f32 %v1834, %v1815
      %v1852 = vmul.f32 %v1834, %v1816
      %v1853 = vmul.f32 %v1834, %v1817
      %v1854 = vmul.f32 %v1834, %v1818
      %v1855 = vmul.f32 %v1834, %v1819
      %v1856 = vmul.f32 %v1834, %v1820
      %v1857 = vmul.f32 %v1834, %v1821
      %v1858 = vmul.f32 %v1834, %v1822
      %v1859 = vmul.f32 %v1834, %v1823
      %v1860 = vmul.f32 %v1834, %v1824
      %v1861 = vmul.f32 %v1834, %v1825
      %v1862 = vmul.f32 %v1834, %v1826
      %v1863 = vmul.f32 %v1834, %v1827
      %v1864 = vmul.f32 %v1834, %v1828
      %v1865 = vmul.f32 %v1834, %v1829
      %v1866 = vmul.f32 %v1834, %v1830
      %v1867 = vmul.f32 %v1607, %v1835
      %v1868 = vmul.f32 %v1608, %v1836
      %v1869 = vmul.f32 %v1609, %v1837
      %v1870 = vmul.f32 %v1610, %v1838
      %v1871 = vmul.f32 %v1611, %v1839
      %v1872 = vmul.f32 %v1612, %v1840
      %v1873 = vmul.f32 %v1613, %v1841
      %v1874 = vmul.f32 %v1614, %v1842
      %v1875 = vmul.f32 %v1615, %v1843
      %v1876 = vmul.f32 %v1616, %v1844
      %v1877 = vmul.f32 %v1617, %v1845
      %v1878 = vmul.f32 %v1618, %v1846
      %v1879 = vmul.f32 %v1619, %v1847
      %v1880 = vmul.f32 %v1620, %v1848
      %v1881 = vmul.f32 %v1621, %v1849
      %v1882 = vmul.f32 %v1622, %v1850
      %v1883 = vmul.f32 %v1623, %v1851
      %v1884 = vmul.f32 %v1624, %v1852
      %v1885 = vmul.f32 %v1625, %v1853
      %v1886 = vmul.f32 %v1626, %v1854
      %v1887 = vmul.f32 %v1627, %v1855
      %v1888 = vmul.f32 %v1628, %v1856
      %v1889 = vmul.f32 %v1629, %v1857
      %v1890 = vmul.f32 %v1630, %v1858
      %v1891 = vmul.f32 %v1631, %v1859
      %v1892 = vmul.f32 %v1632, %v1860
      %v1893 = vmul.f32 %v1633, %v1861
      %v1894 = vmul.f32 %v1634, %v1862
      %v1895 = vmul.f32 %v1635, %v1863
      %v1896 = vmul.f32 %v1636, %v1864
      %v1897 = vmul.f32 %v1637, %v1865
      %v1898 = vmul.f32 %v1638, %v1866
      %v1899 = vadd.f32 %v1575, %v1867
      %v1900 = vadd.f32 %v1576, %v1868
      %v1901 = vadd.f32 %v1577, %v1869
      %v1902 = vadd.f32 %v1578, %v1870
      %v1903 = vadd.f32 %v1579, %v1871
      %v1904 = vadd.f32 %v1580, %v1872
      %v1905 = vadd.f32 %v1581, %v1873
      %v1906 = vadd.f32 %v1582, %v1874
      %v1907 = vadd.f32 %v1583, %v1875
      %v1908 = vadd.f32 %v1584, %v1876
      %v1909 = vadd.f32 %v1585, %v1877
      %v1910 = vadd.f32 %v1586, %v1878
      %v1911 = vadd.f32 %v1587, %v1879
      %v1912 = vadd.f32 %v1588, %v1880
      %v1913 = vadd.f32 %v1589, %v1881
      %v1914 = vadd.f32 %v1590, %v1882
      %v1915 = vadd.f32 %v1591, %v1883
      %v1916 = vadd.f32 %v1592, %v1884
      %v1917 = vadd.f32 %v1593, %v1885
      %v1918 = vadd.f32 %v1594, %v1886
      %v1919 = vadd.f32 %v1595, %v1887
      %v1920 = vadd.f32 %v1596, %v1888
      %v1921 = vadd.f32 %v1597, %v1889
      %v1922 = vadd.f32 %v1598, %v1890
      %v1923 = vadd.f32 %v1599, %v1891
      %v1924 = vadd.f32 %v1600, %v1892
      %v1925 = vadd.f32 %v1601, %v1893
      %v1926 = vadd.f32 %v1602, %v1894
      %v1927 = vadd.f32 %v1603, %v1895
      %v1928 = vadd.f32 %v1604, %v1896
      %v1929 = vadd.f32 %v1605, %v1897
      %v1930 = vadd.f32 %v1606, %v1898
      %v1931 = vld [vmem:[#allocation2 + $0x107] sm:$0xff]
      %v1932 = vld [vmem:[#allocation2 + $0x10f] sm:$0xff]
      %v1933 = vlaneseq
      %v1934 = vshrl.u32 %v1933, 7
      %v1935 = vsub.s32 0, %v1934
      %v1936 = vrot.slane %v764, %v1935
      %v1937 = vmul.f32 %v1936, %v1375
      %v1938 = vmul.f32 %v1936, %v1376
      %v1939 = vmul.f32 %v1936, %v1377
      %v1940 = vmul.f32 %v1936, %v1378
      %v1941 = vmul.f32 %v1936, %v1379
      %v1942 = vmul.f32 %v1936, %v1380
      %v1943 = vmul.f32 %v1936, %v1381
      %v1944 = vmul.f32 %v1936, %v1382
      %v1945 = vmul.f32 %v1936, %v1383
      %v1946 = vmul.f32 %v1936, %v1384
      %v1947 = vmul.f32 %v1936, %v1385
      %v1948 = vmul.f32 %v1936, %v1386
      %v1949 = vmul.f32 %v1936, %v1387
      %v1950 = vmul.f32 %v1936, %v1388
      %v1951 = vmul.f32 %v1936, %v1389
      %v1952 = vmul.f32 %v1936, %v1390
      %v1953 = vmul.f32 %v1936, %v1391
      %v1954 = vmul.f32 %v1936, %v1392
      %v1955 = vmul.f32 %v1936, %v1393
      %v1956 = vmul.f32 %v1936, %v1394
      %v1957 = vmul.f32 %v1936, %v1395
      %v1958 = vmul.f32 %v1936, %v1396
      %v1959 = vmul.f32 %v1936, %v1397
      %v1960 = vmul.f32 %v1936, %v1398
      %v1961 = vmul.f32 %v1936, %v1399
      %v1962 = vmul.f32 %v1936, %v1400
      %v1963 = vmul.f32 %v1936, %v1401
      %v1964 = vmul.f32 %v1936, %v1402
      %v1965 = vmul.f32 %v1936, %v1403
      %v1966 = vmul.f32 %v1936, %v1404
      %v1967 = vmul.f32 %v1936, %v1405
      %v1968 = vmul.f32 %v1936, %v1406
      %v1969 = vmul.f32 %v1185, %v1937
      %v1970 = vmul.f32 %v1186, %v1938
      %v1971 = vmul.f32 %v1187, %v1939
      %v1972 = vmul.f32 %v1188, %v1940
      %v1973 = vmul.f32 %v1189, %v1941
      %v1974 = vmul.f32 %v1190, %v1942
      %v1975 = vmul.f32 %v1191, %v1943
      %v1976 = vmul.f32 %v1192, %v1944
      %v1977 = vmul.f32 %v1193, %v1945
      %v1978 = vmul.f32 %v1194, %v1946
      %v1979 = vmul.f32 %v1195, %v1947
      %v1980 = vmul.f32 %v1196, %v1948
      %v1981 = vmul.f32 %v1197, %v1949
      %v1982 = vmul.f32 %v1198, %v1950
      %v1983 = vmul.f32 %v1199, %v1951
      %v1984 = vmul.f32 %v1200, %v1952
      %v1985 = vmul.f32 %v1201, %v1953
      %v1986 = vmul.f32 %v1202, %v1954
      %v1987 = vmul.f32 %v1203, %v1955
      %v1988 = vmul.f32 %v1204, %v1956
      %v1989 = vmul.f32 %v1205, %v1957
      %v1990 = vmul.f32 %v1206, %v1958
      %v1991 = vmul.f32 %v1207, %v1959
      %v1992 = vmul.f32 %v1208, %v1960
      %v1993 = vmul.f32 %v1209, %v1961
      %v1994 = vmul.f32 %v1210, %v1962
      %v1995 = vmul.f32 %v1211, %v1963
      %v1996 = vmul.f32 %v1212, %v1964
      %v1997 = vmul.f32 %v1213, %v1965
      %v1998 = vmul.f32 %v1214, %v1966
      %v1999 = vmul.f32 %v1931, %v1967
      %v2000 = vmul.f32 %v1932, %v1968
      %v2001 = vadd.f32 %v1899, %v1969
      %v2002 = vadd.f32 %v1900, %v1970
      %v2003 = vadd.f32 %v1901, %v1971
      %v2004 = vadd.f32 %v1902, %v1972
      %v2005 = vadd.f32 %v1903, %v1973
      %v2006 = vadd.f32 %v1904, %v1974
      %v2007 = vadd.f32 %v1905, %v1975
      %v2008 = vadd.f32 %v1906, %v1976
      %v2009 = vadd.f32 %v1907, %v1977
      %v2010 = vadd.f32 %v1908, %v1978
      %v2011 = vadd.f32 %v1909, %v1979
      %v2012 = vadd.f32 %v1910, %v1980
      %v2013 = vadd.f32 %v1911, %v1981
      %v2014 = vadd.f32 %v1912, %v1982
      %v2015 = vadd.f32 %v1913, %v1983
      %v2016 = vadd.f32 %v1914, %v1984
      %v2017 = vadd.f32 %v1915, %v1985
      %v2018 = vadd.f32 %v1916, %v1986
      %v2019 = vadd.f32 %v1917, %v1987
      %v2020 = vadd.f32 %v1918, %v1988
      %v2021 = vadd.f32 %v1919, %v1989
      %v2022 = vadd.f32 %v1920, %v1990
      %v2023 = vadd.f32 %v1921, %v1991
      %v2024 = vadd.f32 %v1922, %v1992
      %v2025 = vadd.f32 %v1923, %v1993
      %v2026 = vadd.f32 %v1924, %v1994
      %v2027 = vadd.f32 %v1925, %v1995
      %v2028 = vadd.f32 %v1926, %v1996
      %v2029 = vadd.f32 %v1927, %v1997
      %v2030 = vadd.f32 %v1928, %v1998
      %v2031 = vadd.f32 %v1929, %v1999
      %v2032 = vadd.f32 %v1930, %v2000
      %v2033 = vld [vmem:[#allocation2 + $0x108] sm:$0xff]
      %v2034 = vld [vmem:[#allocation2 + $0x110] sm:$0xff]
      %v2035 = vlaneseq
      %v2036 = vshrl.u32 %v2035, 7
      %v2037 = vsub.s32 1, %v2036
      %v2038 = vrot.slane %v764, %v2037
      %v2039 = vmul.f32 %v1509, %v2038
      %v2040 = vmul.f32 %v1510, %v2038
      %v2041 = vmul.f32 %v1511, %v2038
      %v2042 = vmul.f32 %v1512, %v2038
      %v2043 = vmul.f32 %v1513, %v2038
      %v2044 = vmul.f32 %v1514, %v2038
      %v2045 = vmul.f32 %v1515, %v2038
      %v2046 = vmul.f32 %v1516, %v2038
      %v2047 = vmul.f32 %v1517, %v2038
      %v2048 = vmul.f32 %v1518, %v2038
      %v2049 = vmul.f32 %v1519, %v2038
      %v2050 = vmul.f32 %v1520, %v2038
      %v2051 = vmul.f32 %v1521, %v2038
      %v2052 = vmul.f32 %v1522, %v2038
      %v2053 = vmul.f32 %v1523, %v2038
      %v2054 = vmul.f32 %v1524, %v2038
      %v2055 = vmul.f32 %v1525, %v2038
      %v2056 = vmul.f32 %v1526, %v2038
      %v2057 = vmul.f32 %v1527, %v2038
      %v2058 = vmul.f32 %v1528, %v2038
      %v2059 = vmul.f32 %v1529, %v2038
      %v2060 = vmul.f32 %v1530, %v2038
      %v2061 = vmul.f32 %v1531, %v2038
      %v2062 = vmul.f32 %v1532, %v2038
      %v2063 = vmul.f32 %v1533, %v2038
      %v2064 = vmul.f32 %v1534, %v2038
      %v2065 = vmul.f32 %v1535, %v2038
      %v2066 = vmul.f32 %v1536, %v2038
      %v2067 = vmul.f32 %v1537, %v2038
      %v2068 = vmul.f32 %v1538, %v2038
      %v2069 = vmul.f32 %v2033, %v2038
      %v2070 = vmul.f32 %v2034, %v2038
      %v2071 = vadd.f32 %v2001, %v2039
      %v2072 = vadd.f32 %v2002, %v2040
      %v2073 = vadd.f32 %v2003, %v2041
      %v2074 = vadd.f32 %v2004, %v2042
      %v2075 = vadd.f32 %v2005, %v2043
      %v2076 = vadd.f32 %v2006, %v2044
      %v2077 = vadd.f32 %v2007, %v2045
      %v2078 = vadd.f32 %v2008, %v2046
      %v2079 = vadd.f32 %v2009, %v2047
      %v2080 = vadd.f32 %v2010, %v2048
      %v2081 = vadd.f32 %v2011, %v2049
      %v2082 = vadd.f32 %v2012, %v2050
      %v2083 = vadd.f32 %v2013, %v2051
      %v2084 = vadd.f32 %v2014, %v2052
      %v2085 = vadd.f32 %v2015, %v2053
      %v2086 = vadd.f32 %v2016, %v2054
      %v2087 = vadd.f32 %v2017, %v2055
      %v2088 = vadd.f32 %v2018, %v2056
      %v2089 = vadd.f32 %v2019, %v2057
      %v2090 = vadd.f32 %v2020, %v2058
      %v2091 = vadd.f32 %v2021, %v2059
      %v2092 = vadd.f32 %v2022, %v2060
      %v2093 = vadd.f32 %v2023, %v2061
      %v2094 = vadd.f32 %v2024, %v2062
      %v2095 = vadd.f32 %v2025, %v2063
      %v2096 = vadd.f32 %v2026, %v2064
      %v2097 = vadd.f32 %v2027, %v2065
      %v2098 = vadd.f32 %v2028, %v2066
      %v2099 = vadd.f32 %v2029, %v2067
      %v2100 = vadd.f32 %v2030, %v2068
      %v2101 = vadd.f32 %v2031, %v2069
      %v2102 = vadd.f32 %v2032, %v2070
      %v2103 = vld [vmem:[#allocation2 + $0x109] sm:$0xff]
      %v2104 = vld [vmem:[#allocation2 + $0x111] sm:$0xff]
      %v2105 = vlaneseq
      %v2106 = vshrl.u32 %v2105, 7
      %v2107 = vsub.s32 2, %v2106
      %v2108 = vrot.slane %v764, %v2107
      %v2109 = vmul.f32 %v2108, %v1799
      %v2110 = vmul.f32 %v2108, %v1800
      %v2111 = vmul.f32 %v2108, %v1801
      %v2112 = vmul.f32 %v2108, %v1802
      %v2113 = vmul.f32 %v2108, %v1803
      %v2114 = vmul.f32 %v2108, %v1804
      %v2115 = vmul.f32 %v2108, %v1805
      %v2116 = vmul.f32 %v2108, %v1806
      %v2117 = vmul.f32 %v2108, %v1807
      %v2118 = vmul.f32 %v2108, %v1808
      %v2119 = vmul.f32 %v2108, %v1809
      %v2120 = vmul.f32 %v2108, %v1810
      %v2121 = vmul.f32 %v2108, %v1811
      %v2122 = vmul.f32 %v2108, %v1812
      %v2123 = vmul.f32 %v2108, %v1813
      %v2124 = vmul.f32 %v2108, %v1814
      %v2125 = vmul.f32 %v2108, %v1815
      %v2126 = vmul.f32 %v2108, %v1816
      %v2127 = vmul.f32 %v2108, %v1817
      %v2128 = vmul.f32 %v2108, %v1818
      %v2129 = vmul.f32 %v2108, %v1819
      %v2130 = vmul.f32 %v2108, %v1820
      %v2131 = vmul.f32 %v2108, %v1821
      %v2132 = vmul.f32 %v2108, %v1822
      %v2133 = vmul.f32 %v2108, %v1823
      %v2134 = vmul.f32 %v2108, %v1824
      %v2135 = vmul.f32 %v2108, %v1825
      %v2136 = vmul.f32 %v2108, %v1826
      %v2137 = vmul.f32 %v2108, %v1827
      %v2138 = vmul.f32 %v2108, %v1828
      %v2139 = vmul.f32 %v2108, %v1829
      %v2140 = vmul.f32 %v2108, %v1830
      %v2141 = vmul.f32 %v1609, %v2109
      %v2142 = vmul.f32 %v1610, %v2110
      %v2143 = vmul.f32 %v1611, %v2111
      %v2144 = vmul.f32 %v1612, %v2112
      %v2145 = vmul.f32 %v1613, %v2113
      %v2146 = vmul.f32 %v1614, %v2114
      %v2147 = vmul.f32 %v1615, %v2115
      %v2148 = vmul.f32 %v1616, %v2116
      %v2149 = vmul.f32 %v1617, %v2117
      %v2150 = vmul.f32 %v1618, %v2118
      %v2151 = vmul.f32 %v1619, %v2119
      %v2152 = vmul.f32 %v1620, %v2120
      %v2153 = vmul.f32 %v1621, %v2121
      %v2154 = vmul.f32 %v1622, %v2122
      %v2155 = vmul.f32 %v1623, %v2123
      %v2156 = vmul.f32 %v1624, %v2124
      %v2157 = vmul.f32 %v1625, %v2125
      %v2158 = vmul.f32 %v1626, %v2126
      %v2159 = vmul.f32 %v1627, %v2127
      %v2160 = vmul.f32 %v1628, %v2128
      %v2161 = vmul.f32 %v1629, %v2129
      %v2162 = vmul.f32 %v1630, %v2130
      %v2163 = vmul.f32 %v1631, %v2131
      %v2164 = vmul.f32 %v1632, %v2132
      %v2165 = vmul.f32 %v1633, %v2133
      %v2166 = vmul.f32 %v1634, %v2134
      %v2167 = vmul.f32 %v1635, %v2135
      %v2168 = vmul.f32 %v1636, %v2136
      %v2169 = vmul.f32 %v1637, %v2137
      %v2170 = vmul.f32 %v1638, %v2138
      %v2171 = vmul.f32 %v2103, %v2139
      %v2172 = vmul.f32 %v2104, %v2140
      %v2173 = vadd.f32 %v2071, %v2141
      %v2174 = vadd.f32 %v2072, %v2142
      %v2175 = vadd.f32 %v2073, %v2143
      %v2176 = vadd.f32 %v2074, %v2144
      %v2177 = vadd.f32 %v2075, %v2145
      %v2178 = vadd.f32 %v2076, %v2146
      %v2179 = vadd.f32 %v2077, %v2147
      %v2180 = vadd.f32 %v2078, %v2148
      %v2181 = vadd.f32 %v2079, %v2149
      %v2182 = vadd.f32 %v2080, %v2150
      %v2183 = vadd.f32 %v2081, %v2151
      %v2184 = vadd.f32 %v2082, %v2152
      %v2185 = vadd.f32 %v2083, %v2153
      %v2186 = vadd.f32 %v2084, %v2154
      %v2187 = vadd.f32 %v2085, %v2155
      %v2188 = vadd.f32 %v2086, %v2156
      %v2189 = vadd.f32 %v2087, %v2157
      %v2190 = vadd.f32 %v2088, %v2158
      %v2191 = vadd.f32 %v2089, %v2159
      %v2192 = vadd.f32 %v2090, %v2160
      %v2193 = vadd.f32 %v2091, %v2161
      %v2194 = vadd.f32 %v2092, %v2162
      %v2195 = vadd.f32 %v2093, %v2163
      %v2196 = vadd.f32 %v2094, %v2164
      %v2197 = vadd.f32 %v2095, %v2165
      %v2198 = vadd.f32 %v2096, %v2166
      %v2199 = vadd.f32 %v2097, %v2167
      %v2200 = vadd.f32 %v2098, %v2168
      %v2201 = vadd.f32 %v2099, %v2169
      %v2202 = vadd.f32 %v2100, %v2170
      %v2203 = vadd.f32 %v2101, %v2171
      %v2204 = vadd.f32 %v2102, %v2172
      %v2205 = vld [vmem:[#allocation2 + $0x117] sm:$0xff]
      %v2206 = vld [vmem:[#allocation2 + $0x11f] sm:$0xff]
      %v2207 = vlaneseq
      %v2208 = vshrl.u32 %v2207, 7
      %v2209 = vsub.s32 0, %v2208
      %v2210 = vrot.slane %v765, %v2209
      %v2211 = vmul.f32 %v2210, %v1375
      %v2212 = vmul.f32 %v2210, %v1376
      %v2213 = vmul.f32 %v2210, %v1377
      %v2214 = vmul.f32 %v2210, %v1378
      %v2215 = vmul.f32 %v2210, %v1379
      %v2216 = vmul.f32 %v2210, %v1380
      %v2217 = vmul.f32 %v2210, %v1381
      %v2218 = vmul.f32 %v2210, %v1382
      %v2219 = vmul.f32 %v2210, %v1383
      %v2220 = vmul.f32 %v2210, %v1384
      %v2221 = vmul.f32 %v2210, %v1385
      %v2222 = vmul.f32 %v2210, %v1386
      %v2223 = vmul.f32 %v2210, %v1387
      %v2224 = vmul.f32 %v2210, %v1388
      %v2225 = vmul.f32 %v2210, %v1389
      %v2226 = vmul.f32 %v2210, %v1390
      %v2227 = vmul.f32 %v2210, %v1391
      %v2228 = vmul.f32 %v2210, %v1392
      %v2229 = vmul.f32 %v2210, %v1393
      %v2230 = vmul.f32 %v2210, %v1394
      %v2231 = vmul.f32 %v2210, %v1395
      %v2232 = vmul.f32 %v2210, %v1396
      %v2233 = vmul.f32 %v2210, %v1397
      %v2234 = vmul.f32 %v2210, %v1398
      %v2235 = vmul.f32 %v2210, %v1399
      %v2236 = vmul.f32 %v2210, %v1400
      %v2237 = vmul.f32 %v2210, %v1401
      %v2238 = vmul.f32 %v2210, %v1402
      %v2239 = vmul.f32 %v2210, %v1403
      %v2240 = vmul.f32 %v2210, %v1404
      %v2241 = vmul.f32 %v2210, %v1405
      %v2242 = vmul.f32 %v2210, %v1406
      %v2243 = vmul.f32 %v1187, %v2211
      %v2244 = vmul.f32 %v1188, %v2212
      %v2245 = vmul.f32 %v1189, %v2213
      %v2246 = vmul.f32 %v1190, %v2214
      %v2247 = vmul.f32 %v1191, %v2215
      %v2248 = vmul.f32 %v1192, %v2216
      %v2249 = vmul.f32 %v1193, %v2217
      %v2250 = vmul.f32 %v1194, %v2218
      %v2251 = vmul.f32 %v1195, %v2219
      %v2252 = vmul.f32 %v1196, %v2220
      %v2253 = vmul.f32 %v1197, %v2221
      %v2254 = vmul.f32 %v1198, %v2222
      %v2255 = vmul.f32 %v1199, %v2223
      %v2256 = vmul.f32 %v1200, %v2224
      %v2257 = vmul.f32 %v1201, %v2225
      %v2258 = vmul.f32 %v1202, %v2226
      %v2259 = vmul.f32 %v1203, %v2227
      %v2260 = vmul.f32 %v1204, %v2228
      %v2261 = vmul.f32 %v1205, %v2229
      %v2262 = vmul.f32 %v1206, %v2230
      %v2263 = vmul.f32 %v1207, %v2231
      %v2264 = vmul.f32 %v1208, %v2232
      %v2265 = vmul.f32 %v1209, %v2233
      %v2266 = vmul.f32 %v1210, %v2234
      %v2267 = vmul.f32 %v1211, %v2235
      %v2268 = vmul.f32 %v1212, %v2236
      %v2269 = vmul.f32 %v1213, %v2237
      %v2270 = vmul.f32 %v1214, %v2238
      %v2271 = vmul.f32 %v1931, %v2239
      %v2272 = vmul.f32 %v1932, %v2240
      %v2273 = vmul.f32 %v2205, %v2241
      %v2274 = vmul.f32 %v2206, %v2242
      %v2275 = vadd.f32 %v2173, %v2243
      %v2276 = vadd.f32 %v2174, %v2244
      %v2277 = vadd.f32 %v2175, %v2245
      %v2278 = vadd.f32 %v2176, %v2246
      %v2279 = vadd.f32 %v2177, %v2247
      %v2280 = vadd.f32 %v2178, %v2248
      %v2281 = vadd.f32 %v2179, %v2249
      %v2282 = vadd.f32 %v2180, %v2250
      %v2283 = vadd.f32 %v2181, %v2251
      %v2284 = vadd.f32 %v2182, %v2252
      %v2285 = vadd.f32 %v2183, %v2253
      %v2286 = vadd.f32 %v2184, %v2254
      %v2287 = vadd.f32 %v2185, %v2255
      %v2288 = vadd.f32 %v2186, %v2256
      %v2289 = vadd.f32 %v2187, %v2257
      %v2290 = vadd.f32 %v2188, %v2258
      %v2291 = vadd.f32 %v2189, %v2259
      %v2292 = vadd.f32 %v2190, %v2260
      %v2293 = vadd.f32 %v2191, %v2261
      %v2294 = vadd.f32 %v2192, %v2262
      %v2295 = vadd.f32 %v2193, %v2263
      %v2296 = vadd.f32 %v2194, %v2264
      %v2297 = vadd.f32 %v2195, %v2265
      %v2298 = vadd.f32 %v2196, %v2266
      %v2299 = vadd.f32 %v2197, %v2267
      %v2300 = vadd.f32 %v2198, %v2268
      %v2301 = vadd.f32 %v2199, %v2269
      %v2302 = vadd.f32 %v2200, %v2270
      %v2303 = vadd.f32 %v2201, %v2271
      %v2304 = vadd.f32 %v2202, %v2272
      %v2305 = vadd.f32 %v2203, %v2273
      %v2306 = vadd.f32 %v2204, %v2274
      %v2307 = vld [vmem:[#allocation2 + $0x118] sm:$0xff]
      %v2308 = vld [vmem:[#allocation2 + $0x120] sm:$0xff]
      %v2309 = vlaneseq
      %v2310 = vshrl.u32 %v2309, 7
      %v2311 = vsub.s32 1, %v2310
      %v2312 = vrot.slane %v765, %v2311
      %v2313 = vmul.f32 %v1511, %v2312
      %v2314 = vmul.f32 %v1512, %v2312
      %v2315 = vmul.f32 %v1513, %v2312
      %v2316 = vmul.f32 %v1514, %v2312
      %v2317 = vmul.f32 %v1515, %v2312
      %v2318 = vmul.f32 %v1516, %v2312
      %v2319 = vmul.f32 %v1517, %v2312
      %v2320 = vmul.f32 %v1518, %v2312
      %v2321 = vmul.f32 %v1519, %v2312
      %v2322 = vmul.f32 %v1520, %v2312
      %v2323 = vmul.f32 %v1521, %v2312
      %v2324 = vmul.f32 %v1522, %v2312
      %v2325 = vmul.f32 %v1523, %v2312
      %v2326 = vmul.f32 %v1524, %v2312
      %v2327 = vmul.f32 %v1525, %v2312
      %v2328 = vmul.f32 %v1526, %v2312
      %v2329 = vmul.f32 %v1527, %v2312
      %v2330 = vmul.f32 %v1528, %v2312
      %v2331 = vmul.f32 %v1529, %v2312
      %v2332 = vmul.f32 %v1530, %v2312
      %v2333 = vmul.f32 %v1531, %v2312
      %v2334 = vmul.f32 %v1532, %v2312
      %v2335 = vmul.f32 %v1533, %v2312
      %v2336 = vmul.f32 %v1534, %v2312
      %v2337 = vmul.f32 %v1535, %v2312
      %v2338 = vmul.f32 %v1536, %v2312
      %v2339 = vmul.f32 %v1537, %v2312
      %v2340 = vmul.f32 %v1538, %v2312
      %v2341 = vmul.f32 %v2033, %v2312
      %v2342 = vmul.f32 %v2034, %v2312
      %v2343 = vmul.f32 %v2307, %v2312
      %v2344 = vmul.f32 %v2308, %v2312
      %v2345 = vadd.f32 %v2275, %v2313
      %v2346 = vadd.f32 %v2276, %v2314
      %v2347 = vadd.f32 %v2277, %v2315
      %v2348 = vadd.f32 %v2278, %v2316
      %v2349 = vadd.f32 %v2279, %v2317
      %v2350 = vadd.f32 %v2280, %v2318
      %v2351 = vadd.f32 %v2281, %v2319
      %v2352 = vadd.f32 %v2282, %v2320
      %v2353 = vadd.f32 %v2283, %v2321
      %v2354 = vadd.f32 %v2284, %v2322
      %v2355 = vadd.f32 %v2285, %v2323
      %v2356 = vadd.f32 %v2286, %v2324
      %v2357 = vadd.f32 %v2287, %v2325
      %v2358 = vadd.f32 %v2288, %v2326
      %v2359 = vadd.f32 %v2289, %v2327
      %v2360 = vadd.f32 %v2290, %v2328
      %v2361 = vadd.f32 %v2291, %v2329
      %v2362 = vadd.f32 %v2292, %v2330
      %v2363 = vadd.f32 %v2293, %v2331
      %v2364 = vadd.f32 %v2294, %v2332
      %v2365 = vadd.f32 %v2295, %v2333
      %v2366 = vadd.f32 %v2296, %v2334
      %v2367 = vadd.f32 %v2297, %v2335
      %v2368 = vadd.f32 %v2298, %v2336
      %v2369 = vadd.f32 %v2299, %v2337
      %v2370 = vadd.f32 %v2300, %v2338
      %v2371 = vadd.f32 %v2301, %v2339
      %v2372 = vadd.f32 %v2302, %v2340
      %v2373 = vadd.f32 %v2303, %v2341
      %v2374 = vadd.f32 %v2304, %v2342
      %v2375 = vadd.f32 %v2305, %v2343
      %v2376 = vadd.f32 %v2306, %v2344
      %v2377 = vld [vmem:[#allocation2 + $0x119] sm:$0xff]
      %v2378 = vld [vmem:[#allocation2 + $0x121] sm:$0xff]
      %v2379 = vlaneseq
      %v2380 = vshrl.u32 %v2379, 7
      %v2381 = vsub.s32 2, %v2380
      %v2382 = vrot.slane %v765, %v2381
      %v2383 = vmul.f32 %v2382, %v1799
      %v2384 = vmul.f32 %v2382, %v1800
      %v2385 = vmul.f32 %v2382, %v1801
      %v2386 = vmul.f32 %v2382, %v1802
      %v2387 = vmul.f32 %v2382, %v1803
      %v2388 = vmul.f32 %v2382, %v1804
      %v2389 = vmul.f32 %v2382, %v1805
      %v2390 = vmul.f32 %v2382, %v1806
      %v2391 = vmul.f32 %v2382, %v1807
      %v2392 = vmul.f32 %v2382, %v1808
      %v2393 = vmul.f32 %v2382, %v1809
      %v2394 = vmul.f32 %v2382, %v1810
      %v2395 = vmul.f32 %v2382, %v1811
      %v2396 = vmul.f32 %v2382, %v1812
      %v2397 = vmul.f32 %v2382, %v1813
      %v2398 = vmul.f32 %v2382, %v1814
      %v2399 = vmul.f32 %v2382, %v1815
      %v2400 = vmul.f32 %v2382, %v1816
      %v2401 = vmul.f32 %v2382, %v1817
      %v2402 = vmul.f32 %v2382, %v1818
      %v2403 = vmul.f32 %v2382, %v1819
      %v2404 = vmul.f32 %v2382, %v1820
      %v2405 = vmul.f32 %v2382, %v1821
      %v2406 = vmul.f32 %v2382, %v1822
      %v2407 = vmul.f32 %v2382, %v1823
      %v2408 = vmul.f32 %v2382, %v1824
      %v2409 = vmul.f32 %v2382, %v1825
      %v2410 = vmul.f32 %v2382, %v1826
      %v2411 = vmul.f32 %v2382, %v1827
      %v2412 = vmul.f32 %v2382, %v1828
      %v2413 = vmul.f32 %v2382, %v1829
      %v2414 = vmul.f32 %v2382, %v1830
      %v2415 = vmul.f32 %v1611, %v2383
      %v2416 = vmul.f32 %v1612, %v2384
      %v2417 = vmul.f32 %v1613, %v2385
      %v2418 = vmul.f32 %v1614, %v2386
      %v2419 = vmul.f32 %v1615, %v2387
      %v2420 = vmul.f32 %v1616, %v2388
      %v2421 = vmul.f32 %v1617, %v2389
      %v2422 = vmul.f32 %v1618, %v2390
      %v2423 = vmul.f32 %v1619, %v2391
      %v2424 = vmul.f32 %v1620, %v2392
      %v2425 = vmul.f32 %v1621, %v2393
      %v2426 = vmul.f32 %v1622, %v2394
      %v2427 = vmul.f32 %v1623, %v2395
      %v2428 = vmul.f32 %v1624, %v2396
      %v2429 = vmul.f32 %v1625, %v2397
      %v2430 = vmul.f32 %v1626, %v2398
      %v2431 = vmul.f32 %v1627, %v2399
      %v2432 = vmul.f32 %v1628, %v2400
      %v2433 = vmul.f32 %v1629, %v2401
      %v2434 = vmul.f32 %v1630, %v2402
      %v2435 = vmul.f32 %v1631, %v2403
      %v2436 = vmul.f32 %v1632, %v2404
      %v2437 = vmul.f32 %v1633, %v2405
      %v2438 = vmul.f32 %v1634, %v2406
      %v2439 = vmul.f32 %v1635, %v2407
      %v2440 = vmul.f32 %v1636, %v2408
      %v2441 = vmul.f32 %v1637, %v2409
      %v2442 = vmul.f32 %v1638, %v2410
      %v2443 = vmul.f32 %v2103, %v2411
      %v2444 = vmul.f32 %v2104, %v2412
      %v2445 = vmul.f32 %v2377, %v2413
      %v2446 = vmul.f32 %v2378, %v2414
      %v2447 = vadd.f32 %v2345, %v2415
      %v2448 = vadd.f32 %v2346, %v2416
      %v2449 = vadd.f32 %v2347, %v2417
      %v2450 = vadd.f32 %v2348, %v2418
      %v2451 = vadd.f32 %v2349, %v2419
      %v2452 = vadd.f32 %v2350, %v2420
      %v2453 = vadd.f32 %v2351, %v2421
      %v2454 = vadd.f32 %v2352, %v2422
      %v2455 = vadd.f32 %v2353, %v2423
      %v2456 = vadd.f32 %v2354, %v2424
      %v2457 = vadd.f32 %v2355, %v2425
      %v2458 = vadd.f32 %v2356, %v2426
      %v2459 = vadd.f32 %v2357, %v2427
      %v2460 = vadd.f32 %v2358, %v2428
      %v2461 = vadd.f32 %v2359, %v2429
      %v2462 = vadd.f32 %v2360, %v2430
      %v2463 = vadd.f32 %v2361, %v2431
      %v2464 = vadd.f32 %v2362, %v2432
      %v2465 = vadd.f32 %v2363, %v2433
      %v2466 = vadd.f32 %v2364, %v2434
      %v2467 = vadd.f32 %v2365, %v2435
      %v2468 = vadd.f32 %v2366, %v2436
      %v2469 = vadd.f32 %v2367, %v2437
      %v2470 = vadd.f32 %v2368, %v2438
      %v2471 = vadd.f32 %v2369, %v2439
      %v2472 = vadd.f32 %v2370, %v2440
      %v2473 = vadd.f32 %v2371, %v2441
      %v2474 = vadd.f32 %v2372, %v2442
      %v2475 = vadd.f32 %v2373, %v2443
      %v2476 = vadd.f32 %v2374, %v2444
      %v2477 = vadd.f32 %v2375, %v2445
      %v2478 = vadd.f32 %v2376, %v2446
      %v2479 = vld [vmem:[%s4] sm:$0x1]
      %v2481 = vlaneseq
      %v2482 = vshrl.u32 %v2481, 7
      %v2483 = vsub.s32 0, %v2482
      %v2484 = vrot.slane %v2479, %v2483
      %v2486 = vadd.f32 %v2447, %v2484
      %v2487 = vadd.f32 %v2448, %v2484
      %v2488 = vadd.f32 %v2449, %v2484
      %v2489 = vadd.f32 %v2450, %v2484
      %v2490 = vadd.f32 %v2451, %v2484
      %v2491 = vadd.f32 %v2452, %v2484
      %v2492 = vadd.f32 %v2453, %v2484
      %v2493 = vadd.f32 %v2454, %v2484
      %v2494 = vadd.f32 %v2455, %v2484
      %v2495 = vadd.f32 %v2456, %v2484
      %v2496 = vadd.f32 %v2457, %v2484
      %v2497 = vadd.f32 %v2458, %v2484
      %v2498 = vadd.f32 %v2459, %v2484
      %v2499 = vadd.f32 %v2460, %v2484
      %v2500 = vadd.f32 %v2461, %v2484
      %v2501 = vadd.f32 %v2462, %v2484
      %v2502 = vadd.f32 %v2463, %v2484
      %v2503 = vadd.f32 %v2464, %v2484
      %v2504 = vadd.f32 %v2465, %v2484
      %v2505 = vadd.f32 %v2466, %v2484
      %v2506 = vadd.f32 %v2467, %v2484
      %v2507 = vadd.f32 %v2468, %v2484
      %v2508 = vadd.f32 %v2469, %v2484
      %v2509 = vadd.f32 %v2470, %v2484
      %v2510 = vadd.f32 %v2471, %v2484
      %v2511 = vadd.f32 %v2472, %v2484
      %v2512 = vadd.f32 %v2473, %v2484
      %v2513 = vadd.f32 %v2474, %v2484
      %v2514 = vadd.f32 %v2475, %v2484
      %v2515 = vadd.f32 %v2476, %v2484
      %v2516 = vadd.f32 %v2477, %v2484
      %v2517 = vadd.f32 %v2478, %v2484
      %v2518 = vadd.f32 %v2486, 3.0
      %v2519 = vadd.f32 %v2487, 3.0
      %v2520 = vadd.f32 %v2488, 3.0
      %v2521 = vadd.f32 %v2489, 3.0
      %v2522 = vadd.f32 %v2490, 3.0
      %v2523 = vadd.f32 %v2491, 3.0
      %v2524 = vadd.f32 %v2492, 3.0
      %v2525 = vadd.f32 %v2493, 3.0
      %v2526 = vadd.f32 %v2494, 3.0
      %v2527 = vadd.f32 %v2495, 3.0
      %v2528 = vadd.f32 %v2496, 3.0
      %v2529 = vadd.f32 %v2497, 3.0
      %v2530 = vadd.f32 %v2498, 3.0
      %v2531 = vadd.f32 %v2499, 3.0
      %v2532 = vadd.f32 %v2500, 3.0
      %v2533 = vadd.f32 %v2501, 3.0
      %v2534 = vadd.f32 %v2502, 3.0
      %v2535 = vadd.f32 %v2503, 3.0
      %v2536 = vadd.f32 %v2504, 3.0
      %v2537 = vadd.f32 %v2505, 3.0
      %v2538 = vadd.f32 %v2506, 3.0
      %v2539 = vadd.f32 %v2507, 3.0
      %v2540 = vadd.f32 %v2508, 3.0
      %v2541 = vadd.f32 %v2509, 3.0
      %v2542 = vadd.f32 %v2510, 3.0
      %v2543 = vadd.f32 %v2511, 3.0
      %v2544 = vadd.f32 %v2512, 3.0
      %v2545 = vadd.f32 %v2513, 3.0
      %v2546 = vadd.f32 %v2514, 3.0
      %v2547 = vadd.f32 %v2515, 3.0
      %v2548 = vadd.f32 %v2516, 3.0
      %v2549 = vadd.f32 %v2517, 3.0
      %v2550 = vmax.f32 %v2518, 0.0
      %v2551 = vmax.f32 %v2519, 0.0
      %v2552 = vmax.f32 %v2520, 0.0
      %v2553 = vmax.f32 %v2521, 0.0
      %v2554 = vmax.f32 %v2522, 0.0
      %v2555 = vmax.f32 %v2523, 0.0
      %v2556 = vmax.f32 %v2524, 0.0
      %v2557 = vmax.f32 %v2525, 0.0
      %v2558 = vmax.f32 %v2526, 0.0
      %v2559 = vmax.f32 %v2527, 0.0
      %v2560 = vmax.f32 %v2528, 0.0
      %v2561 = vmax.f32 %v2529, 0.0
      %v2562 = vmax.f32 %v2530, 0.0
      %v2563 = vmax.f32 %v2531, 0.0
      %v2564 = vmax.f32 %v2532, 0.0
      %v2565 = vmax.f32 %v2533, 0.0
      %v2566 = vmax.f32 %v2534, 0.0
      %v2567 = vmax.f32 %v2535, 0.0
      %v2568 = vmax.f32 %v2536, 0.0
      %v2569 = vmax.f32 %v2537, 0.0
      %v2570 = vmax.f32 %v2538, 0.0
      %v2571 = vmax.f32 %v2539, 0.0
      %v2572 = vmax.f32 %v2540, 0.0
      %v2573 = vmax.f32 %v2541, 0.0
      %v2574 = vmax.f32 %v2542, 0.0
      %v2575 = vmax.f32 %v2543, 0.0
      %v2576 = vmax.f32 %v2544, 0.0
      %v2577 = vmax.f32 %v2545, 0.0
      %v2578 = vmax.f32 %v2546, 0.0
      %v2579 = vmax.f32 %v2547, 0.0
      %v2580 = vmax.f32 %v2548, 0.0
      %v2581 = vmax.f32 %v2549, 0.0
      %v2582 = vmin.f32 %v2550, 6.0
      %v2583 = vmin.f32 %v2551, 6.0
      %v2584 = vmin.f32 %v2552, 6.0
      %v2585 = vmin.f32 %v2553, 6.0
      %v2586 = vmin.f32 %v2554, 6.0
      %v2587 = vmin.f32 %v2555, 6.0
      %v2588 = vmin.f32 %v2556, 6.0
      %v2589 = vmin.f32 %v2557, 6.0
      %v2590 = vmin.f32 %v2558, 6.0
      %v2591 = vmin.f32 %v2559, 6.0
      %v2592 = vmin.f32 %v2560, 6.0
      %v2593 = vmin.f32 %v2561, 6.0
      %v2594 = vmin.f32 %v2562, 6.0
      %v2595 = vmin.f32 %v2563, 6.0
      %v2596 = vmin.f32 %v2564, 6.0
      %v2597 = vmin.f32 %v2565, 6.0
      %v2598 = vmin.f32 %v2566, 6.0
      %v2599 = vmin.f32 %v2567, 6.0
      %v2600 = vmin.f32 %v2568, 6.0
      %v2601 = vmin.f32 %v2569, 6.0
      %v2602 = vmin.f32 %v2570, 6.0
      %v2603 = vmin.f32 %v2571, 6.0
      %v2604 = vmin.f32 %v2572, 6.0
      %v2605 = vmin.f32 %v2573, 6.0
      %v2606 = vmin.f32 %v2574, 6.0
      %v2607 = vmin.f32 %v2575, 6.0
      %v2608 = vmin.f32 %v2576, 6.0
      %v2609 = vmin.f32 %v2577, 6.0
      %v2610 = vmin.f32 %v2578, 6.0
      %v2611 = vmin.f32 %v2579, 6.0
      %v2612 = vmin.f32 %v2580, 6.0
      %v2613 = vmin.f32 %v2581, 6.0
      %v2614 = vmul.f32 %v2486, %v2582
      %v2615 = vmul.f32 %v2487, %v2583
      %v2616 = vmul.f32 %v2488, %v2584
      %v2617 = vmul.f32 %v2489, %v2585
      %v2618 = vmul.f32 %v2490, %v2586
      %v2619 = vmul.f32 %v2491, %v2587
      %v2620 = vmul.f32 %v2492, %v2588
      %v2621 = vmul.f32 %v2493, %v2589
      %v2622 = vmul.f32 %v2494, %v2590
      %v2623 = vmul.f32 %v2495, %v2591
      %v2624 = vmul.f32 %v2496, %v2592
      %v2625 = vmul.f32 %v2497, %v2593
      %v2626 = vmul.f32 %v2498, %v2594
      %v2627 = vmul.f32 %v2499, %v2595
      %v2628 = vmul.f32 %v2500, %v2596
      %v2629 = vmul.f32 %v2501, %v2597
      %v2630 = vmul.f32 %v2502, %v2598
      %v2631 = vmul.f32 %v2503, %v2599
      %v2632 = vmul.f32 %v2504, %v2600
      %v2633 = vmul.f32 %v2505, %v2601
      %v2634 = vmul.f32 %v2506, %v2602
      %v2635 = vmul.f32 %v2507, %v2603
      %v2636 = vmul.f32 %v2508, %v2604
      %v2637 = vmul.f32 %v2509, %v2605
      %v2638 = vmul.f32 %v2510, %v2606
      %v2639 = vmul.f32 %v2511, %v2607
      %v2640 = vmul.f32 %v2512, %v2608
      %v2641 = vmul.f32 %v2513, %v2609
      %v2642 = vmul.f32 %v2514, %v2610
      %v2643 = vmul.f32 %v2515, %v2611
      %v2644 = vmul.f32 %v2516, %v2612
      %v2645 = vmul.f32 %v2517, %v2613
      %v2646 = vmul.f32 %v2614, 0.16666667
      %v2647 = vmul.f32 %v2615, 0.16666667
      %v2648 = vmul.f32 %v2616, 0.16666667
      %v2649 = vmul.f32 %v2617, 0.16666667
      %v2650 = vmul.f32 %v2618, 0.16666667
      %v2651 = vmul.f32 %v2619, 0.16666667
      %v2652 = vmul.f32 %v2620, 0.16666667
      %v2653 = vmul.f32 %v2621, 0.16666667
      %v2654 = vmul.f32 %v2622, 0.16666667
      %v2655 = vmul.f32 %v2623, 0.16666667
      %v2656 = vmul.f32 %v2624, 0.16666667
      %v2657 = vmul.f32 %v2625, 0.16666667
      %v2658 = vmul.f32 %v2626, 0.16666667
      %v2659 = vmul.f32 %v2627, 0.16666667
      %v2660 = vmul.f32 %v2628, 0.16666667
      %v2661 = vmul.f32 %v2629, 0.16666667
      %v2662 = vmul.f32 %v2630, 0.16666667
      %v2663 = vmul.f32 %v2631, 0.16666667
      %v2664 = vmul.f32 %v2632, 0.16666667
      %v2665 = vmul.f32 %v2633, 0.16666667
      %v2666 = vmul.f32 %v2634, 0.16666667
      %v2667 = vmul.f32 %v2635, 0.16666667
      %v2668 = vmul.f32 %v2636, 0.16666667
      %v2669 = vmul.f32 %v2637, 0.16666667
      %v2670 = vmul.f32 %v2638, 0.16666667
      %v2671 = vmul.f32 %v2639, 0.16666667
      %v2672 = vmul.f32 %v2640, 0.16666667
      %v2673 = vmul.f32 %v2641, 0.16666667
      %v2674 = vmul.f32 %v2642, 0.16666667
      %v2675 = vmul.f32 %v2643, 0.16666667
      %v2676 = vmul.f32 %v2644, 0.16666667
      %v2677 = vmul.f32 %v2645, 0.16666667
      %v2678 = vpack.c.bf16 %v2647, %v2646
      %v2679 = vpack.c.bf16 %v2649, %v2648
      %v2680 = vpack.c.bf16 %v2651, %v2650
      %v2681 = vpack.c.bf16 %v2653, %v2652
      %v2682 = vpack.c.bf16 %v2655, %v2654
      %v2683 = vpack.c.bf16 %v2657, %v2656
      %v2684 = vpack.c.bf16 %v2659, %v2658
      %v2685 = vpack.c.bf16 %v2661, %v2660
      %v2686 = vpack.c.bf16 %v2663, %v2662
      %v2687 = vpack.c.bf16 %v2665, %v2664
      %v2688 = vpack.c.bf16 %v2667, %v2666
      %v2689 = vpack.c.bf16 %v2669, %v2668
      %v2690 = vpack.c.bf16 %v2671, %v2670
      %v2691 = vpack.c.bf16 %v2673, %v2672
      %v2692 = vpack.c.bf16 %v2675, %v2674
      %v2693 = vpack.c.bf16 %v2677, %v2676
      %v2710 = vunpack.c.l.b16 %v2678
      %v2711 = vunpack.c.h.b16 %v2678
      %v2712 = vunpack.c.l.b16 %v2679
      %v2713 = vunpack.c.h.b16 %v2679
      %v2714 = vunpack.c.l.b16 %v2680
      %v2715 = vunpack.c.h.b16 %v2680
      %v2716 = vunpack.c.l.b16 %v2681
      %v2717 = vunpack.c.h.b16 %v2681
      %v2718 = vunpack.c.l.b16 %v2682
      %v2719 = vunpack.c.h.b16 %v2682
      %v2720 = vunpack.c.l.b16 %v2683
      %v2721 = vunpack.c.h.b16 %v2683
      %v2722 = vunpack.c.l.b16 %v2684
      %v2723 = vunpack.c.h.b16 %v2684
      %v2724 = vunpack.c.l.b16 %v2685
      %v2725 = vunpack.c.h.b16 %v2685
      %v2726 = vunpack.c.l.b16 %v2686
      %v2727 = vunpack.c.h.b16 %v2686
      %v2728 = vunpack.c.l.b16 %v2687
      %v2729 = vunpack.c.h.b16 %v2687
      %v2730 = vunpack.c.l.b16 %v2688
      %v2731 = vunpack.c.h.b16 %v2688
      %v2732 = vunpack.c.l.b16 %v2689
      %v2733 = vunpack.c.h.b16 %v2689
      %v2734 = vunpack.c.l.b16 %v2690
      %v2735 = vunpack.c.h.b16 %v2690
      %v2736 = vunpack.c.l.b16 %v2691
      %v2737 = vunpack.c.h.b16 %v2691
      %v2738 = vunpack.c.l.b16 %v2692
      %v2739 = vunpack.c.h.b16 %v2692
      %v2740 = vunpack.c.l.b16 %v2693
      %v2741 = vunpack.c.h.b16 %v2693
      %v2742 = vpack.c.b16 %v2710, %v2710
      %v2743 = vpack.c.b16 %v2711, %v2711
      %v2744 = vpack.c.b16 %v2712, %v2712
      %v2745 = vpack.c.b16 %v2713, %v2713
      %v2746 = vpack.c.b16 %v2714, %v2714
      %v2747 = vpack.c.b16 %v2715, %v2715
      %v2748 = vpack.c.b16 %v2716, %v2716
      %v2749 = vpack.c.b16 %v2717, %v2717
      %v2750 = vpack.c.b16 %v2718, %v2718
      %v2751 = vpack.c.b16 %v2719, %v2719
      %v2752 = vpack.c.b16 %v2720, %v2720
      %v2753 = vpack.c.b16 %v2721, %v2721
      %v2754 = vpack.c.b16 %v2722, %v2722
      %v2755 = vpack.c.b16 %v2723, %v2723
      %v2756 = vpack.c.b16 %v2724, %v2724
      %v2757 = vpack.c.b16 %v2725, %v2725
      %v2758 = vpack.c.b16 %v2726, %v2726
      %v2759 = vpack.c.b16 %v2727, %v2727
      %v2760 = vpack.c.b16 %v2728, %v2728
      %v2761 = vpack.c.b16 %v2729, %v2729
      %v2762 = vpack.c.b16 %v2730, %v2730
      %v2763 = vpack.c.b16 %v2731, %v2731
      %v2764 = vpack.c.b16 %v2732, %v2732
      %v2765 = vpack.c.b16 %v2733, %v2733
      %v2766 = vpack.c.b16 %v2734, %v2734
      %v2767 = vpack.c.b16 %v2735, %v2735
      %v2768 = vpack.c.b16 %v2736, %v2736
      %v2769 = vpack.c.b16 %v2737, %v2737
      %v2770 = vpack.c.b16 %v2738, %v2738
      %v2771 = vpack.c.b16 %v2739, %v2739
      %v2772 = vpack.c.b16 %v2740, %v2740
      %v2773 = vpack.c.b16 %v2741, %v2741
      %vm2806 = vcmask 125952
      %2807 = vst.msk [vmem:[%s257] sm:$0xf] %vm2806, %v2742
      %2808 = vst.msk [vmem:[%s257 + $0x4] sm:$0xf] %vm2806, %v2743
      %2809 = vst.msk [vmem:[%s257 + $0x8] sm:$0xf] %vm2806, %v2744
      %2810 = vst.msk [vmem:[%s257 + $0xc] sm:$0xf] %vm2806, %v2745
      %2811 = vst.msk [vmem:[%s257 + $0x10] sm:$0xf] %vm2806, %v2746
      %2812 = vst.msk [vmem:[%s257 + $0x14] sm:$0xf] %vm2806, %v2747
      %2813 = vst.msk [vmem:[%s257 + $0x18] sm:$0xf] %vm2806, %v2748
      %2814 = vst.msk [vmem:[%s257 + $0x1c] sm:$0xf] %vm2806, %v2749
      %2815 = vst.msk [vmem:[%s257 + $0x20] sm:$0xf] %vm2806, %v2750
      %2816 = vst.msk [vmem:[%s257 + $0x24] sm:$0xf] %vm2806, %v2751
      %2817 = vst.msk [vmem:[%s257 + $0x28] sm:$0xf] %vm2806, %v2752
      %2818 = vst.msk [vmem:[%s257 + $0x2c] sm:$0xf] %vm2806, %v2753
      %2819 = vst.msk [vmem:[%s257 + $0x30] sm:$0xf] %vm2806, %v2754
      %2820 = vst.msk [vmem:[%s257 + $0x34] sm:$0xf] %vm2806, %v2755
      %2821 = vst.msk [vmem:[%s257 + $0x38] sm:$0xf] %vm2806, %v2756
      %2822 = vst.msk [vmem:[%s257 + $0x3c] sm:$0xf] %vm2806, %v2757
      %2823 = vst.msk [vmem:[%s257 + $0x40] sm:$0xf] %vm2806, %v2758
      %2824 = vst.msk [vmem:[%s257 + $0x44] sm:$0xf] %vm2806, %v2759
      %2825 = vst.msk [vmem:[%s257 + $0x48] sm:$0xf] %vm2806, %v2760
      %2826 = vst.msk [vmem:[%s257 + $0x4c] sm:$0xf] %vm2806, %v2761
      %2827 = vst.msk [vmem:[%s257 + $0x50] sm:$0xf] %vm2806, %v2762
      %2828 = vst.msk [vmem:[%s257 + $0x54] sm:$0xf] %vm2806, %v2763
      %2829 = vst.msk [vmem:[%s257 + $0x58] sm:$0xf] %vm2806, %v2764
      %2830 = vst.msk [vmem:[%s257 + $0x5c] sm:$0xf] %vm2806, %v2765
      %2831 = vst.msk [vmem:[%s257 + $0x60] sm:$0xf] %vm2806, %v2766
      %2832 = vst.msk [vmem:[%s257 + $0x64] sm:$0xf] %vm2806, %v2767
      %2833 = vst.msk [vmem:[%s257 + $0x68] sm:$0xf] %vm2806, %v2768
      %2834 = vst.msk [vmem:[%s257 + $0x6c] sm:$0xf] %vm2806, %v2769
      %2835 = vst.msk [vmem:[%s257 + $0x70] sm:$0xf] %vm2806, %v2770
      %2836 = vst.msk [vmem:[%s257 + $0x74] sm:$0xf] %vm2806, %v2771
      %2837 = vst.msk [vmem:[%s257 + $0x78] sm:$0xf] %vm2806, %v2772
      %2838 = vst.msk [vmem:[%s257 + $0x7c] sm:$0xf] %vm2806, %v2773
      %v2839 = vsel %vm692, %v2646, 0.0
      %v2840 = vsel %vm692, %v2647, 0.0
      %v2841 = vadd.f32 %v2839, %v2840
      %v2842 = vsel %vm692, %v2648, 0.0
      %v2843 = vadd.f32 %v2841, %v2842
      %v2844 = vsel %vm692, %v2649, 0.0
      %v2845 = vadd.f32 %v2843, %v2844
      %v2846 = vsel %vm692, %v2650, 0.0
      %v2847 = vadd.f32 %v2845, %v2846
      %v2848 = vsel %vm692, %v2651, 0.0
      %v2849 = vadd.f32 %v2847, %v2848
      %v2850 = vsel %vm692, %v2652, 0.0
      %v2851 = vadd.f32 %v2849, %v2850
      %v2852 = vsel %vm692, %v2653, 0.0
      %v2853 = vadd.f32 %v2851, %v2852
      %v2854 = vsel %vm692, %v2654, 0.0
      %v2855 = vadd.f32 %v2853, %v2854
      %v2856 = vsel %vm692, %v2655, 0.0
      %v2857 = vadd.f32 %v2855, %v2856
      %v2858 = vsel %vm692, %v2656, 0.0
      %v2859 = vadd.f32 %v2857, %v2858
      %v2860 = vsel %vm692, %v2657, 0.0
      %v2861 = vadd.f32 %v2859, %v2860
      %v2862 = vsel %vm692, %v2658, 0.0
      %v2863 = vadd.f32 %v2861, %v2862
      %v2864 = vsel %vm692, %v2659, 0.0
      %v2865 = vadd.f32 %v2863, %v2864
      %v2866 = vsel %vm692, %v2660, 0.0
      %v2867 = vadd.f32 %v2865, %v2866
      %v2868 = vsel %vm692, %v2661, 0.0
      %v2869 = vadd.f32 %v2867, %v2868
      %v2870 = vsel %vm692, %v2662, 0.0
      %v2871 = vadd.f32 %v2869, %v2870
      %v2872 = vsel %vm692, %v2663, 0.0
      %v2873 = vadd.f32 %v2871, %v2872
      %v2874 = vsel %vm692, %v2664, 0.0
      %v2875 = vadd.f32 %v2873, %v2874
      %v2876 = vsel %vm692, %v2665, 0.0
      %v2877 = vadd.f32 %v2875, %v2876
      %v2878 = vsel %vm692, %v2666, 0.0
      %v2879 = vadd.f32 %v2877, %v2878
      %v2880 = vsel %vm692, %v2667, 0.0
      %v2881 = vadd.f32 %v2879, %v2880
      %v2882 = vsel %vm692, %v2668, 0.0
      %v2883 = vadd.f32 %v2881, %v2882
      %v2884 = vsel %vm692, %v2669, 0.0
      %v2885 = vadd.f32 %v2883, %v2884
      %v2886 = vsel %vm692, %v2670, 0.0
      %v2887 = vadd.f32 %v2885, %v2886
      %v2888 = vsel %vm692, %v2671, 0.0
      %v2889 = vadd.f32 %v2887, %v2888
      %v2890 = vsel %vm692, %v2672, 0.0
      %v2891 = vadd.f32 %v2889, %v2890
      %v2892 = vsel %vm692, %v2673, 0.0
      %v2893 = vadd.f32 %v2891, %v2892
      %v2894 = vsel %vm692, %v2674, 0.0
      %v2895 = vadd.f32 %v2893, %v2894
      %v2896 = vsel %vm692, %v2675, 0.0
      %v2897 = vadd.f32 %v2895, %v2896
      %v2898 = vsel %vm692, %v2676, 0.0
      %v2899 = vadd.f32 %v2897, %v2898
      %v2900 = vsel %vm692, %v2677, 0.0
      %v2901 = vadd.f32 %v2899, %v2900
      %v2902 = vrot.slane %v2901, 4
      %v2903 = vadd.f32 %v2901, %v2902
      %v2904 = vrot.slane %v2903, 2
      %v2905 = vadd.f32 %v2903, %v2904
      %v2906 = vrot.slane %v2905, 1
      %v2907 = vadd.f32 %v2905, %v2906
      %v2908 = vmul.f32 %v2907, 0.00390625
      %vm2909 = vcmask 122880
      %2910 = vst.msk [vmem:[%s260] sm:$0x1] %vm2909, %v2908
      %p2911 = scmp.lt.s32.totalorder %s18, 1
      %s2912 = scalar_select %p2911, %s18, 1
      %s2913 = smul.addr %s2912, 32
      %s2914 = smul.addr %s2913, 4
      %s2915 = scalar_lea.vmem %s5, %s2914
      %p2916 = scmp.lt.s32.totalorder %s18, 1
      %s2917 = scalar_select %p2916, %s18, 1
      %s2918 = scalar_lea.vmem %s6, %s2917
      // Predicated region
      $region41: #{mobilenetv3_unit_forward.2} parent=39 // pred_check
        %p2919 = pneg %p146
      $region42: #{mobilenetv3_unit_forward.2} parent=39 // pred_check_branch
        %2921 = sbr.rel (%p2919) target = $region44
      $region43: #{mobilenetv3_unit_forward.2} parent=39 // pred_region
        _
      $region44: #{mobilenetv3_unit_forward.2} parent=39 // pred_fallthru
        _
      // Predicated region
      $region45: #{mobilenetv3_unit_forward.2} parent=39 // pred_check
        %p2922 = pneg %p172
      $region46: #{mobilenetv3_unit_forward.2} parent=39 // pred_check_branch
        %2924 = sbr.rel (%p2922) target = $region48
      $region47: #{mobilenetv3_unit_forward.2} parent=39 // pred_region
        _
      $region48: #{mobilenetv3_unit_forward.2} parent=39 // pred_fallthru
        _
    $region40: #{mobilenetv3_unit_forward.2} parent=5 // pred_fallthru
      _
    %p2925 = scmp.le.s32.totalorder 2, %s13
    // Predicated region
    $region49: #{mobilenetv3_unit_forward.2} parent=5 // pred_check
      %p2926 = pneg %p2925
    $region50: #{mobilenetv3_unit_forward.2} parent=5 // pred_check_branch
      %2928 = sbr.rel (%p2926) target = $region52
    $region51: #{mobilenetv3_unit_forward.2} parent=5 // pred_region
      %s2929 = ssub.s32 %s13, 2
      // Predicated region
      $region53: #{mobilenetv3_unit_forward.2} parent=51 // pred_check
        %p2930 = pneg %p152
      $region54: #{mobilenetv3_unit_forward.2} parent=51 // pred_check_branch
        %2932 = sbr.rel (%p2930) target = $region56
      $region55: #{mobilenetv3_unit_forward.2} parent=51 // pred_region
        %p2933 = scmp.lt.s32.totalorder %s19, 1
        %s2934 = scalar_select %p2933, %s19, 1
        %s2935 = smul.addr %s2934, 32
        %s2936 = smul.addr %s2935, 4
        %s2937 = scalar_lea.vmem %s5, %s2936
      $region56: #{mobilenetv3_unit_forward.2} parent=51 // pred_fallthru
        _
      // Predicated region
      $region57: #{mobilenetv3_unit_forward.2} parent=51 // pred_check
        %p2938 = pneg %p178
      $region58: #{mobilenetv3_unit_forward.2} parent=51 // pred_check_branch
        %2940 = sbr.rel (%p2938) target = $region60
      $region59: #{mobilenetv3_unit_forward.2} parent=51 // pred_region
        %p2941 = scmp.lt.s32.totalorder %s19, 1
        %s2942 = scalar_select %p2941, %s19, 1
        %s2943 = scalar_lea.vmem %s6, %s2942
      $region60: #{mobilenetv3_unit_forward.2} parent=51 // pred_fallthru
        _
    $region52: #{mobilenetv3_unit_forward.2} parent=5 // pred_fallthru
      _
  $region6: #{mobilenetv3_unit_forward.2} parent=0 // loop_footer
    %s17 = sadd.s32 1, %s13
  $region7: #{mobilenetv3_unit_forward.2} parent=0 // loop_footer_branch
    %12 = sbr.rel target = $region3
  $region8: #{mobilenetv3_unit_forward.2} parent=0 // loop_exit
    _

</llo_original>
